<compile_context>
chip_gen: v6e
topology: v6e:2x2x1
jax: 0.10.0
libtpu: 0.0.40
codegen_flags: <defaults>
</compile_context>

<pallas_src>
import jax
import jax.numpy as jnp
from jax.experimental import pallas as pl
from jax.experimental.pallas import tpu as pltpu


# --------------------------------------------------------------------------
# Kernel: grouped 1-D conv along W as three accumulating MXU matmuls.
# --------------------------------------------------------------------------
def _grouped_wconv_kernel(tp_ref, w_ref, o_ref, acc_ref):
    # tp_ref:  (W, TR, C)   bf16  rolled (W & H), channel-last, UNpadded
    # w_ref:   (3, C, Co)   bf16  per-tap weight matrices (tap k -> w_ref[k])
    # o_ref:   (W, TR, Co)  bf16  conv output for this row block
    # acc_ref: (W*TR, Co)   f32   accumulator scratch (fully rewritten each step)
    n_w, tr, c = tp_ref.shape
    co = o_ref.shape[-1]
    m_full = n_w * tr
    m_edge = (n_w - 1) * tr

    # tap k=1 (center): every output position m uses input row m.
    acc_ref[...] = jnp.dot(
        tp_ref[...].reshape(m_full, c), w_ref[1],
        preferred_element_type=jnp.float32)

    # tap k=0 (left): output m uses input row m-1 (valid for m >= 1);
    # the zero-pad row contributes nothing, so it is simply skipped.
    acc_ref[pl.ds(tr, m_edge), :] += jnp.dot(
        tp_ref[pl.ds(0, n_w - 1)].reshape(m_edge, c), w_ref[0],
        preferred_element_type=jnp.float32)

    # tap k=2 (right): output m uses input row m+1 (valid for m <= W-2).
    acc_ref[pl.ds(0, m_edge), :] += jnp.dot(
        tp_ref[pl.ds(1, n_w - 1)].reshape(m_edge, c), w_ref[2],
        preferred_element_type=jnp.float32)

    o_ref[...] = acc_ref[...].reshape(n_w, tr, co).astype(o_ref.dtype)


def _pick_row_block(r_rows, max_rows=448):
    """Rows (of L*O*H) per grid step.

    Multiple of 16 (bf16 sublane tile -> free (7,TR,C)->(7*TR,C) relabel),
    divides r_rows, capped for VMEM (448 rows ~= 15 MiB of double-buffered
    blocks + ~12 MiB scratch/temps, well under the 48 MiB limit we request),
    preferring an EVEN number of grid steps so v7x's two TensorCores get a
    balanced share of the "parallel" axis.
    """
    cands = [b for b in range(16, min(r_rows, max_rows) + 1, 16)
             if r_rows % b == 0]
    if not cands:
        return r_rows                      # full dim (legal), single step
    even = [b for b in cands if (r_rows // b) % 2 == 0]
    if even:
        return max(even)
    multi = [b for b in cands if r_rows // b >= 2]
    if multi:
        return max(multi)
    return max(cands)


def _grouped_wconv(tp, w3, tr):
    w_out, r, c = tp.shape
    co = w3.shape[-1]
    flops = 2 * (3 * w_out - 2) * r * c * co          # boundary taps skipped
    bytes_accessed = (w_out * r * c + 3 * c * co + w_out * r * co) * 2
    return pl.pallas_call(
        _grouped_wconv_kernel,
        out_shape=jax.ShapeDtypeStruct((w_out, r, co), jnp.bfloat16),
        grid=(r // tr,),
        in_specs=[
            pl.BlockSpec((w_out, tr, c), lambda i: (0, i, 0)),
            # constant block index -> weight is DMA'd once and kept resident
            pl.BlockSpec((3, c, co), lambda i: (0, 0, 0)),
        ],
        out_specs=pl.BlockSpec((w_out, tr, co), lambda i: (0, i, 0)),
        scratch_shapes=[pltpu.VMEM((w_out * tr, co), jnp.float32)],
        compiler_params=pltpu.CompilerParams(
            dimension_semantics=("parallel",),
            vmem_limit_bytes=48 * 1024 * 1024),
        cost_estimate=pl.CostEstimate(
            flops=flops, transcendentals=0, bytes_accessed=bytes_accessed),
    )(tp, w3)


# --------------------------------------------------------------------------
# Forward wrapper: one bf16 input relayout pass (reshape + both rolls +
# transpose, NO pad materialization) and one output transpose back to NCHW.
# --------------------------------------------------------------------------
def kernel_generated_3_forward(x, weight, shift_direction=1):
    """Pallas port of kernel_generated_3.forward.

    x:      (L, O*C, H, W) float32, NCHW with O=2 groups of C channels
    weight: (C, 3, Co)     float32 (the module's self.weights[0])
    """
    c, k, co = weight.shape
    l, oc, h, w = x.shape
    o = oc // c

    # --- input glue: single relayout pass (bf16 early to halve its traffic) ---
    t = x.reshape(l, o, c, h, w).astype(jnp.bfloat16)
    t = jnp.roll(t, shift_direction, axis=4)        # pre-conv roll along W
    t = jnp.roll(t, shift_direction, axis=3)        # folded post-conv H roll
    t = jnp.transpose(t, (4, 0, 1, 3, 2))           # (W, L, O, H, C) lane-dense
    r = l * o * h
    tp = t.reshape(w, r, c)                         # (W, L*O*H, C) bf16, unpadded

    # per-tap weight matrices, tap-major: w3[k] = weight[:, k, :]
    w3 = jnp.transpose(weight, (1, 0, 2)).astype(jnp.bfloat16)   # (3, C, Co)

    # --- hot path -------------------------------------------------------------
    tr = _pick_row_block(r)
    y = _grouped_wconv(tp, w3, tr)                  # (W, L*O*H, Co) bf16

    # --- output glue: single transpose back to NCHW (bf16 read side), f32 out -
    y = y.reshape(w, l, o, h, co)
    out = jnp.transpose(y, (1, 2, 4, 3, 0)).reshape(l, o * co, h, w)
    return out.astype(jnp.float32)


# --------------------------------------------------------------------------
# Plain-JAX transcription of the PyTorch forward (verification).
# --------------------------------------------------------------------------
def _reference(x, weight, shift_direction=1, cast_dtype=jnp.float32):
    c, k, co = weight.shape
    l, oc, h, w = x.shape
    o = oc // c
    t = x.reshape(l, o, c, h, w)
    t = jnp.roll(t, shift_direction, axis=4)
    tp = jnp.pad(t, ((0, 0),) * 4 + ((1, 1),))
    taps = jnp.stack([tp[..., kk:kk + w] for kk in range(k)], axis=-1)  # (L,O,C,H,W,3)
    t3 = jnp.einsum('lojnmk,jki->lonmi',
                    taps.astype(cast_dtype), weight.astype(cast_dtype),
                    preferred_element_type=jnp.float32, precision='highest')
    t4 = jnp.transpose(t3, (0, 2, 3, 1, 4)).reshape(l, h, w, o * co)
    t4 = jnp.roll(t4, shift_direction, axis=1)
    return jnp.transpose(t4, (0, 3, 1, 2))


if __name__ == "__main__":
    # Channel / spatial sizes are fixed by the module (2 groups x 512 ch, 7x7,
    # weight (512, 3, 512)); batch reduced 128 -> 8 for a small test.
    # TODO(synk): the module picks shift_direction = +/-1 at random in
    # __init__; here it is a static argument (both values are exercised).
    L, O, C, H, W = 8, 2, 512, 7, 7

    key = jax.random.PRNGKey(0)
    kx, kw = jax.random.split(key)
    x = jax.random.normal(kx, (L, O * C, H, W), dtype=jnp.float32)
    weight = jax.random.normal(kw, (C, 3, C), dtype=jnp.float32)

    fwd = jax.jit(kernel_generated_3_forward, static_argnums=2)

    for shift in (1, -1):
        y = jax.block_until_ready(fwd(x, weight, shift))
        assert y.shape == (L, O * C, H, W), y.shape
        assert y.dtype == jnp.float32, y.dtype

        # Gate vs. a reference using the same bf16 operand precision (kernel
        # accumulates in f32; bf16 output adds <= ~0.2% relative rounding).
        y_ref_bf16 = _reference(x, weight, shift, cast_dtype=jnp.bfloat16)
        err_b = float(jnp.max(jnp.abs(y - y_ref_bf16)))
        assert jnp.allclose(y, y_ref_bf16, rtol=2e-2, atol=2e-1), err_b

        # Sanity gate vs. the full-f32 reference.  bf16 operand rounding over
        # the K = 3*512 reduction gives |err| ~ sqrt(K) * 2^-8 * sigma, plus
        # one bf16 output rounding (output std ~ 39), hence the loose bounds.
        y_ref_f32 = _reference(x, weight, shift, cast_dtype=jnp.float32)
        err_f = float(jnp.max(jnp.abs(y - y_ref_f32)))
        assert jnp.allclose(y, y_ref_f32, rtol=3e-2, atol=1.5), err_f

    print("KERNEL_OK")
</pallas_src>

<mosaic_0001>
module attributes {stable_mosaic.version = 11 : i64} {
  func.func @_grouped_wconv_kernel(%arg0: i32, %arg1: memref<7x16x512xbf16, #tpu.memory_space<vmem>>, %arg2: memref<3x512x512xbf16, #tpu.memory_space<vmem>>, %arg3: memref<7x16x512xbf16, #tpu.memory_space<vmem>>, %arg4: memref<112x512xf32, #tpu.memory_space<vmem>>) attributes {dimension_semantics = [#tpu.dimension_semantics<parallel>], iteration_bounds = array<i64: 7>, scalar_prefetch = 0 : i64, scratch_operands = 1 : i64, tpu.core_type = #tpu.core_type<tc>, window_params = [{transform_indices = @transform_0, window_bounds = array<i64: 7, 16, 512>}, {pipeline_mode = #tpu.pipeline_mode<synchronous>, transform_indices = @transform_1, window_bounds = array<i64: 3, 512, 512>}, {transform_indices = @transform_2, window_bounds = array<i64: 7, 16, 512>}]} {
    %c0 = arith.constant 0 : index
    %c0_0 = arith.constant 0 : index
    %c0_1 = arith.constant 0 : index
    %0 = vector.load %arg1[%c0, %c0_0, %c0_1] : memref<7x16x512xbf16, #tpu.memory_space<vmem>>, vector<7x16x512xbf16>
    %1 = vector.shape_cast %0 : vector<7x16x512xbf16> to vector<112x512xbf16>
    %c1 = arith.constant 1 : index
    %c0_2 = arith.constant 0 : index
    %c0_3 = arith.constant 0 : index
    %2 = vector.load %arg2[%c1, %c0_2, %c0_3] : memref<3x512x512xbf16, #tpu.memory_space<vmem>>, vector<1x512x512xbf16>
    %3 = vector.shape_cast %2 : vector<1x512x512xbf16> to vector<512x512xbf16>
    %cst = arith.constant dense<0.000000e+00> : vector<112x512xf32>
    %4 = tpu.matmul %1, %3, %cst {dimension_numbers = #tpu.dot_dimension_numbers<[1], [0], [0], [1], [0, 0, 1, 1], [], []>} : vector<112x512xbf16>, vector<512x512xbf16>, vector<112x512xf32> -> vector<112x512xf32>
    %c0_4 = arith.constant 0 : index
    %c0_5 = arith.constant 0 : index
    %5 = vector.load %arg4[%c0_4, %c0_5] : memref<112x512xf32, #tpu.memory_space<vmem>>, vector<112x512xf32>
    tpu.vector_store %arg4[%c0_4, %c0_5], %4 {strides = array<i32>} : memref<112x512xf32, #tpu.memory_space<vmem>>, vector<112x512xf32>,
    %c16 = arith.constant 16 : index
    %c0_6 = arith.constant 0 : index
    %6 = vector.load %arg4[%c16, %c0_6] : memref<112x512xf32, #tpu.memory_space<vmem>>, vector<96x512xf32>
    %c0_7 = arith.constant 0 : index
    %c0_8 = arith.constant 0 : index
    %c0_9 = arith.constant 0 : index
    %7 = vector.load %arg1[%c0_7, %c0_8, %c0_9] : memref<7x16x512xbf16, #tpu.memory_space<vmem>>, vector<6x16x512xbf16>
    %8 = vector.shape_cast %7 : vector<6x16x512xbf16> to vector<96x512xbf16>
    %c0_10 = arith.constant 0 : index
    %c0_11 = arith.constant 0 : index
    %c0_12 = arith.constant 0 : index
    %9 = vector.load %arg2[%c0_10, %c0_11, %c0_12] : memref<3x512x512xbf16, #tpu.memory_space<vmem>>, vector<1x512x512xbf16>
    %10 = vector.shape_cast %9 : vector<1x512x512xbf16> to vector<512x512xbf16>
    %cst_13 = arith.constant dense<0.000000e+00> : vector<96x512xf32>
    %11 = tpu.matmul %8, %10, %cst_13 {dimension_numbers = #tpu.dot_dimension_numbers<[1], [0], [0], [1], [0, 0, 1, 1], [], []>} : vector<96x512xbf16>, vector<512x512xbf16>, vector<96x512xf32> -> vector<96x512xf32>
    %12 = arith.addf %6, %11 : vector<96x512xf32>
    %c16_14 = arith.constant 16 : index
    %c0_15 = arith.constant 0 : index
    %13 = vector.load %arg4[%c16_14, %c0_15] : memref<112x512xf32, #tpu.memory_space<vmem>>, vector<96x512xf32>
    tpu.vector_store %arg4[%c16_14, %c0_15], %12 {strides = array<i32>} : memref<112x512xf32, #tpu.memory_space<vmem>>, vector<96x512xf32>,
    %c0_16 = arith.constant 0 : index
    %c0_17 = arith.constant 0 : index
    %14 = vector.load %arg4[%c0_16, %c0_17] : memref<112x512xf32, #tpu.memory_space<vmem>>, vector<96x512xf32>
    %c1_18 = arith.constant 1 : index
    %c0_19 = arith.constant 0 : index
    %c0_20 = arith.constant 0 : index
    %15 = vector.load %arg1[%c1_18, %c0_19, %c0_20] : memref<7x16x512xbf16, #tpu.memory_space<vmem>>, vector<6x16x512xbf16>
    %16 = vector.shape_cast %15 : vector<6x16x512xbf16> to vector<96x512xbf16>
    %c2 = arith.constant 2 : index
    %c0_21 = arith.constant 0 : index
    %c0_22 = arith.constant 0 : index
    %17 = vector.load %arg2[%c2, %c0_21, %c0_22] : memref<3x512x512xbf16, #tpu.memory_space<vmem>>, vector<1x512x512xbf16>
    %18 = vector.shape_cast %17 : vector<1x512x512xbf16> to vector<512x512xbf16>
    %cst_23 = arith.constant dense<0.000000e+00> : vector<96x512xf32>
    %19 = tpu.matmul %16, %18, %cst_23 {dimension_numbers = #tpu.dot_dimension_numbers<[1], [0], [0], [1], [0, 0, 1, 1], [], []>} : vector<96x512xbf16>, vector<512x512xbf16>, vector<96x512xf32> -> vector<96x512xf32>
    %20 = arith.addf %14, %19 : vector<96x512xf32>
    %c0_24 = arith.constant 0 : index
    %c0_25 = arith.constant 0 : index
    %21 = vector.load %arg4[%c0_24, %c0_25] : memref<112x512xf32, #tpu.memory_space<vmem>>, vector<96x512xf32>
    tpu.vector_store %arg4[%c0_24, %c0_25], %20 {strides = array<i32>} : memref<112x512xf32, #tpu.memory_space<vmem>>, vector<96x512xf32>,
    %c0_26 = arith.constant 0 : index
    %c0_27 = arith.constant 0 : index
    %22 = vector.load %arg4[%c0_26, %c0_27] : memref<112x512xf32, #tpu.memory_space<vmem>>, vector<112x512xf32>
    %23 = vector.shape_cast %22 : vector<112x512xf32> to vector<7x16x512xf32>
    %24 = arith.truncf %23 : vector<7x16x512xf32> to vector<7x16x512xbf16>
    %c0_28 = arith.constant 0 : index
    %c0_29 = arith.constant 0 : index
    %c0_30 = arith.constant 0 : index
    %25 = vector.load %arg3[%c0_28, %c0_29, %c0_30] : memref<7x16x512xbf16, #tpu.memory_space<vmem>>, vector<7x16x512xbf16>
    tpu.vector_store %arg3[%c0_28, %c0_29, %c0_30], %24 {strides = array<i32>} : memref<7x16x512xbf16, #tpu.memory_space<vmem>>, vector<7x16x512xbf16>,
    return
  }
  func.func @transform_0(%arg0: i32) -> (i32, i32, i32) {
    %c0_i32 = arith.constant 0 : i32
    %c0_i32_0 = arith.constant 0 : i32
    %c0_i32_1 = arith.constant 0 : i32
    return %c0_i32, %arg0, %c0_i32_0 : i32, i32, i32
  }
  func.func @transform_1(%arg0: i32) -> (i32, i32, i32) {
    %c0_i32 = arith.constant 0 : i32
    %c0_i32_0 = arith.constant 0 : i32
    %c0_i32_1 = arith.constant 0 : i32
    %c0_i32_2 = arith.constant 0 : i32
    return %c0_i32, %c0_i32_0, %c0_i32_1 : i32, i32, i32
  }
  func.func @transform_2(%arg0: i32) -> (i32, i32, i32) {
    %c0_i32 = arith.constant 0 : i32
    %c0_i32_0 = arith.constant 0 : i32
    %c0_i32_1 = arith.constant 0 : i32
    return %c0_i32, %arg0, %c0_i32_0 : i32, i32, i32
  }
}

</mosaic_0001>

<llo_original>
// kernel: kernel_generated_3_forward.1
$region0: #{kernel_generated_3_forward.1}
  #allocation0 [shape = 'u32[]', space=smem, size = 0x4, offset = 0x4, fixed_abs, tag = 'smem constant byte address 0x4 - core index']
  #allocation1 [shape = 'u32[144,128]{1,0:T(1,128)}', space=vmem, size = 0x12000, scoped, tag = 'internal scratch']
  #allocation2 [shape = 'f32[112,512]{1,0:T(8,128)}', space=vmem, size = 0x38000, scoped, tag = 'scratch operand']
  %s0 = inlined_call_operand.vmem [shape: bf16[7,112,512], index: 0, kind: input, shape index: {}]
  %s1 = inlined_call_operand.vmem [shape: bf16[3,512,512], index: 1, kind: input, shape index: {}]
  %s2 = inlined_call_operand.vmem [shape: bf16[7,112,512], index: 2, kind: output, shape index: {}]
  %s3 = sld [smem:[#allocation0]]
  $region83: #{kernel_generated_3_forward.1} parent=0
    _
  %s5 = ssub.s32 1, %s3
  %s6 = scalar_select 0, %s5, %s3
  $region1: #{kernel_generated_3_forward.1} parent=0
    #allocation3 [shape = 'u8[229376]{0}', space=vmem, size = 0x38000, scoped, tag = 'input window, operand 0']
    #allocation4 [shape = 'u8[229376]{0}', space=vmem, size = 0x38000, scoped, tag = 'output window, operand 0']
    loop: start=0, step=1, limit=9
    $region2: #{kernel_generated_3_forward.1} parent=1 // loop_pre_header
      _
    $region3: #{kernel_generated_3_forward.1} parent=1 // loop_header
      %s8 = sphi 0, %s12
      %p9 = scmp.ge.s32.totalorder %s8, 9
      %s18 = sphi 0, %s20
      %s21 = sphi 0, %s18
      %s22 = sphi 0, %s21
      %s38 = sphi 0, %s22
      %s42 = sphi 0, %s42
      %s44 = sphi 0, %s42
      %s45 = sphi 0, %s44
      %s59 = sphi 0, %s45
      %s65 = sphi 0, %s67
      %s68 = sphi 0, %s65
      %s69 = sphi 0, %s68
      %s85 = sphi 0, %s69
    $region4: #{kernel_generated_3_forward.1} parent=1 // loop_header_branch
      %11 = sbr.rel (%p9) target = $region8
    $region5: #{kernel_generated_3_forward.1} parent=1 // loop_body
      %s13 = ssub.s32 %s8, 1
      %s14 = ssub.s32 %s8, 2
      %s15 = sadd.s32 %s8, 1
      %s16 = ssub.s32 %s8, %s15
      %p17 = scmp.eq.s32.totalorder %s16, 0
      %s19 = sadd.s32 %s18, 1
      %s20 = scalar_select %p17, %s18, %s19
      %p23 = pneg %p17
      %p24 = scmp.eq.s32.totalorder %s8, 6
      %p25 = por %p23, %p24
      %p26 = scmp.ne.s32.totalorder %s18, %s21
      %p27 = scmp.eq.s32.totalorder %s8, 0
      %p28 = por %p26, %p27
      %p29 = scmp.ne.s32.totalorder %s18, %s21
      %p30 = scmp.eq.s32.totalorder %s13, 6
      %p31 = por %p29, %p30
      %p32 = scmp.ne.s32.totalorder %s21, %s22
      %p33 = scmp.eq.s32.totalorder %s13, 0
      %p34 = por %p32, %p33
      %p35 = scmp.ne.s32.totalorder %s21, %s22
      %p36 = scmp.eq.s32.totalorder %s14, 6
      %p37 = por %p35, %p36
      %p39 = scmp.ne.s32.totalorder %s22, %s38
      %p40 = scmp.eq.s32.totalorder %s14, 0
      %p41 = por %p39, %p40
      %s43 = sadd.s32 %s42, 1
      %p46 = scmp.eq.s32.totalorder %s8, 6
      %p47 = scmp.ne.s32.totalorder %s42, %s44
      %p48 = scmp.eq.s32.totalorder %s8, 0
      %p49 = por %p47, %p48
      %p50 = scmp.ne.s32.totalorder %s42, %s44
      %p51 = scmp.eq.s32.totalorder %s13, 6
      %p52 = por %p50, %p51
      %p53 = scmp.ne.s32.totalorder %s44, %s45
      %p54 = scmp.eq.s32.totalorder %s13, 0
      %p55 = por %p53, %p54
      %p56 = scmp.ne.s32.totalorder %s44, %s45
      %p57 = scmp.eq.s32.totalorder %s14, 6
      %p58 = por %p56, %p57
      %p60 = scmp.ne.s32.totalorder %s45, %s59
      %p61 = scmp.eq.s32.totalorder %s14, 0
      %p62 = por %p60, %p61
      %s63 = ssub.s32 %s8, %s15
      %p64 = scmp.eq.s32.totalorder %s63, 0
      %s66 = sadd.s32 %s65, 1
      %s67 = scalar_select %p64, %s65, %s66
      %p70 = pneg %p64
      %p71 = scmp.eq.s32.totalorder %s8, 6
      %p72 = por %p70, %p71
      %p73 = scmp.ne.s32.totalorder %s65, %s68
      %p74 = scmp.eq.s32.totalorder %s8, 0
      %p75 = por %p73, %p74
      %p76 = scmp.ne.s32.totalorder %s65, %s68
      %p77 = scmp.eq.s32.totalorder %s13, 6
      %p78 = por %p76, %p77
      %p79 = scmp.ne.s32.totalorder %s68, %s69
      %p80 = scmp.eq.s32.totalorder %s13, 0
      %p81 = por %p79, %p80
      %p82 = scmp.ne.s32.totalorder %s68, %s69
      %p83 = scmp.eq.s32.totalorder %s14, 6
      %p84 = por %p82, %p83
      %p86 = scmp.ne.s32.totalorder %s69, %s85
      %p87 = scmp.eq.s32.totalorder %s14, 0
      %p88 = por %p86, %p87
      %p89 = scmp.le.s32.totalorder 1, %s8
      %p90 = scmp.lt.s32.totalorder %s8, 8
      %p91 = pnand %p89, %p90
      %p92 = pneg %p91
      // Predicated region
      $region9: #{kernel_generated_3_forward.1} parent=5 // pred_check
        _
      $region10: #{kernel_generated_3_forward.1} parent=5 // pred_check_branch
        %94 = sbr.rel (%p91) target = $region12
      $region11: #{kernel_generated_3_forward.1} parent=5 // pred_region
        %s95 = ssub.s32 %s8, 1
        // Predicated region
        $region13: #{kernel_generated_3_forward.1} parent=11 // pred_check
          %p96 = pneg %p55
        $region14: #{kernel_generated_3_forward.1} parent=11 // pred_check_branch
          %98 = sbr.rel (%p96) target = $region16
        $region15: #{kernel_generated_3_forward.1} parent=11 // pred_region
          _
        $region16: #{kernel_generated_3_forward.1} parent=11 // pred_fallthru
          _
      $region12: #{kernel_generated_3_forward.1} parent=5 // pred_fallthru
        _
      %p99 = scmp.lt.s32.totalorder %s8, 7
      // Predicated region
      $region17: #{kernel_generated_3_forward.1} parent=5 // pred_check
        %p100 = pneg %p99
      $region18: #{kernel_generated_3_forward.1} parent=5 // pred_check_branch
        %102 = sbr.rel (%p100) target = $region20
      $region19: #{kernel_generated_3_forward.1} parent=5 // pred_region
        // Predicated region
        $region21: #{kernel_generated_3_forward.1} parent=19 // pred_check
          %p103 = pneg %p28
        $region22: #{kernel_generated_3_forward.1} parent=19 // pred_check_branch
          %105 = sbr.rel (%p103) target = $region24
        $region23: #{kernel_generated_3_forward.1} parent=19 // pred_region
          %s106 = sand.u32 %s18, 1
          %s107 = sand.u32 %s18, 1
          %s108 = smul.addr %s107, 224
          %s109 = scalar_lea.vmem [#allocation3], %s108
          %s110 = smul.u32 2, %s8
          %s111 = smul.addr %s110, 4
          %s112 = smul.addr %s111, 4
          %s113 = scalar_lea.vmem %s0, %s112
          // Predicated region
          $region25: #{kernel_generated_3_forward.1} parent=23 // pred_check
            _
          $region26: #{kernel_generated_3_forward.1} parent=23 // pred_check_branch
            %115 = sbr.rel (0) target = $region28
          $region27: #{kernel_generated_3_forward.1} parent=23 // pred_region
            // Predicated region
            $region29: #{kernel_generated_3_forward.1} parent=27 // pred_check
              _
            $region30: #{kernel_generated_3_forward.1} parent=27 // pred_check_branch
              %117 = sbr.rel (0) target = $region32
            $region31: #{kernel_generated_3_forward.1} parent=27 // pred_region
              loop: start=0, step=1, limit=1
              $region33: #{kernel_generated_3_forward.1} parent=31 // loop_pre_header
                _
              $region34: #{kernel_generated_3_forward.1} parent=31 // loop_header
                %s119 = sphi 0, %s123
                %p120 = scmp.ge.s32.totalorder %s119, 1
                %s124 = sphi %s113, %s113
                %s125 = sphi %s109, %s109
              $region35: #{kernel_generated_3_forward.1} parent=31 // loop_header_branch
                %122 = sbr.rel (%p120) target = $region39
              $region36: #{kernel_generated_3_forward.1} parent=31 // loop_body
                %v126 = vld [vmem:[%s124] sm:$0xff]
                %127 = vst [vmem:[%s125] sm:$0xff] %v126
                %v128 = vld [vmem:[%s124 + $0x8] sm:$0xff]
                %129 = vst [vmem:[%s125 + $0x8] sm:$0xff] %v128
                %v130 = vld [vmem:[%s124 + $0x10] sm:$0xff]
                %131 = vst [vmem:[%s125 + $0x10] sm:$0xff] %v130
                %v132 = vld [vmem:[%s124 + $0x18] sm:$0xff]
                %133 = vst [vmem:[%s125 + $0x18] sm:$0xff] %v132
                %v134 = vld [vmem:[%s124 + $0xe0] sm:$0xff]
                %135 = vst [vmem:[%s125 + $0x20] sm:$0xff] %v134
                %v136 = vld [vmem:[%s124 + $0xe8] sm:$0xff]
                %137 = vst [vmem:[%s125 + $0x28] sm:$0xff] %v136
                %v138 = vld [vmem:[%s124 + $0xf0] sm:$0xff]
                %139 = vst [vmem:[%s125 + $0x30] sm:$0xff] %v138
                %v140 = vld [vmem:[%s124 + $0xf8] sm:$0xff]
                %141 = vst [vmem:[%s125 + $0x38] sm:$0xff] %v140
                %v142 = vld [vmem:[%s124 + $0x1c0] sm:$0xff]
                %143 = vst [vmem:[%s125 + $0x40] sm:$0xff] %v142
                %v144 = vld [vmem:[%s124 + $0x1c8] sm:$0xff]
                %145 = vst [vmem:[%s125 + $0x48] sm:$0xff] %v144
                %v146 = vld [vmem:[%s124 + $0x1d0] sm:$0xff]
                %147 = vst [vmem:[%s125 + $0x50] sm:$0xff] %v146
                %v148 = vld [vmem:[%s124 + $0x1d8] sm:$0xff]
                %149 = vst [vmem:[%s125 + $0x58] sm:$0xff] %v148
                %v150 = vld [vmem:[%s124 + $0x2a0] sm:$0xff]
                %151 = vst [vmem:[%s125 + $0x60] sm:$0xff] %v150
                %v152 = vld [vmem:[%s124 + $0x2a8] sm:$0xff]
                %153 = vst [vmem:[%s125 + $0x68] sm:$0xff] %v152
                %v154 = vld [vmem:[%s124 + $0x2b0] sm:$0xff]
                %155 = vst [vmem:[%s125 + $0x70] sm:$0xff] %v154
                %v156 = vld [vmem:[%s124 + $0x2b8] sm:$0xff]
                %157 = vst [vmem:[%s125 + $0x78] sm:$0xff] %v156
                %v158 = vld [vmem:[%s124 + $0x380] sm:$0xff]
                %159 = vst [vmem:[%s125 + $0x80] sm:$0xff] %v158
                %v160 = vld [vmem:[%s124 + $0x388] sm:$0xff]
                %161 = vst [vmem:[%s125 + $0x88] sm:$0xff] %v160
                %v162 = vld [vmem:[%s124 + $0x390] sm:$0xff]
                %163 = vst [vmem:[%s125 + $0x90] sm:$0xff] %v162
                %v164 = vld [vmem:[%s124 + $0x398] sm:$0xff]
                %165 = vst [vmem:[%s125 + $0x98] sm:$0xff] %v164
                %v166 = vld [vmem:[%s124 + $0x460] sm:$0xff]
                %167 = vst [vmem:[%s125 + $0xa0] sm:$0xff] %v166
                %v168 = vld [vmem:[%s124 + $0x468] sm:$0xff]
                %169 = vst [vmem:[%s125 + $0xa8] sm:$0xff] %v168
                %v170 = vld [vmem:[%s124 + $0x470] sm:$0xff]
                %171 = vst [vmem:[%s125 + $0xb0] sm:$0xff] %v170
                %v172 = vld [vmem:[%s124 + $0x478] sm:$0xff]
                %173 = vst [vmem:[%s125 + $0xb8] sm:$0xff] %v172
                %v174 = vld [vmem:[%s124 + $0x540] sm:$0xff]
                %175 = vst [vmem:[%s125 + $0xc0] sm:$0xff] %v174
                %v176 = vld [vmem:[%s124 + $0x548] sm:$0xff]
                %177 = vst [vmem:[%s125 + $0xc8] sm:$0xff] %v176
                %v178 = vld [vmem:[%s124 + $0x550] sm:$0xff]
                %179 = vst [vmem:[%s125 + $0xd0] sm:$0xff] %v178
                %v180 = vld [vmem:[%s124 + $0x558] sm:$0xff]
                %181 = vst [vmem:[%s125 + $0xd8] sm:$0xff] %v180
              $region37: #{kernel_generated_3_forward.1} parent=31 // loop_footer
                %s123 = sadd.s32 1, %s119
              $region38: #{kernel_generated_3_forward.1} parent=31 // loop_footer_branch
                %118 = sbr.rel target = $region34
              $region39: #{kernel_generated_3_forward.1} parent=31 // loop_exit
                _
            $region32: #{kernel_generated_3_forward.1} parent=27 // pred_fallthru
              _
            // Predicated region
            $region40: #{kernel_generated_3_forward.1} parent=27 // pred_check
              _
            $region41: #{kernel_generated_3_forward.1} parent=27 // pred_check_branch
              %183 = sbr.rel target = $region43
            $region42: #{kernel_generated_3_forward.1} parent=27 // pred_region
              _
            $region43: #{kernel_generated_3_forward.1} parent=27 // pred_fallthru
              _
          $region28: #{kernel_generated_3_forward.1} parent=23 // pred_fallthru
            _
          %184 = vnop
        $region24: #{kernel_generated_3_forward.1} parent=19 // pred_fallthru
          _
      $region20: #{kernel_generated_3_forward.1} parent=5 // pred_fallthru
        _
      %p185 = scmp.le.s32.totalorder 1, %s8
      %p186 = scmp.lt.s32.totalorder %s8, 8
      %p187 = pnand %p185, %p186
      %p188 = pneg %p187
      // Predicated region
      $region44: #{kernel_generated_3_forward.1} parent=5 // pred_check
        _
      $region45: #{kernel_generated_3_forward.1} parent=5 // pred_check_branch
        %190 = sbr.rel (%p187) target = $region47
      $region46: #{kernel_generated_3_forward.1} parent=5 // pred_region
        %s191 = ssub.s32 %s8, 1
        %s192 = sand.u32 %s21, 1
        %s193 = sand.u32 %s21, 1
        %s194 = smul.addr %s193, 224
        %s195 = scalar_lea.vmem [#allocation3], %s194
        // Predicated region
        $region48: #{kernel_generated_3_forward.1} parent=46 // pred_check
          %p196 = pneg %p34
        $region49: #{kernel_generated_3_forward.1} parent=46 // pred_check_branch
          %198 = sbr.rel (%p196) target = $region51
        $region50: #{kernel_generated_3_forward.1} parent=46 // pred_region
          _
        $region51: #{kernel_generated_3_forward.1} parent=46 // pred_fallthru
          _
        %s199 = sand.u32 %s21, 1
        %s200 = sand.u32 %s21, 1
        %s201 = smul.addr %s200, 224
        %s202 = scalar_lea.vmem [#allocation3], %s201
        %p203 = pneg %p34
        %p204 = pneg %p31
        %p205 = pneg %p55
        %p206 = pneg %p52
        %p207 = pneg %p81
        %p208 = pneg %p78
        %s209 = sand.u32 %s68, 1
        %s210 = sand.u32 %s68, 1
        %s211 = smul.addr %s210, 224
        %s212 = scalar_lea.vmem [#allocation4], %s211
        %s213 = smul.u32 2, %s13
        %s214 = smul.u32 2, %s13
        %v215 = vld [vmem:[%s195] sm:$0xff]
        %v216 = vld [vmem:[%s195 + $0x8] sm:$0xff]
        %v217 = vld [vmem:[%s195 + $0x10] sm:$0xff]
        %v218 = vld [vmem:[%s195 + $0x18] sm:$0xff]
        %v219 = vld [vmem:[%s195 + $0x20] sm:$0xff]
        %v220 = vld [vmem:[%s195 + $0x28] sm:$0xff]
        %v221 = vld [vmem:[%s195 + $0x30] sm:$0xff]
        %v222 = vld [vmem:[%s195 + $0x38] sm:$0xff]
        %v223 = vld [vmem:[%s195 + $0x40] sm:$0xff]
        %v224 = vld [vmem:[%s195 + $0x48] sm:$0xff]
        %v225 = vld [vmem:[%s195 + $0x50] sm:$0xff]
        %v226 = vld [vmem:[%s195 + $0x58] sm:$0xff]
        %v227 = vld [vmem:[%s195 + $0x60] sm:$0xff]
        %v228 = vld [vmem:[%s195 + $0x68] sm:$0xff]
        %v229 = vld [vmem:[%s195 + $0x70] sm:$0xff]
        %v230 = vld [vmem:[%s195 + $0x78] sm:$0xff]
        %v231 = vld [vmem:[%s195 + $0x80] sm:$0xff]
        %v232 = vld [vmem:[%s195 + $0x88] sm:$0xff]
        %v233 = vld [vmem:[%s195 + $0x90] sm:$0xff]
        %v234 = vld [vmem:[%s195 + $0x98] sm:$0xff]
        %v235 = vld [vmem:[%s195 + $0xa0] sm:$0xff]
        %v236 = vld [vmem:[%s195 + $0xa8] sm:$0xff]
        %v237 = vld [vmem:[%s195 + $0xb0] sm:$0xff]
        %v238 = vld [vmem:[%s195 + $0xb8] sm:$0xff]
        %v239 = vld [vmem:[%s195 + $0xc0] sm:$0xff]
        %v240 = vld [vmem:[%s195 + $0xc8] sm:$0xff]
        %v241 = vld [vmem:[%s195 + $0xd0] sm:$0xff]
        %v242 = vld [vmem:[%s195 + $0xd8] sm:$0xff]
        %s243 = scalar_lea.vmem %s1, 1024
        %v244 = vld [vmem:[%s243] sm:$0xff]
        %v245 = vld [vmem:[%s243 + $0x8] sm:$0xff]
        %v246 = vld [vmem:[%s243 + $0x10] sm:$0xff]
        %v247 = vld [vmem:[%s243 + $0x18] sm:$0xff]
        %v248 = vld [vmem:[%s243 + $0x20] sm:$0xff]
        %v249 = vld [vmem:[%s243 + $0x28] sm:$0xff]
        %v250 = vld [vmem:[%s243 + $0x30] sm:$0xff]
        %v251 = vld [vmem:[%s243 + $0x38] sm:$0xff]
        %v252 = vld [vmem:[%s243 + $0x40] sm:$0xff]
        %v253 = vld [vmem:[%s243 + $0x48] sm:$0xff]
        %v254 = vld [vmem:[%s243 + $0x50] sm:$0xff]
        %v255 = vld [vmem:[%s243 + $0x58] sm:$0xff]
        %v256 = vld [vmem:[%s243 + $0x60] sm:$0xff]
        %v257 = vld [vmem:[%s243 + $0x68] sm:$0xff]
        %v258 = vld [vmem:[%s243 + $0x70] sm:$0xff]
        %v259 = vld [vmem:[%s243 + $0x78] sm:$0xff]
        %v260 = vld [vmem:[%s243 + $0x80] sm:$0xff]
        %v261 = vld [vmem:[%s243 + $0x88] sm:$0xff]
        %v262 = vld [vmem:[%s243 + $0x90] sm:$0xff]
        %v263 = vld [vmem:[%s243 + $0x98] sm:$0xff]
        %v264 = vld [vmem:[%s243 + $0xa0] sm:$0xff]
        %v265 = vld [vmem:[%s243 + $0xa8] sm:$0xff]
        %v266 = vld [vmem:[%s243 + $0xb0] sm:$0xff]
        %v267 = vld [vmem:[%s243 + $0xb8] sm:$0xff]
        %v268 = vld [vmem:[%s243 + $0xc0] sm:$0xff]
        %v269 = vld [vmem:[%s243 + $0xc8] sm:$0xff]
        %v270 = vld [vmem:[%s243 + $0xd0] sm:$0xff]
        %v271 = vld [vmem:[%s243 + $0xd8] sm:$0xff]
        %v272 = vld [vmem:[%s243 + $0xe0] sm:$0xff]
        %v273 = vld [vmem:[%s243 + $0xe8] sm:$0xff]
        %v274 = vld [vmem:[%s243 + $0xf0] sm:$0xff]
        %v275 = vld [vmem:[%s243 + $0xf8] sm:$0xff]
        %v276 = vld [vmem:[%s243 + $0x100] sm:$0xff]
        %v277 = vld [vmem:[%s243 + $0x108] sm:$0xff]
        %v278 = vld [vmem:[%s243 + $0x110] sm:$0xff]
        %v279 = vld [vmem:[%s243 + $0x118] sm:$0xff]
        %v280 = vld [vmem:[%s243 + $0x120] sm:$0xff]
        %v281 = vld [vmem:[%s243 + $0x128] sm:$0xff]
        %v282 = vld [vmem:[%s243 + $0x130] sm:$0xff]
        %v283 = vld [vmem:[%s243 + $0x138] sm:$0xff]
        %v284 = vld [vmem:[%s243 + $0x140] sm:$0xff]
        %v285 = vld [vmem:[%s243 + $0x148] sm:$0xff]
        %v286 = vld [vmem:[%s243 + $0x150] sm:$0xff]
        %v287 = vld [vmem:[%s243 + $0x158] sm:$0xff]
        %v288 = vld [vmem:[%s243 + $0x160] sm:$0xff]
        %v289 = vld [vmem:[%s243 + $0x168] sm:$0xff]
        %v290 = vld [vmem:[%s243 + $0x170] sm:$0xff]
        %v291 = vld [vmem:[%s243 + $0x178] sm:$0xff]
        %v292 = vld [vmem:[%s243 + $0x180] sm:$0xff]
        %v293 = vld [vmem:[%s243 + $0x188] sm:$0xff]
        %v294 = vld [vmem:[%s243 + $0x190] sm:$0xff]
        %v295 = vld [vmem:[%s243 + $0x198] sm:$0xff]
        %v296 = vld [vmem:[%s243 + $0x1a0] sm:$0xff]
        %v297 = vld [vmem:[%s243 + $0x1a8] sm:$0xff]
        %v298 = vld [vmem:[%s243 + $0x1b0] sm:$0xff]
        %v299 = vld [vmem:[%s243 + $0x1b8] sm:$0xff]
        %v300 = vld [vmem:[%s243 + $0x1c0] sm:$0xff]
        %v301 = vld [vmem:[%s243 + $0x1c8] sm:$0xff]
        %v302 = vld [vmem:[%s243 + $0x1d0] sm:$0xff]
        %v303 = vld [vmem:[%s243 + $0x1d8] sm:$0xff]
        %v304 = vld [vmem:[%s243 + $0x1e0] sm:$0xff]
        %v305 = vld [vmem:[%s243 + $0x1e8] sm:$0xff]
        %v306 = vld [vmem:[%s243 + $0x1f0] sm:$0xff]
        %v307 = vld [vmem:[%s243 + $0x1f8] sm:$0xff]
        %v308 = vld [vmem:[%s243 + $0x200] sm:$0xff]
        %v309 = vld [vmem:[%s243 + $0x208] sm:$0xff]
        %v310 = vld [vmem:[%s243 + $0x210] sm:$0xff]
        %v311 = vld [vmem:[%s243 + $0x218] sm:$0xff]
        %v312 = vld [vmem:[%s243 + $0x220] sm:$0xff]
        %v313 = vld [vmem:[%s243 + $0x228] sm:$0xff]
        %v314 = vld [vmem:[%s243 + $0x230] sm:$0xff]
        %v315 = vld [vmem:[%s243 + $0x238] sm:$0xff]
        %v316 = vld [vmem:[%s243 + $0x240] sm:$0xff]
        %v317 = vld [vmem:[%s243 + $0x248] sm:$0xff]
        %v318 = vld [vmem:[%s243 + $0x250] sm:$0xff]
        %v319 = vld [vmem:[%s243 + $0x258] sm:$0xff]
        %v320 = vld [vmem:[%s243 + $0x260] sm:$0xff]
        %v321 = vld [vmem:[%s243 + $0x268] sm:$0xff]
        %v322 = vld [vmem:[%s243 + $0x270] sm:$0xff]
        %v323 = vld [vmem:[%s243 + $0x278] sm:$0xff]
        %v324 = vld [vmem:[%s243 + $0x280] sm:$0xff]
        %v325 = vld [vmem:[%s243 + $0x288] sm:$0xff]
        %v326 = vld [vmem:[%s243 + $0x290] sm:$0xff]
        %v327 = vld [vmem:[%s243 + $0x298] sm:$0xff]
        %v328 = vld [vmem:[%s243 + $0x2a0] sm:$0xff]
        %v329 = vld [vmem:[%s243 + $0x2a8] sm:$0xff]
        %v330 = vld [vmem:[%s243 + $0x2b0] sm:$0xff]
        %v331 = vld [vmem:[%s243 + $0x2b8] sm:$0xff]
        %v332 = vld [vmem:[%s243 + $0x2c0] sm:$0xff]
        %v333 = vld [vmem:[%s243 + $0x2c8] sm:$0xff]
        %v334 = vld [vmem:[%s243 + $0x2d0] sm:$0xff]
        %v335 = vld [vmem:[%s243 + $0x2d8] sm:$0xff]
        %v336 = vld [vmem:[%s243 + $0x2e0] sm:$0xff]
        %v337 = vld [vmem:[%s243 + $0x2e8] sm:$0xff]
        %v338 = vld [vmem:[%s243 + $0x2f0] sm:$0xff]
        %v339 = vld [vmem:[%s243 + $0x2f8] sm:$0xff]
        %v340 = vld [vmem:[%s243 + $0x300] sm:$0xff]
        %v341 = vld [vmem:[%s243 + $0x308] sm:$0xff]
        %v342 = vld [vmem:[%s243 + $0x310] sm:$0xff]
        %v343 = vld [vmem:[%s243 + $0x318] sm:$0xff]
        %v344 = vld [vmem:[%s243 + $0x320] sm:$0xff]
        %v345 = vld [vmem:[%s243 + $0x328] sm:$0xff]
        %v346 = vld [vmem:[%s243 + $0x330] sm:$0xff]
        %v347 = vld [vmem:[%s243 + $0x338] sm:$0xff]
        %v348 = vld [vmem:[%s243 + $0x340] sm:$0xff]
        %v349 = vld [vmem:[%s243 + $0x348] sm:$0xff]
        %v350 = vld [vmem:[%s243 + $0x350] sm:$0xff]
        %v351 = vld [vmem:[%s243 + $0x358] sm:$0xff]
        %v352 = vld [vmem:[%s243 + $0x360] sm:$0xff]
        %v353 = vld [vmem:[%s243 + $0x368] sm:$0xff]
        %v354 = vld [vmem:[%s243 + $0x370] sm:$0xff]
        %v355 = vld [vmem:[%s243 + $0x378] sm:$0xff]
        %v356 = vld [vmem:[%s243 + $0x380] sm:$0xff]
        %v357 = vld [vmem:[%s243 + $0x388] sm:$0xff]
        %v358 = vld [vmem:[%s243 + $0x390] sm:$0xff]
        %v359 = vld [vmem:[%s243 + $0x398] sm:$0xff]
        %v360 = vld [vmem:[%s243 + $0x3a0] sm:$0xff]
        %v361 = vld [vmem:[%s243 + $0x3a8] sm:$0xff]
        %v362 = vld [vmem:[%s243 + $0x3b0] sm:$0xff]
        %v363 = vld [vmem:[%s243 + $0x3b8] sm:$0xff]
        %v364 = vld [vmem:[%s243 + $0x3c0] sm:$0xff]
        %v365 = vld [vmem:[%s243 + $0x3c8] sm:$0xff]
        %v366 = vld [vmem:[%s243 + $0x3d0] sm:$0xff]
        %v367 = vld [vmem:[%s243 + $0x3d8] sm:$0xff]
        %v368 = vld [vmem:[%s243 + $0x3e0] sm:$0xff]
        %v369 = vld [vmem:[%s243 + $0x3e8] sm:$0xff]
        %v370 = vld [vmem:[%s243 + $0x3f0] sm:$0xff]
        %v371 = vld [vmem:[%s243 + $0x3f8] sm:$0xff]
        %v400 = vunpack.c.l.b16 %v215
        %v401 = vunpack.c.h.b16 %v215
        %v402 = vunpack.c.l.b16 %v216
        %v403 = vunpack.c.h.b16 %v216
        %v404 = vunpack.c.l.b16 %v217
        %v405 = vunpack.c.h.b16 %v217
        %v406 = vunpack.c.l.b16 %v218
        %v407 = vunpack.c.h.b16 %v218
        %v408 = vunpack.c.l.b16 %v219
        %v409 = vunpack.c.h.b16 %v219
        %v410 = vunpack.c.l.b16 %v220
        %v411 = vunpack.c.h.b16 %v220
        %v412 = vunpack.c.l.b16 %v221
        %v413 = vunpack.c.h.b16 %v221
        %v414 = vunpack.c.l.b16 %v222
        %v415 = vunpack.c.h.b16 %v222
        %v416 = vunpack.c.l.b16 %v223
        %v417 = vunpack.c.h.b16 %v223
        %v418 = vunpack.c.l.b16 %v224
        %v419 = vunpack.c.h.b16 %v224
        %v420 = vunpack.c.l.b16 %v225
        %v421 = vunpack.c.h.b16 %v225
        %v422 = vunpack.c.l.b16 %v226
        %v423 = vunpack.c.h.b16 %v226
        %v424 = vunpack.c.l.b16 %v227
        %v425 = vunpack.c.h.b16 %v227
        %v426 = vunpack.c.l.b16 %v228
        %v427 = vunpack.c.h.b16 %v228
        %v428 = vunpack.c.l.b16 %v229
        %v429 = vunpack.c.h.b16 %v229
        %v430 = vunpack.c.l.b16 %v230
        %v431 = vunpack.c.h.b16 %v230
        %v432 = vunpack.c.l.b16 %v231
        %v433 = vunpack.c.h.b16 %v231
        %v434 = vunpack.c.l.b16 %v232
        %v435 = vunpack.c.h.b16 %v232
        %v436 = vunpack.c.l.b16 %v233
        %v437 = vunpack.c.h.b16 %v233
        %v438 = vunpack.c.l.b16 %v234
        %v439 = vunpack.c.h.b16 %v234
        %v440 = vunpack.c.l.b16 %v235
        %v441 = vunpack.c.h.b16 %v235
        %v442 = vunpack.c.l.b16 %v236
        %v443 = vunpack.c.h.b16 %v236
        %v444 = vunpack.c.l.b16 %v237
        %v445 = vunpack.c.h.b16 %v237
        %v446 = vunpack.c.l.b16 %v238
        %v447 = vunpack.c.h.b16 %v238
        %v448 = vunpack.c.l.b16 %v239
        %v449 = vunpack.c.h.b16 %v239
        %v450 = vunpack.c.l.b16 %v240
        %v451 = vunpack.c.h.b16 %v240
        %v452 = vunpack.c.l.b16 %v241
        %v453 = vunpack.c.h.b16 %v241
        %v454 = vunpack.c.l.b16 %v242
        %v455 = vunpack.c.h.b16 %v242
        %v456 = vpack.c.b16 %v404, %v400
        %v457 = vpack.c.b16 %v405, %v401
        %v458 = vpack.c.b16 %v406, %v402
        %v459 = vpack.c.b16 %v407, %v403
        %v460 = vpack.c.b16 %v412, %v408
        %v461 = vpack.c.b16 %v413, %v409
        %v462 = vpack.c.b16 %v414, %v410
        %v463 = vpack.c.b16 %v415, %v411
        %v464 = vpack.c.b16 %v420, %v416
        %v465 = vpack.c.b16 %v421, %v417
        %v466 = vpack.c.b16 %v422, %v418
        %v467 = vpack.c.b16 %v423, %v419
        %v468 = vpack.c.b16 %v428, %v424
        %v469 = vpack.c.b16 %v429, %v425
        %v470 = vpack.c.b16 %v430, %v426
        %v471 = vpack.c.b16 %v431, %v427
        %v472 = vpack.c.b16 %v436, %v432
        %v473 = vpack.c.b16 %v437, %v433
        %v474 = vpack.c.b16 %v438, %v434
        %v475 = vpack.c.b16 %v439, %v435
        %v476 = vpack.c.b16 %v444, %v440
        %v477 = vpack.c.b16 %v445, %v441
        %v478 = vpack.c.b16 %v446, %v442
        %v479 = vpack.c.b16 %v447, %v443
        %v480 = vpack.c.b16 %v452, %v448
        %v481 = vpack.c.b16 %v453, %v449
        %v482 = vpack.c.b16 %v454, %v450
        %v483 = vpack.c.b16 %v455, %v451
        %v640 = vunpack.c.l.b16 %v244
        %v641 = vunpack.c.h.b16 %v244
        %v642 = vunpack.c.l.b16 %v245
        %v643 = vunpack.c.h.b16 %v245
        %v644 = vunpack.c.l.b16 %v246
        %v645 = vunpack.c.h.b16 %v246
        %v646 = vunpack.c.l.b16 %v247
        %v647 = vunpack.c.h.b16 %v247
        %v648 = vunpack.c.l.b16 %v248
        %v649 = vunpack.c.h.b16 %v248
        %v650 = vunpack.c.l.b16 %v249
        %v651 = vunpack.c.h.b16 %v249
        %v652 = vunpack.c.l.b16 %v250
        %v653 = vunpack.c.h.b16 %v250
        %v654 = vunpack.c.l.b16 %v251
        %v655 = vunpack.c.h.b16 %v251
        %v656 = vunpack.c.l.b16 %v252
        %v657 = vunpack.c.h.b16 %v252
        %v658 = vunpack.c.l.b16 %v253
        %v659 = vunpack.c.h.b16 %v253
        %v660 = vunpack.c.l.b16 %v254
        %v661 = vunpack.c.h.b16 %v254
        %v662 = vunpack.c.l.b16 %v255
        %v663 = vunpack.c.h.b16 %v255
        %v664 = vunpack.c.l.b16 %v256
        %v665 = vunpack.c.h.b16 %v256
        %v666 = vunpack.c.l.b16 %v257
        %v667 = vunpack.c.h.b16 %v257
        %v668 = vunpack.c.l.b16 %v258
        %v669 = vunpack.c.h.b16 %v258
        %v670 = vunpack.c.l.b16 %v259
        %v671 = vunpack.c.h.b16 %v259
        %v672 = vunpack.c.l.b16 %v260
        %v673 = vunpack.c.h.b16 %v260
        %v674 = vunpack.c.l.b16 %v261
        %v675 = vunpack.c.h.b16 %v261
        %v676 = vunpack.c.l.b16 %v262
        %v677 = vunpack.c.h.b16 %v262
        %v678 = vunpack.c.l.b16 %v263
        %v679 = vunpack.c.h.b16 %v263
        %v680 = vunpack.c.l.b16 %v264
        %v681 = vunpack.c.h.b16 %v264
        %v682 = vunpack.c.l.b16 %v265
        %v683 = vunpack.c.h.b16 %v265
        %v684 = vunpack.c.l.b16 %v266
        %v685 = vunpack.c.h.b16 %v266
        %v686 = vunpack.c.l.b16 %v267
        %v687 = vunpack.c.h.b16 %v267
        %v688 = vunpack.c.l.b16 %v268
        %v689 = vunpack.c.h.b16 %v268
        %v690 = vunpack.c.l.b16 %v269
        %v691 = vunpack.c.h.b16 %v269
        %v692 = vunpack.c.l.b16 %v270
        %v693 = vunpack.c.h.b16 %v270
        %v694 = vunpack.c.l.b16 %v271
        %v695 = vunpack.c.h.b16 %v271
        %v696 = vunpack.c.l.b16 %v272
        %v697 = vunpack.c.h.b16 %v272
        %v698 = vunpack.c.l.b16 %v273
        %v699 = vunpack.c.h.b16 %v273
        %v700 = vunpack.c.l.b16 %v274
        %v701 = vunpack.c.h.b16 %v274
        %v702 = vunpack.c.l.b16 %v275
        %v703 = vunpack.c.h.b16 %v275
        %v704 = vunpack.c.l.b16 %v276
        %v705 = vunpack.c.h.b16 %v276
        %v706 = vunpack.c.l.b16 %v277
        %v707 = vunpack.c.h.b16 %v277
        %v708 = vunpack.c.l.b16 %v278
        %v709 = vunpack.c.h.b16 %v278
        %v710 = vunpack.c.l.b16 %v279
        %v711 = vunpack.c.h.b16 %v279
        %v712 = vunpack.c.l.b16 %v280
        %v713 = vunpack.c.h.b16 %v280
        %v714 = vunpack.c.l.b16 %v281
        %v715 = vunpack.c.h.b16 %v281
        %v716 = vunpack.c.l.b16 %v282
        %v717 = vunpack.c.h.b16 %v282
        %v718 = vunpack.c.l.b16 %v283
        %v719 = vunpack.c.h.b16 %v283
        %v720 = vunpack.c.l.b16 %v284
        %v721 = vunpack.c.h.b16 %v284
        %v722 = vunpack.c.l.b16 %v285
        %v723 = vunpack.c.h.b16 %v285
        %v724 = vunpack.c.l.b16 %v286
        %v725 = vunpack.c.h.b16 %v286
        %v726 = vunpack.c.l.b16 %v287
        %v727 = vunpack.c.h.b16 %v287
        %v728 = vunpack.c.l.b16 %v288
        %v729 = vunpack.c.h.b16 %v288
        %v730 = vunpack.c.l.b16 %v289
        %v731 = vunpack.c.h.b16 %v289
        %v732 = vunpack.c.l.b16 %v290
        %v733 = vunpack.c.h.b16 %v290
        %v734 = vunpack.c.l.b16 %v291
        %v735 = vunpack.c.h.b16 %v291
        %v736 = vunpack.c.l.b16 %v292
        %v737 = vunpack.c.h.b16 %v292
        %v738 = vunpack.c.l.b16 %v293
        %v739 = vunpack.c.h.b16 %v293
        %v740 = vunpack.c.l.b16 %v294
        %v741 = vunpack.c.h.b16 %v294
        %v742 = vunpack.c.l.b16 %v295
        %v743 = vunpack.c.h.b16 %v295
        %v744 = vunpack.c.l.b16 %v296
        %v745 = vunpack.c.h.b16 %v296
        %v746 = vunpack.c.l.b16 %v297
        %v747 = vunpack.c.h.b16 %v297
        %v748 = vunpack.c.l.b16 %v298
        %v749 = vunpack.c.h.b16 %v298
        %v750 = vunpack.c.l.b16 %v299
        %v751 = vunpack.c.h.b16 %v299
        %v752 = vunpack.c.l.b16 %v300
        %v753 = vunpack.c.h.b16 %v300
        %v754 = vunpack.c.l.b16 %v301
        %v755 = vunpack.c.h.b16 %v301
        %v756 = vunpack.c.l.b16 %v302
        %v757 = vunpack.c.h.b16 %v302
        %v758 = vunpack.c.l.b16 %v303
        %v759 = vunpack.c.h.b16 %v303
        %v760 = vunpack.c.l.b16 %v304
        %v761 = vunpack.c.h.b16 %v304
        %v762 = vunpack.c.l.b16 %v305
        %v763 = vunpack.c.h.b16 %v305
        %v764 = vunpack.c.l.b16 %v306
        %v765 = vunpack.c.h.b16 %v306
        %v766 = vunpack.c.l.b16 %v307
        %v767 = vunpack.c.h.b16 %v307
        %v768 = vunpack.c.l.b16 %v308
        %v769 = vunpack.c.h.b16 %v308
        %v770 = vunpack.c.l.b16 %v309
        %v771 = vunpack.c.h.b16 %v309
        %v772 = vunpack.c.l.b16 %v310
        %v773 = vunpack.c.h.b16 %v310
        %v774 = vunpack.c.l.b16 %v311
        %v775 = vunpack.c.h.b16 %v311
        %v776 = vunpack.c.l.b16 %v312
        %v777 = vunpack.c.h.b16 %v312
        %v778 = vunpack.c.l.b16 %v313
        %v779 = vunpack.c.h.b16 %v313
        %v780 = vunpack.c.l.b16 %v314
        %v781 = vunpack.c.h.b16 %v314
        %v782 = vunpack.c.l.b16 %v315
        %v783 = vunpack.c.h.b16 %v315
        %v784 = vunpack.c.l.b16 %v316
        %v785 = vunpack.c.h.b16 %v316
        %v786 = vunpack.c.l.b16 %v317
        %v787 = vunpack.c.h.b16 %v317
        %v788 = vunpack.c.l.b16 %v318
        %v789 = vunpack.c.h.b16 %v318
        %v790 = vunpack.c.l.b16 %v319
        %v791 = vunpack.c.h.b16 %v319
        %v792 = vunpack.c.l.b16 %v320
        %v793 = vunpack.c.h.b16 %v320
        %v794 = vunpack.c.l.b16 %v321
        %v795 = vunpack.c.h.b16 %v321
        %v796 = vunpack.c.l.b16 %v322
        %v797 = vunpack.c.h.b16 %v322
        %v798 = vunpack.c.l.b16 %v323
        %v799 = vunpack.c.h.b16 %v323
        %v800 = vunpack.c.l.b16 %v324
        %v801 = vunpack.c.h.b16 %v324
        %v802 = vunpack.c.l.b16 %v325
        %v803 = vunpack.c.h.b16 %v325
        %v804 = vunpack.c.l.b16 %v326
        %v805 = vunpack.c.h.b16 %v326
        %v806 = vunpack.c.l.b16 %v327
        %v807 = vunpack.c.h.b16 %v327
        %v808 = vunpack.c.l.b16 %v328
        %v809 = vunpack.c.h.b16 %v328
        %v810 = vunpack.c.l.b16 %v329
        %v811 = vunpack.c.h.b16 %v329
        %v812 = vunpack.c.l.b16 %v330
        %v813 = vunpack.c.h.b16 %v330
        %v814 = vunpack.c.l.b16 %v331
        %v815 = vunpack.c.h.b16 %v331
        %v816 = vunpack.c.l.b16 %v332
        %v817 = vunpack.c.h.b16 %v332
        %v818 = vunpack.c.l.b16 %v333
        %v819 = vunpack.c.h.b16 %v333
        %v820 = vunpack.c.l.b16 %v334
        %v821 = vunpack.c.h.b16 %v334
        %v822 = vunpack.c.l.b16 %v335
        %v823 = vunpack.c.h.b16 %v335
        %v824 = vunpack.c.l.b16 %v336
        %v825 = vunpack.c.h.b16 %v336
        %v826 = vunpack.c.l.b16 %v337
        %v827 = vunpack.c.h.b16 %v337
        %v828 = vunpack.c.l.b16 %v338
        %v829 = vunpack.c.h.b16 %v338
        %v830 = vunpack.c.l.b16 %v339
        %v831 = vunpack.c.h.b16 %v339
        %v832 = vunpack.c.l.b16 %v340
        %v833 = vunpack.c.h.b16 %v340
        %v834 = vunpack.c.l.b16 %v341
        %v835 = vunpack.c.h.b16 %v341
        %v836 = vunpack.c.l.b16 %v342
        %v837 = vunpack.c.h.b16 %v342
        %v838 = vunpack.c.l.b16 %v343
        %v839 = vunpack.c.h.b16 %v343
        %v840 = vunpack.c.l.b16 %v344
        %v841 = vunpack.c.h.b16 %v344
        %v842 = vunpack.c.l.b16 %v345
        %v843 = vunpack.c.h.b16 %v345
        %v844 = vunpack.c.l.b16 %v346
        %v845 = vunpack.c.h.b16 %v346
        %v846 = vunpack.c.l.b16 %v347
        %v847 = vunpack.c.h.b16 %v347
        %v848 = vunpack.c.l.b16 %v348
        %v849 = vunpack.c.h.b16 %v348
        %v850 = vunpack.c.l.b16 %v349
        %v851 = vunpack.c.h.b16 %v349
        %v852 = vunpack.c.l.b16 %v350
        %v853 = vunpack.c.h.b16 %v350
        %v854 = vunpack.c.l.b16 %v351
        %v855 = vunpack.c.h.b16 %v351
        %v856 = vunpack.c.l.b16 %v352
        %v857 = vunpack.c.h.b16 %v352
        %v858 = vunpack.c.l.b16 %v353
        %v859 = vunpack.c.h.b16 %v353
        %v860 = vunpack.c.l.b16 %v354
        %v861 = vunpack.c.h.b16 %v354
        %v862 = vunpack.c.l.b16 %v355
        %v863 = vunpack.c.h.b16 %v355
        %v864 = vunpack.c.l.b16 %v356
        %v865 = vunpack.c.h.b16 %v356
        %v866 = vunpack.c.l.b16 %v357
        %v867 = vunpack.c.h.b16 %v357
        %v868 = vunpack.c.l.b16 %v358
        %v869 = vunpack.c.h.b16 %v358
        %v870 = vunpack.c.l.b16 %v359
        %v871 = vunpack.c.h.b16 %v359
        %v872 = vunpack.c.l.b16 %v360
        %v873 = vunpack.c.h.b16 %v360
        %v874 = vunpack.c.l.b16 %v361
        %v875 = vunpack.c.h.b16 %v361
        %v876 = vunpack.c.l.b16 %v362
        %v877 = vunpack.c.h.b16 %v362
        %v878 = vunpack.c.l.b16 %v363
        %v879 = vunpack.c.h.b16 %v363
        %v880 = vunpack.c.l.b16 %v364
        %v881 = vunpack.c.h.b16 %v364
        %v882 = vunpack.c.l.b16 %v365
        %v883 = vunpack.c.h.b16 %v365
        %v884 = vunpack.c.l.b16 %v366
        %v885 = vunpack.c.h.b16 %v366
        %v886 = vunpack.c.l.b16 %v367
        %v887 = vunpack.c.h.b16 %v367
        %v888 = vunpack.c.l.b16 %v368
        %v889 = vunpack.c.h.b16 %v368
        %v890 = vunpack.c.l.b16 %v369
        %v891 = vunpack.c.h.b16 %v369
        %v892 = vunpack.c.l.b16 %v370
        %v893 = vunpack.c.h.b16 %v370
        %v894 = vunpack.c.l.b16 %v371
        %v895 = vunpack.c.h.b16 %v371
        %v896 = vpack.c.b16 %v644, %v640
        %v897 = vpack.c.b16 %v645, %v641
        %v898 = vpack.c.b16 %v646, %v642
        %v899 = vpack.c.b16 %v647, %v643
        %v900 = vpack.c.b16 %v652, %v648
        %v901 = vpack.c.b16 %v653, %v649
        %v902 = vpack.c.b16 %v654, %v650
        %v903 = vpack.c.b16 %v655, %v651
        %v904 = vpack.c.b16 %v660, %v656
        %v905 = vpack.c.b16 %v661, %v657
        %v906 = vpack.c.b16 %v662, %v658
        %v907 = vpack.c.b16 %v663, %v659
        %v908 = vpack.c.b16 %v668, %v664
        %v909 = vpack.c.b16 %v669, %v665
        %v910 = vpack.c.b16 %v670, %v666
        %v911 = vpack.c.b16 %v671, %v667
        %v912 = vpack.c.b16 %v676, %v672
        %v913 = vpack.c.b16 %v677, %v673
        %v914 = vpack.c.b16 %v678, %v674
        %v915 = vpack.c.b16 %v679, %v675
        %v916 = vpack.c.b16 %v684, %v680
        %v917 = vpack.c.b16 %v685, %v681
        %v918 = vpack.c.b16 %v686, %v682
        %v919 = vpack.c.b16 %v687, %v683
        %v920 = vpack.c.b16 %v692, %v688
        %v921 = vpack.c.b16 %v693, %v689
        %v922 = vpack.c.b16 %v694, %v690
        %v923 = vpack.c.b16 %v695, %v691
        %v924 = vpack.c.b16 %v700, %v696
        %v925 = vpack.c.b16 %v701, %v697
        %v926 = vpack.c.b16 %v702, %v698
        %v927 = vpack.c.b16 %v703, %v699
        %v928 = vpack.c.b16 %v708, %v704
        %v929 = vpack.c.b16 %v709, %v705
        %v930 = vpack.c.b16 %v710, %v706
        %v931 = vpack.c.b16 %v711, %v707
        %v932 = vpack.c.b16 %v716, %v712
        %v933 = vpack.c.b16 %v717, %v713
        %v934 = vpack.c.b16 %v718, %v714
        %v935 = vpack.c.b16 %v719, %v715
        %v936 = vpack.c.b16 %v724, %v720
        %v937 = vpack.c.b16 %v725, %v721
        %v938 = vpack.c.b16 %v726, %v722
        %v939 = vpack.c.b16 %v727, %v723
        %v940 = vpack.c.b16 %v732, %v728
        %v941 = vpack.c.b16 %v733, %v729
        %v942 = vpack.c.b16 %v734, %v730
        %v943 = vpack.c.b16 %v735, %v731
        %v944 = vpack.c.b16 %v740, %v736
        %v945 = vpack.c.b16 %v741, %v737
        %v946 = vpack.c.b16 %v742, %v738
        %v947 = vpack.c.b16 %v743, %v739
        %v948 = vpack.c.b16 %v748, %v744
        %v949 = vpack.c.b16 %v749, %v745
        %v950 = vpack.c.b16 %v750, %v746
        %v951 = vpack.c.b16 %v751, %v747
        %v952 = vpack.c.b16 %v756, %v752
        %v953 = vpack.c.b16 %v757, %v753
        %v954 = vpack.c.b16 %v758, %v754
        %v955 = vpack.c.b16 %v759, %v755
        %v956 = vpack.c.b16 %v764, %v760
        %v957 = vpack.c.b16 %v765, %v761
        %v958 = vpack.c.b16 %v766, %v762
        %v959 = vpack.c.b16 %v767, %v763
        %v960 = vpack.c.b16 %v772, %v768
        %v961 = vpack.c.b16 %v773, %v769
        %v962 = vpack.c.b16 %v774, %v770
        %v963 = vpack.c.b16 %v775, %v771
        %v964 = vpack.c.b16 %v780, %v776
        %v965 = vpack.c.b16 %v781, %v777
        %v966 = vpack.c.b16 %v782, %v778
        %v967 = vpack.c.b16 %v783, %v779
        %v968 = vpack.c.b16 %v788, %v784
        %v969 = vpack.c.b16 %v789, %v785
        %v970 = vpack.c.b16 %v790, %v786
        %v971 = vpack.c.b16 %v791, %v787
        %v972 = vpack.c.b16 %v796, %v792
        %v973 = vpack.c.b16 %v797, %v793
        %v974 = vpack.c.b16 %v798, %v794
        %v975 = vpack.c.b16 %v799, %v795
        %v976 = vpack.c.b16 %v804, %v800
        %v977 = vpack.c.b16 %v805, %v801
        %v978 = vpack.c.b16 %v806, %v802
        %v979 = vpack.c.b16 %v807, %v803
        %v980 = vpack.c.b16 %v812, %v808
        %v981 = vpack.c.b16 %v813, %v809
        %v982 = vpack.c.b16 %v814, %v810
        %v983 = vpack.c.b16 %v815, %v811
        %v984 = vpack.c.b16 %v820, %v816
        %v985 = vpack.c.b16 %v821, %v817
        %v986 = vpack.c.b16 %v822, %v818
        %v987 = vpack.c.b16 %v823, %v819
        %v988 = vpack.c.b16 %v828, %v824
        %v989 = vpack.c.b16 %v829, %v825
        %v990 = vpack.c.b16 %v830, %v826
        %v991 = vpack.c.b16 %v831, %v827
        %v992 = vpack.c.b16 %v836, %v832
        %v993 = vpack.c.b16 %v837, %v833
        %v994 = vpack.c.b16 %v838, %v834
        %v995 = vpack.c.b16 %v839, %v835
        %v996 = vpack.c.b16 %v844, %v840
        %v997 = vpack.c.b16 %v845, %v841
        %v998 = vpack.c.b16 %v846, %v842
        %v999 = vpack.c.b16 %v847, %v843
        %v1000 = vpack.c.b16 %v852, %v848
        %v1001 = vpack.c.b16 %v853, %v849
        %v1002 = vpack.c.b16 %v854, %v850
        %v1003 = vpack.c.b16 %v855, %v851
        %v1004 = vpack.c.b16 %v860, %v856
        %v1005 = vpack.c.b16 %v861, %v857
        %v1006 = vpack.c.b16 %v862, %v858
        %v1007 = vpack.c.b16 %v863, %v859
        %v1008 = vpack.c.b16 %v868, %v864
        %v1009 = vpack.c.b16 %v869, %v865
        %v1010 = vpack.c.b16 %v870, %v866
        %v1011 = vpack.c.b16 %v871, %v867
        %v1012 = vpack.c.b16 %v876, %v872
        %v1013 = vpack.c.b16 %v877, %v873
        %v1014 = vpack.c.b16 %v878, %v874
        %v1015 = vpack.c.b16 %v879, %v875
        %v1016 = vpack.c.b16 %v884, %v880
        %v1017 = vpack.c.b16 %v885, %v881
        %v1018 = vpack.c.b16 %v886, %v882
        %v1019 = vpack.c.b16 %v887, %v883
        %v1020 = vpack.c.b16 %v892, %v888
        %v1021 = vpack.c.b16 %v893, %v889
        %v1022 = vpack.c.b16 %v894, %v890
        %v1023 = vpack.c.b16 %v895, %v891
        %1152 = vmatprep.subr.bf16.mxu0 %v925
        %1153 = vmatpush1.bf16.msra.mxu0 %v924
        %1154 = vmatprep.subr.bf16.mxu0 %v921
        %1155 = vmatpush1.bf16.msra.mxu0 %v920
        %1156 = vmatprep.subr.bf16.mxu0 %v917
        %1157 = vmatpush1.bf16.msra.mxu0 %v916
        %1158 = vmatprep.subr.bf16.mxu0 %v913
        %1159 = vmatpush1.bf16.msra.mxu0 %v912
        %1160 = vmatprep.subr.bf16.mxu0 %v909
        %1161 = vmatpush1.bf16.msra.mxu0 %v908
        %1162 = vmatprep.subr.bf16.mxu0 %v905
        %1163 = vmatpush1.bf16.msra.mxu0 %v904
        %1164 = vmatprep.subr.bf16.mxu0 %v901
        %1165 = vmatpush1.bf16.msra.mxu0 %v900
        %1166 = vmatprep.subr.bf16.mxu0 %v897
        %1167 = vmatpush1.bf16.msra.mxu0 %v896
        %1168 = vmatprep.subr.bf16.mxu0 %v957
        %1169 = vmatpush2.bf16.msra.mxu0 %v956
        %1170 = vmatprep.subr.bf16.mxu0 %v953
        %1171 = vmatpush2.bf16.msra.mxu0 %v952
        %1172 = vmatprep.subr.bf16.mxu0 %v949
        %1173 = vmatpush2.bf16.msra.mxu0 %v948
        %1174 = vmatprep.subr.bf16.mxu0 %v945
        %1175 = vmatpush2.bf16.msra.mxu0 %v944
        %1176 = vmatprep.subr.bf16.mxu0 %v941
        %1177 = vmatpush2.bf16.msra.mxu0 %v940
        %1178 = vmatprep.subr.bf16.mxu0 %v937
        %1179 = vmatpush2.bf16.msra.mxu0 %v936
        %1180 = vmatprep.subr.bf16.mxu0 %v933
        %1181 = vmatpush2.bf16.msra.mxu0 %v932
        %1182 = vmatprep.subr.bf16.mxu0 %v929
        %1183 = vmatpush2.bf16.msra.mxu0 %v928
        %1184 = vmatprep.mubr.bf16.mxu0 %v457
        %1185 = vmatmul.mubr.bf16.gmra.mxu0 %v456
        %v1186 = vpop.f32.mrf.mxu0
        %v1187 = vadd.f32 0.0, %v1186
        %v1188 = vpop.f32.mrf.mxu0
        %v1189 = vadd.f32 0.0, %v1188
        %v1190 = vpop.f32.mrf.mxu0
        %v1191 = vadd.f32 0.0, %v1190
        %v1192 = vpop.f32.mrf.mxu0
        %v1193 = vadd.f32 0.0, %v1192
        %1194 = vmatprep.mubr.bf16.mxu0 %v461
        %1195 = vmatmul.mubr.bf16.gmra.mxu0 %v460
        %v1196 = vpop.f32.mrf.mxu0
        %v1197 = vadd.f32 0.0, %v1196
        %v1198 = vpop.f32.mrf.mxu0
        %v1199 = vadd.f32 0.0, %v1198
        %v1200 = vpop.f32.mrf.mxu0
        %v1201 = vadd.f32 0.0, %v1200
        %v1202 = vpop.f32.mrf.mxu0
        %v1203 = vadd.f32 0.0, %v1202
        %1204 = vmatprep.mubr.bf16.mxu0 %v465
        %1205 = vmatmul.mubr.bf16.gmra.mxu0 %v464
        %v1206 = vpop.f32.mrf.mxu0
        %v1207 = vadd.f32 0.0, %v1206
        %v1208 = vpop.f32.mrf.mxu0
        %v1209 = vadd.f32 0.0, %v1208
        %v1210 = vpop.f32.mrf.mxu0
        %v1211 = vadd.f32 0.0, %v1210
        %v1212 = vpop.f32.mrf.mxu0
        %v1213 = vadd.f32 0.0, %v1212
        %1214 = vmatprep.mubr.bf16.mxu0 %v469
        %1215 = vmatmul.mubr.bf16.gmra.mxu0 %v468
        %v1216 = vpop.f32.mrf.mxu0
        %v1217 = vadd.f32 0.0, %v1216
        %v1218 = vpop.f32.mrf.mxu0
        %v1219 = vadd.f32 0.0, %v1218
        %v1220 = vpop.f32.mrf.mxu0
        %v1221 = vadd.f32 0.0, %v1220
        %v1222 = vpop.f32.mrf.mxu0
        %v1223 = vadd.f32 0.0, %v1222
        %1224 = vmatprep.mubr.bf16.mxu0 %v473
        %1225 = vmatmul.mubr.bf16.gmra.mxu0 %v472
        %v1226 = vpop.f32.mrf.mxu0
        %v1227 = vadd.f32 0.0, %v1226
        %v1228 = vpop.f32.mrf.mxu0
        %v1229 = vadd.f32 0.0, %v1228
        %v1230 = vpop.f32.mrf.mxu0
        %v1231 = vadd.f32 0.0, %v1230
        %v1232 = vpop.f32.mrf.mxu0
        %v1233 = vadd.f32 0.0, %v1232
        %1234 = vmatprep.mubr.bf16.mxu0 %v477
        %1235 = vmatmul.mubr.bf16.gmra.mxu0 %v476
        %v1236 = vpop.f32.mrf.mxu0
        %v1237 = vadd.f32 0.0, %v1236
        %v1238 = vpop.f32.mrf.mxu0
        %v1239 = vadd.f32 0.0, %v1238
        %v1240 = vpop.f32.mrf.mxu0
        %v1241 = vadd.f32 0.0, %v1240
        %v1242 = vpop.f32.mrf.mxu0
        %v1243 = vadd.f32 0.0, %v1242
        %1244 = vmatprep.mubr.bf16.mxu0 %v481
        %1245 = vmatmul.mubr.bf16.gmra.mxu0 %v480
        %v1246 = vpop.f32.mrf.mxu0
        %v1247 = vadd.f32 0.0, %v1246
        %v1248 = vpop.f32.mrf.mxu0
        %v1249 = vadd.f32 0.0, %v1248
        %v1250 = vpop.f32.mrf.mxu0
        %v1251 = vadd.f32 0.0, %v1250
        %v1252 = vpop.f32.mrf.mxu0
        %v1253 = vadd.f32 0.0, %v1252
        %1254 = vdwg.mxu0
        %1255 = vmatprep.subr.bf16.mxu0 %v989
        %1256 = vmatpush1.bf16.msra.mxu0 %v988
        %1257 = vmatprep.subr.bf16.mxu0 %v985
        %1258 = vmatpush1.bf16.msra.mxu0 %v984
        %1259 = vmatprep.subr.bf16.mxu0 %v981
        %1260 = vmatpush1.bf16.msra.mxu0 %v980
        %1261 = vmatprep.subr.bf16.mxu0 %v977
        %1262 = vmatpush1.bf16.msra.mxu0 %v976
        %1263 = vmatprep.subr.bf16.mxu0 %v973
        %1264 = vmatpush1.bf16.msra.mxu0 %v972
        %1265 = vmatprep.subr.bf16.mxu0 %v969
        %1266 = vmatpush1.bf16.msra.mxu0 %v968
        %1267 = vmatprep.subr.bf16.mxu0 %v965
        %1268 = vmatpush1.bf16.msra.mxu0 %v964
        %1269 = vmatprep.subr.bf16.mxu0 %v961
        %1270 = vmatpush1.bf16.msra.mxu0 %v960
        %1271 = vmatprep.subr.bf16.mxu0 %v1021
        %1272 = vmatpush2.bf16.msra.mxu0 %v1020
        %1273 = vmatprep.subr.bf16.mxu0 %v1017
        %1274 = vmatpush2.bf16.msra.mxu0 %v1016
        %1275 = vmatprep.subr.bf16.mxu0 %v1013
        %1276 = vmatpush2.bf16.msra.mxu0 %v1012
        %1277 = vmatprep.subr.bf16.mxu0 %v1009
        %1278 = vmatpush2.bf16.msra.mxu0 %v1008
        %1279 = vmatprep.subr.bf16.mxu0 %v1005
        %1280 = vmatpush2.bf16.msra.mxu0 %v1004
        %1281 = vmatprep.subr.bf16.mxu0 %v1001
        %1282 = vmatpush2.bf16.msra.mxu0 %v1000
        %1283 = vmatprep.subr.bf16.mxu0 %v997
        %1284 = vmatpush2.bf16.msra.mxu0 %v996
        %1285 = vmatprep.subr.bf16.mxu0 %v993
        %1286 = vmatpush2.bf16.msra.mxu0 %v992
        %1287 = vmatprep.mubr.bf16.mxu0 %v459
        %1288 = vmatmul.mubr.bf16.gmra.mxu0 %v458
        %v1289 = vpop.f32.mrf.mxu0
        %v1290 = vadd.f32 %v1187, %v1289
        %v1291 = vpop.f32.mrf.mxu0
        %v1292 = vadd.f32 %v1189, %v1291
        %v1293 = vpop.f32.mrf.mxu0
        %v1294 = vadd.f32 %v1191, %v1293
        %v1295 = vpop.f32.mrf.mxu0
        %v1296 = vadd.f32 %v1193, %v1295
        %1297 = vmatprep.mubr.bf16.mxu0 %v463
        %1298 = vmatmul.mubr.bf16.gmra.mxu0 %v462
        %v1299 = vpop.f32.mrf.mxu0
        %v1300 = vadd.f32 %v1197, %v1299
        %v1301 = vpop.f32.mrf.mxu0
        %v1302 = vadd.f32 %v1199, %v1301
        %v1303 = vpop.f32.mrf.mxu0
        %v1304 = vadd.f32 %v1201, %v1303
        %v1305 = vpop.f32.mrf.mxu0
        %v1306 = vadd.f32 %v1203, %v1305
        %1307 = vmatprep.mubr.bf16.mxu0 %v467
        %1308 = vmatmul.mubr.bf16.gmra.mxu0 %v466
        %v1309 = vpop.f32.mrf.mxu0
        %v1310 = vadd.f32 %v1207, %v1309
        %v1311 = vpop.f32.mrf.mxu0
        %v1312 = vadd.f32 %v1209, %v1311
        %v1313 = vpop.f32.mrf.mxu0
        %v1314 = vadd.f32 %v1211, %v1313
        %v1315 = vpop.f32.mrf.mxu0
        %v1316 = vadd.f32 %v1213, %v1315
        %1317 = vmatprep.mubr.bf16.mxu0 %v471
        %1318 = vmatmul.mubr.bf16.gmra.mxu0 %v470
        %v1319 = vpop.f32.mrf.mxu0
        %v1320 = vadd.f32 %v1217, %v1319
        %v1321 = vpop.f32.mrf.mxu0
        %v1322 = vadd.f32 %v1219, %v1321
        %v1323 = vpop.f32.mrf.mxu0
        %v1324 = vadd.f32 %v1221, %v1323
        %v1325 = vpop.f32.mrf.mxu0
        %v1326 = vadd.f32 %v1223, %v1325
        %1327 = vmatprep.mubr.bf16.mxu0 %v475
        %1328 = vmatmul.mubr.bf16.gmra.mxu0 %v474
        %v1329 = vpop.f32.mrf.mxu0
        %v1330 = vadd.f32 %v1227, %v1329
        %v1331 = vpop.f32.mrf.mxu0
        %v1332 = vadd.f32 %v1229, %v1331
        %v1333 = vpop.f32.mrf.mxu0
        %v1334 = vadd.f32 %v1231, %v1333
        %v1335 = vpop.f32.mrf.mxu0
        %v1336 = vadd.f32 %v1233, %v1335
        %1337 = vmatprep.mubr.bf16.mxu0 %v479
        %1338 = vmatmul.mubr.bf16.gmra.mxu0 %v478
        %v1339 = vpop.f32.mrf.mxu0
        %v1340 = vadd.f32 %v1237, %v1339
        %v1341 = vpop.f32.mrf.mxu0
        %v1342 = vadd.f32 %v1239, %v1341
        %v1343 = vpop.f32.mrf.mxu0
        %v1344 = vadd.f32 %v1241, %v1343
        %v1345 = vpop.f32.mrf.mxu0
        %v1346 = vadd.f32 %v1243, %v1345
        %1347 = vmatprep.mubr.bf16.mxu0 %v483
        %1348 = vmatmul.mubr.bf16.gmra.mxu0 %v482
        %v1349 = vpop.f32.mrf.mxu0
        %v1350 = vadd.f32 %v1247, %v1349
        %v1351 = vpop.f32.mrf.mxu0
        %v1352 = vadd.f32 %v1249, %v1351
        %v1353 = vpop.f32.mrf.mxu0
        %v1354 = vadd.f32 %v1251, %v1353
        %v1355 = vpop.f32.mrf.mxu0
        %v1356 = vadd.f32 %v1253, %v1355
        %1357 = vdwg.mxu0
        %1358 = vmatprep.subr.bf16.mxu0 %v927
        %1359 = vmatpush1.bf16.msra.mxu0 %v926
        %1360 = vmatprep.subr.bf16.mxu0 %v923
        %1361 = vmatpush1.bf16.msra.mxu0 %v922
        %1362 = vmatprep.subr.bf16.mxu0 %v919
        %1363 = vmatpush1.bf16.msra.mxu0 %v918
        %1364 = vmatprep.subr.bf16.mxu0 %v915
        %1365 = vmatpush1.bf16.msra.mxu0 %v914
        %1366 = vmatprep.subr.bf16.mxu0 %v911
        %1367 = vmatpush1.bf16.msra.mxu0 %v910
        %1368 = vmatprep.subr.bf16.mxu0 %v907
        %1369 = vmatpush1.bf16.msra.mxu0 %v906
        %1370 = vmatprep.subr.bf16.mxu0 %v903
        %1371 = vmatpush1.bf16.msra.mxu0 %v902
        %1372 = vmatprep.subr.bf16.mxu0 %v899
        %1373 = vmatpush1.bf16.msra.mxu0 %v898
        %1374 = vmatprep.subr.bf16.mxu0 %v959
        %1375 = vmatpush2.bf16.msra.mxu0 %v958
        %1376 = vmatprep.subr.bf16.mxu0 %v955
        %1377 = vmatpush2.bf16.msra.mxu0 %v954
        %1378 = vmatprep.subr.bf16.mxu0 %v951
        %1379 = vmatpush2.bf16.msra.mxu0 %v950
        %1380 = vmatprep.subr.bf16.mxu0 %v947
        %1381 = vmatpush2.bf16.msra.mxu0 %v946
        %1382 = vmatprep.subr.bf16.mxu0 %v943
        %1383 = vmatpush2.bf16.msra.mxu0 %v942
        %1384 = vmatprep.subr.bf16.mxu0 %v939
        %1385 = vmatpush2.bf16.msra.mxu0 %v938
        %1386 = vmatprep.subr.bf16.mxu0 %v935
        %1387 = vmatpush2.bf16.msra.mxu0 %v934
        %1388 = vmatprep.subr.bf16.mxu0 %v931
        %1389 = vmatpush2.bf16.msra.mxu0 %v930
        %1390 = vmatprep.mubr.bf16.mxu0 %v457
        %1391 = vmatmul.mubr.bf16.gmra.mxu0 %v456
        %v1392 = vpop.f32.mrf.mxu0
        %v1393 = vadd.f32 0.0, %v1392
        %v1394 = vpop.f32.mrf.mxu0
        %v1395 = vadd.f32 0.0, %v1394
        %v1396 = vpop.f32.mrf.mxu0
        %v1397 = vadd.f32 0.0, %v1396
        %v1398 = vpop.f32.mrf.mxu0
        %v1399 = vadd.f32 0.0, %v1398
        %1400 = vmatprep.mubr.bf16.mxu0 %v461
        %1401 = vmatmul.mubr.bf16.gmra.mxu0 %v460
        %v1402 = vpop.f32.mrf.mxu0
        %v1403 = vadd.f32 0.0, %v1402
        %v1404 = vpop.f32.mrf.mxu0
        %v1405 = vadd.f32 0.0, %v1404
        %v1406 = vpop.f32.mrf.mxu0
        %v1407 = vadd.f32 0.0, %v1406
        %v1408 = vpop.f32.mrf.mxu0
        %v1409 = vadd.f32 0.0, %v1408
        %1410 = vmatprep.mubr.bf16.mxu0 %v465
        %1411 = vmatmul.mubr.bf16.gmra.mxu0 %v464
        %v1412 = vpop.f32.mrf.mxu0
        %v1413 = vadd.f32 0.0, %v1412
        %v1414 = vpop.f32.mrf.mxu0
        %v1415 = vadd.f32 0.0, %v1414
        %v1416 = vpop.f32.mrf.mxu0
        %v1417 = vadd.f32 0.0, %v1416
        %v1418 = vpop.f32.mrf.mxu0
        %v1419 = vadd.f32 0.0, %v1418
        %1420 = vmatprep.mubr.bf16.mxu0 %v469
        %1421 = vmatmul.mubr.bf16.gmra.mxu0 %v468
        %v1422 = vpop.f32.mrf.mxu0
        %v1423 = vadd.f32 0.0, %v1422
        %v1424 = vpop.f32.mrf.mxu0
        %v1425 = vadd.f32 0.0, %v1424
        %v1426 = vpop.f32.mrf.mxu0
        %v1427 = vadd.f32 0.0, %v1426
        %v1428 = vpop.f32.mrf.mxu0
        %v1429 = vadd.f32 0.0, %v1428
        %1430 = vmatprep.mubr.bf16.mxu0 %v473
        %1431 = vmatmul.mubr.bf16.gmra.mxu0 %v472
        %v1432 = vpop.f32.mrf.mxu0
        %v1433 = vadd.f32 0.0, %v1432
        %v1434 = vpop.f32.mrf.mxu0
        %v1435 = vadd.f32 0.0, %v1434
        %v1436 = vpop.f32.mrf.mxu0
        %v1437 = vadd.f32 0.0, %v1436
        %v1438 = vpop.f32.mrf.mxu0
        %v1439 = vadd.f32 0.0, %v1438
        %1440 = vmatprep.mubr.bf16.mxu0 %v477
        %1441 = vmatmul.mubr.bf16.gmra.mxu0 %v476
        %v1442 = vpop.f32.mrf.mxu0
        %v1443 = vadd.f32 0.0, %v1442
        %v1444 = vpop.f32.mrf.mxu0
        %v1445 = vadd.f32 0.0, %v1444
        %v1446 = vpop.f32.mrf.mxu0
        %v1447 = vadd.f32 0.0, %v1446
        %v1448 = vpop.f32.mrf.mxu0
        %v1449 = vadd.f32 0.0, %v1448
        %1450 = vmatprep.mubr.bf16.mxu0 %v481
        %1451 = vmatmul.mubr.bf16.gmra.mxu0 %v480
        %v1452 = vpop.f32.mrf.mxu0
        %v1453 = vadd.f32 0.0, %v1452
        %v1454 = vpop.f32.mrf.mxu0
        %v1455 = vadd.f32 0.0, %v1454
        %v1456 = vpop.f32.mrf.mxu0
        %v1457 = vadd.f32 0.0, %v1456
        %v1458 = vpop.f32.mrf.mxu0
        %v1459 = vadd.f32 0.0, %v1458
        %1460 = vdwg.mxu0
        %1461 = vmatprep.subr.bf16.mxu0 %v991
        %1462 = vmatpush1.bf16.msra.mxu0 %v990
        %1463 = vmatprep.subr.bf16.mxu0 %v987
        %1464 = vmatpush1.bf16.msra.mxu0 %v986
        %1465 = vmatprep.subr.bf16.mxu0 %v983
        %1466 = vmatpush1.bf16.msra.mxu0 %v982
        %1467 = vmatprep.subr.bf16.mxu0 %v979
        %1468 = vmatpush1.bf16.msra.mxu0 %v978
        %1469 = vmatprep.subr.bf16.mxu0 %v975
        %1470 = vmatpush1.bf16.msra.mxu0 %v974
        %1471 = vmatprep.subr.bf16.mxu0 %v971
        %1472 = vmatpush1.bf16.msra.mxu0 %v970
        %1473 = vmatprep.subr.bf16.mxu0 %v967
        %1474 = vmatpush1.bf16.msra.mxu0 %v966
        %1475 = vmatprep.subr.bf16.mxu0 %v963
        %1476 = vmatpush1.bf16.msra.mxu0 %v962
        %1477 = vmatprep.subr.bf16.mxu0 %v1023
        %1478 = vmatpush2.bf16.msra.mxu0 %v1022
        %1479 = vmatprep.subr.bf16.mxu0 %v1019
        %1480 = vmatpush2.bf16.msra.mxu0 %v1018
        %1481 = vmatprep.subr.bf16.mxu0 %v1015
        %1482 = vmatpush2.bf16.msra.mxu0 %v1014
        %1483 = vmatprep.subr.bf16.mxu0 %v1011
        %1484 = vmatpush2.bf16.msra.mxu0 %v1010
        %1485 = vmatprep.subr.bf16.mxu0 %v1007
        %1486 = vmatpush2.bf16.msra.mxu0 %v1006
        %1487 = vmatprep.subr.bf16.mxu0 %v1003
        %1488 = vmatpush2.bf16.msra.mxu0 %v1002
        %1489 = vmatprep.subr.bf16.mxu0 %v999
        %1490 = vmatpush2.bf16.msra.mxu0 %v998
        %1491 = vmatprep.subr.bf16.mxu0 %v995
        %1492 = vmatpush2.bf16.msra.mxu0 %v994
        %1493 = vmatprep.mubr.bf16.mxu0 %v459
        %1494 = vmatmul.mubr.bf16.gmra.mxu0 %v458
        %v1495 = vpop.f32.mrf.mxu0
        %v1496 = vadd.f32 %v1393, %v1495
        %v1497 = vpop.f32.mrf.mxu0
        %v1498 = vadd.f32 %v1395, %v1497
        %v1499 = vpop.f32.mrf.mxu0
        %v1500 = vadd.f32 %v1397, %v1499
        %v1501 = vpop.f32.mrf.mxu0
        %v1502 = vadd.f32 %v1399, %v1501
        %1503 = vmatprep.mubr.bf16.mxu0 %v463
        %1504 = vmatmul.mubr.bf16.gmra.mxu0 %v462
        %v1505 = vpop.f32.mrf.mxu0
        %v1506 = vadd.f32 %v1403, %v1505
        %v1507 = vpop.f32.mrf.mxu0
        %v1508 = vadd.f32 %v1405, %v1507
        %v1509 = vpop.f32.mrf.mxu0
        %v1510 = vadd.f32 %v1407, %v1509
        %v1511 = vpop.f32.mrf.mxu0
        %v1512 = vadd.f32 %v1409, %v1511
        %1513 = vmatprep.mubr.bf16.mxu0 %v467
        %1514 = vmatmul.mubr.bf16.gmra.mxu0 %v466
        %v1515 = vpop.f32.mrf.mxu0
        %v1516 = vadd.f32 %v1413, %v1515
        %v1517 = vpop.f32.mrf.mxu0
        %v1518 = vadd.f32 %v1415, %v1517
        %v1519 = vpop.f32.mrf.mxu0
        %v1520 = vadd.f32 %v1417, %v1519
        %v1521 = vpop.f32.mrf.mxu0
        %v1522 = vadd.f32 %v1419, %v1521
        %1523 = vmatprep.mubr.bf16.mxu0 %v471
        %1524 = vmatmul.mubr.bf16.gmra.mxu0 %v470
        %v1525 = vpop.f32.mrf.mxu0
        %v1526 = vadd.f32 %v1423, %v1525
        %v1527 = vpop.f32.mrf.mxu0
        %v1528 = vadd.f32 %v1425, %v1527
        %v1529 = vpop.f32.mrf.mxu0
        %v1530 = vadd.f32 %v1427, %v1529
        %v1531 = vpop.f32.mrf.mxu0
        %v1532 = vadd.f32 %v1429, %v1531
        %1533 = vmatprep.mubr.bf16.mxu0 %v475
        %1534 = vmatmul.mubr.bf16.gmra.mxu0 %v474
        %v1535 = vpop.f32.mrf.mxu0
        %v1536 = vadd.f32 %v1433, %v1535
        %v1537 = vpop.f32.mrf.mxu0
        %v1538 = vadd.f32 %v1435, %v1537
        %v1539 = vpop.f32.mrf.mxu0
        %v1540 = vadd.f32 %v1437, %v1539
        %v1541 = vpop.f32.mrf.mxu0
        %v1542 = vadd.f32 %v1439, %v1541
        %1543 = vmatprep.mubr.bf16.mxu0 %v479
        %1544 = vmatmul.mubr.bf16.gmra.mxu0 %v478
        %v1545 = vpop.f32.mrf.mxu0
        %v1546 = vadd.f32 %v1443, %v1545
        %v1547 = vpop.f32.mrf.mxu0
        %v1548 = vadd.f32 %v1445, %v1547
        %v1549 = vpop.f32.mrf.mxu0
        %v1550 = vadd.f32 %v1447, %v1549
        %v1551 = vpop.f32.mrf.mxu0
        %v1552 = vadd.f32 %v1449, %v1551
        %1553 = vmatprep.mubr.bf16.mxu0 %v483
        %1554 = vmatmul.mubr.bf16.gmra.mxu0 %v482
        %v1555 = vpop.f32.mrf.mxu0
        %v1556 = vadd.f32 %v1453, %v1555
        %v1557 = vpop.f32.mrf.mxu0
        %v1558 = vadd.f32 %v1455, %v1557
        %v1559 = vpop.f32.mrf.mxu0
        %v1560 = vadd.f32 %v1457, %v1559
        %v1561 = vpop.f32.mrf.mxu0
        %v1562 = vadd.f32 %v1459, %v1561
        %1563 = vdwg.mxu0
        %1564 = vst [vmem:[#allocation2] sm:$0xff] %v1290
        %1565 = vst [vmem:[#allocation2 + $0x8] sm:$0xff] %v1292
        %1566 = vst [vmem:[#allocation2 + $0x10] sm:$0xff] %v1496
        %1567 = vst [vmem:[#allocation2 + $0x18] sm:$0xff] %v1498
        %1568 = vst [vmem:[#allocation2 + $0x20] sm:$0xff] %v1294
        %1569 = vst [vmem:[#allocation2 + $0x28] sm:$0xff] %v1296
        %1570 = vst [vmem:[#allocation2 + $0x30] sm:$0xff] %v1500
        %1571 = vst [vmem:[#allocation2 + $0x38] sm:$0xff] %v1502
        %1572 = vst [vmem:[#allocation2 + $0x40] sm:$0xff] %v1300
        %1573 = vst [vmem:[#allocation2 + $0x48] sm:$0xff] %v1302
        %1574 = vst [vmem:[#allocation2 + $0x50] sm:$0xff] %v1506
        %1575 = vst [vmem:[#allocation2 + $0x58] sm:$0xff] %v1508
        %1576 = vst [vmem:[#allocation2 + $0x60] sm:$0xff] %v1304
        %1577 = vst [vmem:[#allocation2 + $0x68] sm:$0xff] %v1306
        %1578 = vst [vmem:[#allocation2 + $0x70] sm:$0xff] %v1510
        %1579 = vst [vmem:[#allocation2 + $0x78] sm:$0xff] %v1512
        %1580 = vst [vmem:[#allocation2 + $0x80] sm:$0xff] %v1310
        %1581 = vst [vmem:[#allocation2 + $0x88] sm:$0xff] %v1312
        %1582 = vst [vmem:[#allocation2 + $0x90] sm:$0xff] %v1516
        %1583 = vst [vmem:[#allocation2 + $0x98] sm:$0xff] %v1518
        %1584 = vst [vmem:[#allocation2 + $0xa0] sm:$0xff] %v1314
        %1585 = vst [vmem:[#allocation2 + $0xa8] sm:$0xff] %v1316
        %1586 = vst [vmem:[#allocation2 + $0xb0] sm:$0xff] %v1520
        %1587 = vst [vmem:[#allocation2 + $0xb8] sm:$0xff] %v1522
        %1588 = vst [vmem:[#allocation2 + $0xc0] sm:$0xff] %v1320
        %1589 = vst [vmem:[#allocation2 + $0xc8] sm:$0xff] %v1322
        %1590 = vst [vmem:[#allocation2 + $0xd0] sm:$0xff] %v1526
        %1591 = vst [vmem:[#allocation2 + $0xd8] sm:$0xff] %v1528
        %1592 = vst [vmem:[#allocation2 + $0xe0] sm:$0xff] %v1324
        %1593 = vst [vmem:[#allocation2 + $0xe8] sm:$0xff] %v1326
        %1594 = vst [vmem:[#allocation2 + $0xf0] sm:$0xff] %v1530
        %1595 = vst [vmem:[#allocation2 + $0xf8] sm:$0xff] %v1532
        %1596 = vst [vmem:[#allocation2 + $0x100] sm:$0xff] %v1330
        %1597 = vst [vmem:[#allocation2 + $0x108] sm:$0xff] %v1332
        %1598 = vst [vmem:[#allocation2 + $0x110] sm:$0xff] %v1536
        %1599 = vst [vmem:[#allocation2 + $0x118] sm:$0xff] %v1538
        %1600 = vst [vmem:[#allocation2 + $0x120] sm:$0xff] %v1334
        %1601 = vst [vmem:[#allocation2 + $0x128] sm:$0xff] %v1336
        %1602 = vst [vmem:[#allocation2 + $0x130] sm:$0xff] %v1540
        %1603 = vst [vmem:[#allocation2 + $0x138] sm:$0xff] %v1542
        %1604 = vst [vmem:[#allocation2 + $0x140] sm:$0xff] %v1340
        %1605 = vst [vmem:[#allocation2 + $0x148] sm:$0xff] %v1342
        %1606 = vst [vmem:[#allocation2 + $0x150] sm:$0xff] %v1546
        %1607 = vst [vmem:[#allocation2 + $0x158] sm:$0xff] %v1548
        %1608 = vst [vmem:[#allocation2 + $0x160] sm:$0xff] %v1344
        %1609 = vst [vmem:[#allocation2 + $0x168] sm:$0xff] %v1346
        %1610 = vst [vmem:[#allocation2 + $0x170] sm:$0xff] %v1550
        %1611 = vst [vmem:[#allocation2 + $0x178] sm:$0xff] %v1552
        %1612 = vst [vmem:[#allocation2 + $0x180] sm:$0xff] %v1350
        %1613 = vst [vmem:[#allocation2 + $0x188] sm:$0xff] %v1352
        %1614 = vst [vmem:[#allocation2 + $0x190] sm:$0xff] %v1556
        %1615 = vst [vmem:[#allocation2 + $0x198] sm:$0xff] %v1558
        %1616 = vst [vmem:[#allocation2 + $0x1a0] sm:$0xff] %v1354
        %1617 = vst [vmem:[#allocation2 + $0x1a8] sm:$0xff] %v1356
        %1618 = vst [vmem:[#allocation2 + $0x1b0] sm:$0xff] %v1560
        %1619 = vst [vmem:[#allocation2 + $0x1b8] sm:$0xff] %v1562
        %v1620 = vld [vmem:[#allocation2 + $0x40] sm:$0xff]
        %v1621 = vld [vmem:[#allocation2 + $0x48] sm:$0xff]
        %v1622 = vld [vmem:[#allocation2 + $0x50] sm:$0xff]
        %v1623 = vld [vmem:[#allocation2 + $0x58] sm:$0xff]
        %v1624 = vld [vmem:[#allocation2 + $0x60] sm:$0xff]
        %v1625 = vld [vmem:[#allocation2 + $0x68] sm:$0xff]
        %v1626 = vld [vmem:[#allocation2 + $0x70] sm:$0xff]
        %v1627 = vld [vmem:[#allocation2 + $0x78] sm:$0xff]
        %v1628 = vld [vmem:[#allocation2 + $0x80] sm:$0xff]
        %v1629 = vld [vmem:[#allocation2 + $0x88] sm:$0xff]
        %v1630 = vld [vmem:[#allocation2 + $0x90] sm:$0xff]
        %v1631 = vld [vmem:[#allocation2 + $0x98] sm:$0xff]
        %v1632 = vld [vmem:[#allocation2 + $0xa0] sm:$0xff]
        %v1633 = vld [vmem:[#allocation2 + $0xa8] sm:$0xff]
        %v1634 = vld [vmem:[#allocation2 + $0xb0] sm:$0xff]
        %v1635 = vld [vmem:[#allocation2 + $0xb8] sm:$0xff]
        %v1636 = vld [vmem:[#allocation2 + $0xc0] sm:$0xff]
        %v1637 = vld [vmem:[#allocation2 + $0xc8] sm:$0xff]
        %v1638 = vld [vmem:[#allocation2 + $0xd0] sm:$0xff]
        %v1639 = vld [vmem:[#allocation2 + $0xd8] sm:$0xff]
        %v1640 = vld [vmem:[#allocation2 + $0xe0] sm:$0xff]
        %v1641 = vld [vmem:[#allocation2 + $0xe8] sm:$0xff]
        %v1642 = vld [vmem:[#allocation2 + $0xf0] sm:$0xff]
        %v1643 = vld [vmem:[#allocation2 + $0xf8] sm:$0xff]
        %v1644 = vld [vmem:[#allocation2 + $0x100] sm:$0xff]
        %v1645 = vld [vmem:[#allocation2 + $0x108] sm:$0xff]
        %v1646 = vld [vmem:[#allocation2 + $0x110] sm:$0xff]
        %v1647 = vld [vmem:[#allocation2 + $0x118] sm:$0xff]
        %v1648 = vld [vmem:[#allocation2 + $0x120] sm:$0xff]
        %v1649 = vld [vmem:[#allocation2 + $0x128] sm:$0xff]
        %v1650 = vld [vmem:[#allocation2 + $0x130] sm:$0xff]
        %v1651 = vld [vmem:[#allocation2 + $0x138] sm:$0xff]
        %v1652 = vld [vmem:[#allocation2 + $0x140] sm:$0xff]
        %v1653 = vld [vmem:[#allocation2 + $0x148] sm:$0xff]
        %v1654 = vld [vmem:[#allocation2 + $0x150] sm:$0xff]
        %v1655 = vld [vmem:[#allocation2 + $0x158] sm:$0xff]
        %v1656 = vld [vmem:[#allocation2 + $0x160] sm:$0xff]
        %v1657 = vld [vmem:[#allocation2 + $0x168] sm:$0xff]
        %v1658 = vld [vmem:[#allocation2 + $0x170] sm:$0xff]
        %v1659 = vld [vmem:[#allocation2 + $0x178] sm:$0xff]
        %v1660 = vld [vmem:[#allocation2 + $0x180] sm:$0xff]
        %v1661 = vld [vmem:[#allocation2 + $0x188] sm:$0xff]
        %v1662 = vld [vmem:[#allocation2 + $0x190] sm:$0xff]
        %v1663 = vld [vmem:[#allocation2 + $0x198] sm:$0xff]
        %v1664 = vld [vmem:[#allocation2 + $0x1a0] sm:$0xff]
        %v1665 = vld [vmem:[#allocation2 + $0x1a8] sm:$0xff]
        %v1666 = vld [vmem:[#allocation2 + $0x1b0] sm:$0xff]
        %v1667 = vld [vmem:[#allocation2 + $0x1b8] sm:$0xff]
        %v1668 = vld [vmem:[%s195] sm:$0xff]
        %v1669 = vld [vmem:[%s195 + $0x8] sm:$0xff]
        %v1670 = vld [vmem:[%s195 + $0x10] sm:$0xff]
        %v1671 = vld [vmem:[%s195 + $0x18] sm:$0xff]
        %v1672 = vld [vmem:[%s195 + $0x20] sm:$0xff]
        %v1673 = vld [vmem:[%s195 + $0x28] sm:$0xff]
        %v1674 = vld [vmem:[%s195 + $0x30] sm:$0xff]
        %v1675 = vld [vmem:[%s195 + $0x38] sm:$0xff]
        %v1676 = vld [vmem:[%s195 + $0x40] sm:$0xff]
        %v1677 = vld [vmem:[%s195 + $0x48] sm:$0xff]
        %v1678 = vld [vmem:[%s195 + $0x50] sm:$0xff]
        %v1679 = vld [vmem:[%s195 + $0x58] sm:$0xff]
        %v1680 = vld [vmem:[%s195 + $0x60] sm:$0xff]
        %v1681 = vld [vmem:[%s195 + $0x68] sm:$0xff]
        %v1682 = vld [vmem:[%s195 + $0x70] sm:$0xff]
        %v1683 = vld [vmem:[%s195 + $0x78] sm:$0xff]
        %v1684 = vld [vmem:[%s195 + $0x80] sm:$0xff]
        %v1685 = vld [vmem:[%s195 + $0x88] sm:$0xff]
        %v1686 = vld [vmem:[%s195 + $0x90] sm:$0xff]
        %v1687 = vld [vmem:[%s195 + $0x98] sm:$0xff]
        %v1688 = vld [vmem:[%s195 + $0xa0] sm:$0xff]
        %v1689 = vld [vmem:[%s195 + $0xa8] sm:$0xff]
        %v1690 = vld [vmem:[%s195 + $0xb0] sm:$0xff]
        %v1691 = vld [vmem:[%s195 + $0xb8] sm:$0xff]
        %v1692 = vld [vmem:[%s1] sm:$0xff]
        %v1693 = vld [vmem:[%s1 + $0x8] sm:$0xff]
        %v1694 = vld [vmem:[%s1 + $0x10] sm:$0xff]
        %v1695 = vld [vmem:[%s1 + $0x18] sm:$0xff]
        %v1696 = vld [vmem:[%s1 + $0x20] sm:$0xff]
        %v1697 = vld [vmem:[%s1 + $0x28] sm:$0xff]
        %v1698 = vld [vmem:[%s1 + $0x30] sm:$0xff]
        %v1699 = vld [vmem:[%s1 + $0x38] sm:$0xff]
        %v1700 = vld [vmem:[%s1 + $0x40] sm:$0xff]
        %v1701 = vld [vmem:[%s1 + $0x48] sm:$0xff]
        %v1702 = vld [vmem:[%s1 + $0x50] sm:$0xff]
        %v1703 = vld [vmem:[%s1 + $0x58] sm:$0xff]
        %v1704 = vld [vmem:[%s1 + $0x60] sm:$0xff]
        %v1705 = vld [vmem:[%s1 + $0x68] sm:$0xff]
        %v1706 = vld [vmem:[%s1 + $0x70] sm:$0xff]
        %v1707 = vld [vmem:[%s1 + $0x78] sm:$0xff]
        %v1708 = vld [vmem:[%s1 + $0x80] sm:$0xff]
        %v1709 = vld [vmem:[%s1 + $0x88] sm:$0xff]
        %v1710 = vld [vmem:[%s1 + $0x90] sm:$0xff]
        %v1711 = vld [vmem:[%s1 + $0x98] sm:$0xff]
        %v1712 = vld [vmem:[%s1 + $0xa0] sm:$0xff]
        %v1713 = vld [vmem:[%s1 + $0xa8] sm:$0xff]
        %v1714 = vld [vmem:[%s1 + $0xb0] sm:$0xff]
        %v1715 = vld [vmem:[%s1 + $0xb8] sm:$0xff]
        %v1716 = vld [vmem:[%s1 + $0xc0] sm:$0xff]
        %v1717 = vld [vmem:[%s1 + $0xc8] sm:$0xff]
        %v1718 = vld [vmem:[%s1 + $0xd0] sm:$0xff]
        %v1719 = vld [vmem:[%s1 + $0xd8] sm:$0xff]
        %v1720 = vld [vmem:[%s1 + $0xe0] sm:$0xff]
        %v1721 = vld [vmem:[%s1 + $0xe8] sm:$0xff]
        %v1722 = vld [vmem:[%s1 + $0xf0] sm:$0xff]
        %v1723 = vld [vmem:[%s1 + $0xf8] sm:$0xff]
        %v1724 = vld [vmem:[%s1 + $0x100] sm:$0xff]
        %v1725 = vld [vmem:[%s1 + $0x108] sm:$0xff]
        %v1726 = vld [vmem:[%s1 + $0x110] sm:$0xff]
        %v1727 = vld [vmem:[%s1 + $0x118] sm:$0xff]
        %v1728 = vld [vmem:[%s1 + $0x120] sm:$0xff]
        %v1729 = vld [vmem:[%s1 + $0x128] sm:$0xff]
        %v1730 = vld [vmem:[%s1 + $0x130] sm:$0xff]
        %v1731 = vld [vmem:[%s1 + $0x138] sm:$0xff]
        %v1732 = vld [vmem:[%s1 + $0x140] sm:$0xff]
        %v1733 = vld [vmem:[%s1 + $0x148] sm:$0xff]
        %v1734 = vld [vmem:[%s1 + $0x150] sm:$0xff]
        %v1735 = vld [vmem:[%s1 + $0x158] sm:$0xff]
        %v1736 = vld [vmem:[%s1 + $0x160] sm:$0xff]
        %v1737 = vld [vmem:[%s1 + $0x168] sm:$0xff]
        %v1738 = vld [vmem:[%s1 + $0x170] sm:$0xff]
        %v1739 = vld [vmem:[%s1 + $0x178] sm:$0xff]
        %v1740 = vld [vmem:[%s1 + $0x180] sm:$0xff]
        %v1741 = vld [vmem:[%s1 + $0x188] sm:$0xff]
        %v1742 = vld [vmem:[%s1 + $0x190] sm:$0xff]
        %v1743 = vld [vmem:[%s1 + $0x198] sm:$0xff]
        %v1744 = vld [vmem:[%s1 + $0x1a0] sm:$0xff]
        %v1745 = vld [vmem:[%s1 + $0x1a8] sm:$0xff]
        %v1746 = vld [vmem:[%s1 + $0x1b0] sm:$0xff]
        %v1747 = vld [vmem:[%s1 + $0x1b8] sm:$0xff]
        %v1748 = vld [vmem:[%s1 + $0x1c0] sm:$0xff]
        %v1749 = vld [vmem:[%s1 + $0x1c8] sm:$0xff]
        %v1750 = vld [vmem:[%s1 + $0x1d0] sm:$0xff]
        %v1751 = vld [vmem:[%s1 + $0x1d8] sm:$0xff]
        %v1752 = vld [vmem:[%s1 + $0x1e0] sm:$0xff]
        %v1753 = vld [vmem:[%s1 + $0x1e8] sm:$0xff]
        %v1754 = vld [vmem:[%s1 + $0x1f0] sm:$0xff]
        %v1755 = vld [vmem:[%s1 + $0x1f8] sm:$0xff]
        %v1756 = vld [vmem:[%s1 + $0x200] sm:$0xff]
        %v1757 = vld [vmem:[%s1 + $0x208] sm:$0xff]
        %v1758 = vld [vmem:[%s1 + $0x210] sm:$0xff]
        %v1759 = vld [vmem:[%s1 + $0x218] sm:$0xff]
        %v1760 = vld [vmem:[%s1 + $0x220] sm:$0xff]
        %v1761 = vld [vmem:[%s1 + $0x228] sm:$0xff]
        %v1762 = vld [vmem:[%s1 + $0x230] sm:$0xff]
        %v1763 = vld [vmem:[%s1 + $0x238] sm:$0xff]
        %v1764 = vld [vmem:[%s1 + $0x240] sm:$0xff]
        %v1765 = vld [vmem:[%s1 + $0x248] sm:$0xff]
        %v1766 = vld [vmem:[%s1 + $0x250] sm:$0xff]
        %v1767 = vld [vmem:[%s1 + $0x258] sm:$0xff]
        %v1768 = vld [vmem:[%s1 + $0x260] sm:$0xff]
        %v1769 = vld [vmem:[%s1 + $0x268] sm:$0xff]
        %v1770 = vld [vmem:[%s1 + $0x270] sm:$0xff]
        %v1771 = vld [vmem:[%s1 + $0x278] sm:$0xff]
        %v1772 = vld [vmem:[%s1 + $0x280] sm:$0xff]
        %v1773 = vld [vmem:[%s1 + $0x288] sm:$0xff]
        %v1774 = vld [vmem:[%s1 + $0x290] sm:$0xff]
        %v1775 = vld [vmem:[%s1 + $0x298] sm:$0xff]
        %v1776 = vld [vmem:[%s1 + $0x2a0] sm:$0xff]
        %v1777 = vld [vmem:[%s1 + $0x2a8] sm:$0xff]
        %v1778 = vld [vmem:[%s1 + $0x2b0] sm:$0xff]
        %v1779 = vld [vmem:[%s1 + $0x2b8] sm:$0xff]
        %v1780 = vld [vmem:[%s1 + $0x2c0] sm:$0xff]
        %v1781 = vld [vmem:[%s1 + $0x2c8] sm:$0xff]
        %v1782 = vld [vmem:[%s1 + $0x2d0] sm:$0xff]
        %v1783 = vld [vmem:[%s1 + $0x2d8] sm:$0xff]
        %v1784 = vld [vmem:[%s1 + $0x2e0] sm:$0xff]
        %v1785 = vld [vmem:[%s1 + $0x2e8] sm:$0xff]
        %v1786 = vld [vmem:[%s1 + $0x2f0] sm:$0xff]
        %v1787 = vld [vmem:[%s1 + $0x2f8] sm:$0xff]
        %v1788 = vld [vmem:[%s1 + $0x300] sm:$0xff]
        %v1789 = vld [vmem:[%s1 + $0x308] sm:$0xff]
        %v1790 = vld [vmem:[%s1 + $0x310] sm:$0xff]
        %v1791 = vld [vmem:[%s1 + $0x318] sm:$0xff]
        %v1792 = vld [vmem:[%s1 + $0x320] sm:$0xff]
        %v1793 = vld [vmem:[%s1 + $0x328] sm:$0xff]
        %v1794 = vld [vmem:[%s1 + $0x330] sm:$0xff]
        %v1795 = vld [vmem:[%s1 + $0x338] sm:$0xff]
        %v1796 = vld [vmem:[%s1 + $0x340] sm:$0xff]
        %v1797 = vld [vmem:[%s1 + $0x348] sm:$0xff]
        %v1798 = vld [vmem:[%s1 + $0x350] sm:$0xff]
        %v1799 = vld [vmem:[%s1 + $0x358] sm:$0xff]
        %v1800 = vld [vmem:[%s1 + $0x360] sm:$0xff]
        %v1801 = vld [vmem:[%s1 + $0x368] sm:$0xff]
        %v1802 = vld [vmem:[%s1 + $0x370] sm:$0xff]
        %v1803 = vld [vmem:[%s1 + $0x378] sm:$0xff]
        %v1804 = vld [vmem:[%s1 + $0x380] sm:$0xff]
        %v1805 = vld [vmem:[%s1 + $0x388] sm:$0xff]
        %v1806 = vld [vmem:[%s1 + $0x390] sm:$0xff]
        %v1807 = vld [vmem:[%s1 + $0x398] sm:$0xff]
        %v1808 = vld [vmem:[%s1 + $0x3a0] sm:$0xff]
        %v1809 = vld [vmem:[%s1 + $0x3a8] sm:$0xff]
        %v1810 = vld [vmem:[%s1 + $0x3b0] sm:$0xff]
        %v1811 = vld [vmem:[%s1 + $0x3b8] sm:$0xff]
        %v1812 = vld [vmem:[%s1 + $0x3c0] sm:$0xff]
        %v1813 = vld [vmem:[%s1 + $0x3c8] sm:$0xff]
        %v1814 = vld [vmem:[%s1 + $0x3d0] sm:$0xff]
        %v1815 = vld [vmem:[%s1 + $0x3d8] sm:$0xff]
        %v1816 = vld [vmem:[%s1 + $0x3e0] sm:$0xff]
        %v1817 = vld [vmem:[%s1 + $0x3e8] sm:$0xff]
        %v1818 = vld [vmem:[%s1 + $0x3f0] sm:$0xff]
        %v1819 = vld [vmem:[%s1 + $0x3f8] sm:$0xff]
        %v1844 = vunpack.c.l.b16 %v1668
        %v1845 = vunpack.c.h.b16 %v1668
        %v1846 = vunpack.c.l.b16 %v1669
        %v1847 = vunpack.c.h.b16 %v1669
        %v1848 = vunpack.c.l.b16 %v1670
        %v1849 = vunpack.c.h.b16 %v1670
        %v1850 = vunpack.c.l.b16 %v1671
        %v1851 = vunpack.c.h.b16 %v1671
        %v1852 = vunpack.c.l.b16 %v1672
        %v1853 = vunpack.c.h.b16 %v1672
        %v1854 = vunpack.c.l.b16 %v1673
        %v1855 = vunpack.c.h.b16 %v1673
        %v1856 = vunpack.c.l.b16 %v1674
        %v1857 = vunpack.c.h.b16 %v1674
        %v1858 = vunpack.c.l.b16 %v1675
        %v1859 = vunpack.c.h.b16 %v1675
        %v1860 = vunpack.c.l.b16 %v1676
        %v1861 = vunpack.c.h.b16 %v1676
        %v1862 = vunpack.c.l.b16 %v1677
        %v1863 = vunpack.c.h.b16 %v1677
        %v1864 = vunpack.c.l.b16 %v1678
        %v1865 = vunpack.c.h.b16 %v1678
        %v1866 = vunpack.c.l.b16 %v1679
        %v1867 = vunpack.c.h.b16 %v1679
        %v1868 = vunpack.c.l.b16 %v1680
        %v1869 = vunpack.c.h.b16 %v1680
        %v1870 = vunpack.c.l.b16 %v1681
        %v1871 = vunpack.c.h.b16 %v1681
        %v1872 = vunpack.c.l.b16 %v1682
        %v1873 = vunpack.c.h.b16 %v1682
        %v1874 = vunpack.c.l.b16 %v1683
        %v1875 = vunpack.c.h.b16 %v1683
        %v1876 = vunpack.c.l.b16 %v1684
        %v1877 = vunpack.c.h.b16 %v1684
        %v1878 = vunpack.c.l.b16 %v1685
        %v1879 = vunpack.c.h.b16 %v1685
        %v1880 = vunpack.c.l.b16 %v1686
        %v1881 = vunpack.c.h.b16 %v1686
        %v1882 = vunpack.c.l.b16 %v1687
        %v1883 = vunpack.c.h.b16 %v1687
        %v1884 = vunpack.c.l.b16 %v1688
        %v1885 = vunpack.c.h.b16 %v1688
        %v1886 = vunpack.c.l.b16 %v1689
        %v1887 = vunpack.c.h.b16 %v1689
        %v1888 = vunpack.c.l.b16 %v1690
        %v1889 = vunpack.c.h.b16 %v1690
        %v1890 = vunpack.c.l.b16 %v1691
        %v1891 = vunpack.c.h.b16 %v1691
        %v1892 = vpack.c.b16 %v1848, %v1844
        %v1893 = vpack.c.b16 %v1849, %v1845
        %v1894 = vpack.c.b16 %v1850, %v1846
        %v1895 = vpack.c.b16 %v1851, %v1847
        %v1896 = vpack.c.b16 %v1856, %v1852
        %v1897 = vpack.c.b16 %v1857, %v1853
        %v1898 = vpack.c.b16 %v1858, %v1854
        %v1899 = vpack.c.b16 %v1859, %v1855
        %v1900 = vpack.c.b16 %v1864, %v1860
        %v1901 = vpack.c.b16 %v1865, %v1861
        %v1902 = vpack.c.b16 %v1866, %v1862
        %v1903 = vpack.c.b16 %v1867, %v1863
        %v1904 = vpack.c.b16 %v1872, %v1868
        %v1905 = vpack.c.b16 %v1873, %v1869
        %v1906 = vpack.c.b16 %v1874, %v1870
        %v1907 = vpack.c.b16 %v1875, %v1871
        %v1908 = vpack.c.b16 %v1880, %v1876
        %v1909 = vpack.c.b16 %v1881, %v1877
        %v1910 = vpack.c.b16 %v1882, %v1878
        %v1911 = vpack.c.b16 %v1883, %v1879
        %v1912 = vpack.c.b16 %v1888, %v1884
        %v1913 = vpack.c.b16 %v1889, %v1885
        %v1914 = vpack.c.b16 %v1890, %v1886
        %v1915 = vpack.c.b16 %v1891, %v1887
        %v2068 = vunpack.c.l.b16 %v1692
        %v2069 = vunpack.c.h.b16 %v1692
        %v2070 = vunpack.c.l.b16 %v1693
        %v2071 = vunpack.c.h.b16 %v1693
        %v2072 = vunpack.c.l.b16 %v1694
        %v2073 = vunpack.c.h.b16 %v1694
        %v2074 = vunpack.c.l.b16 %v1695
        %v2075 = vunpack.c.h.b16 %v1695
        %v2076 = vunpack.c.l.b16 %v1696
        %v2077 = vunpack.c.h.b16 %v1696
        %v2078 = vunpack.c.l.b16 %v1697
        %v2079 = vunpack.c.h.b16 %v1697
        %v2080 = vunpack.c.l.b16 %v1698
        %v2081 = vunpack.c.h.b16 %v1698
        %v2082 = vunpack.c.l.b16 %v1699
        %v2083 = vunpack.c.h.b16 %v1699
        %v2084 = vunpack.c.l.b16 %v1700
        %v2085 = vunpack.c.h.b16 %v1700
        %v2086 = vunpack.c.l.b16 %v1701
        %v2087 = vunpack.c.h.b16 %v1701
        %v2088 = vunpack.c.l.b16 %v1702
        %v2089 = vunpack.c.h.b16 %v1702
        %v2090 = vunpack.c.l.b16 %v1703
        %v2091 = vunpack.c.h.b16 %v1703
        %v2092 = vunpack.c.l.b16 %v1704
        %v2093 = vunpack.c.h.b16 %v1704
        %v2094 = vunpack.c.l.b16 %v1705
        %v2095 = vunpack.c.h.b16 %v1705
        %v2096 = vunpack.c.l.b16 %v1706
        %v2097 = vunpack.c.h.b16 %v1706
        %v2098 = vunpack.c.l.b16 %v1707
        %v2099 = vunpack.c.h.b16 %v1707
        %v2100 = vunpack.c.l.b16 %v1708
        %v2101 = vunpack.c.h.b16 %v1708
        %v2102 = vunpack.c.l.b16 %v1709
        %v2103 = vunpack.c.h.b16 %v1709
        %v2104 = vunpack.c.l.b16 %v1710
        %v2105 = vunpack.c.h.b16 %v1710
        %v2106 = vunpack.c.l.b16 %v1711
        %v2107 = vunpack.c.h.b16 %v1711
        %v2108 = vunpack.c.l.b16 %v1712
        %v2109 = vunpack.c.h.b16 %v1712
        %v2110 = vunpack.c.l.b16 %v1713
        %v2111 = vunpack.c.h.b16 %v1713
        %v2112 = vunpack.c.l.b16 %v1714
        %v2113 = vunpack.c.h.b16 %v1714
        %v2114 = vunpack.c.l.b16 %v1715
        %v2115 = vunpack.c.h.b16 %v1715
        %v2116 = vunpack.c.l.b16 %v1716
        %v2117 = vunpack.c.h.b16 %v1716
        %v2118 = vunpack.c.l.b16 %v1717
        %v2119 = vunpack.c.h.b16 %v1717
        %v2120 = vunpack.c.l.b16 %v1718
        %v2121 = vunpack.c.h.b16 %v1718
        %v2122 = vunpack.c.l.b16 %v1719
        %v2123 = vunpack.c.h.b16 %v1719
        %v2124 = vunpack.c.l.b16 %v1720
        %v2125 = vunpack.c.h.b16 %v1720
        %v2126 = vunpack.c.l.b16 %v1721
        %v2127 = vunpack.c.h.b16 %v1721
        %v2128 = vunpack.c.l.b16 %v1722
        %v2129 = vunpack.c.h.b16 %v1722
        %v2130 = vunpack.c.l.b16 %v1723
        %v2131 = vunpack.c.h.b16 %v1723
        %v2132 = vunpack.c.l.b16 %v1724
        %v2133 = vunpack.c.h.b16 %v1724
        %v2134 = vunpack.c.l.b16 %v1725
        %v2135 = vunpack.c.h.b16 %v1725
        %v2136 = vunpack.c.l.b16 %v1726
        %v2137 = vunpack.c.h.b16 %v1726
        %v2138 = vunpack.c.l.b16 %v1727
        %v2139 = vunpack.c.h.b16 %v1727
        %v2140 = vunpack.c.l.b16 %v1728
        %v2141 = vunpack.c.h.b16 %v1728
        %v2142 = vunpack.c.l.b16 %v1729
        %v2143 = vunpack.c.h.b16 %v1729
        %v2144 = vunpack.c.l.b16 %v1730
        %v2145 = vunpack.c.h.b16 %v1730
        %v2146 = vunpack.c.l.b16 %v1731
        %v2147 = vunpack.c.h.b16 %v1731
        %v2148 = vunpack.c.l.b16 %v1732
        %v2149 = vunpack.c.h.b16 %v1732
        %v2150 = vunpack.c.l.b16 %v1733
        %v2151 = vunpack.c.h.b16 %v1733
        %v2152 = vunpack.c.l.b16 %v1734
        %v2153 = vunpack.c.h.b16 %v1734
        %v2154 = vunpack.c.l.b16 %v1735
        %v2155 = vunpack.c.h.b16 %v1735
        %v2156 = vunpack.c.l.b16 %v1736
        %v2157 = vunpack.c.h.b16 %v1736
        %v2158 = vunpack.c.l.b16 %v1737
        %v2159 = vunpack.c.h.b16 %v1737
        %v2160 = vunpack.c.l.b16 %v1738
        %v2161 = vunpack.c.h.b16 %v1738
        %v2162 = vunpack.c.l.b16 %v1739
        %v2163 = vunpack.c.h.b16 %v1739
        %v2164 = vunpack.c.l.b16 %v1740
        %v2165 = vunpack.c.h.b16 %v1740
        %v2166 = vunpack.c.l.b16 %v1741
        %v2167 = vunpack.c.h.b16 %v1741
        %v2168 = vunpack.c.l.b16 %v1742
        %v2169 = vunpack.c.h.b16 %v1742
        %v2170 = vunpack.c.l.b16 %v1743
        %v2171 = vunpack.c.h.b16 %v1743
        %v2172 = vunpack.c.l.b16 %v1744
        %v2173 = vunpack.c.h.b16 %v1744
        %v2174 = vunpack.c.l.b16 %v1745
        %v2175 = vunpack.c.h.b16 %v1745
        %v2176 = vunpack.c.l.b16 %v1746
        %v2177 = vunpack.c.h.b16 %v1746
        %v2178 = vunpack.c.l.b16 %v1747
        %v2179 = vunpack.c.h.b16 %v1747
        %v2180 = vunpack.c.l.b16 %v1748
        %v2181 = vunpack.c.h.b16 %v1748
        %v2182 = vunpack.c.l.b16 %v1749
        %v2183 = vunpack.c.h.b16 %v1749
        %v2184 = vunpack.c.l.b16 %v1750
        %v2185 = vunpack.c.h.b16 %v1750
        %v2186 = vunpack.c.l.b16 %v1751
        %v2187 = vunpack.c.h.b16 %v1751
        %v2188 = vunpack.c.l.b16 %v1752
        %v2189 = vunpack.c.h.b16 %v1752
        %v2190 = vunpack.c.l.b16 %v1753
        %v2191 = vunpack.c.h.b16 %v1753
        %v2192 = vunpack.c.l.b16 %v1754
        %v2193 = vunpack.c.h.b16 %v1754
        %v2194 = vunpack.c.l.b16 %v1755
        %v2195 = vunpack.c.h.b16 %v1755
        %v2196 = vunpack.c.l.b16 %v1756
        %v2197 = vunpack.c.h.b16 %v1756
        %v2198 = vunpack.c.l.b16 %v1757
        %v2199 = vunpack.c.h.b16 %v1757
        %v2200 = vunpack.c.l.b16 %v1758
        %v2201 = vunpack.c.h.b16 %v1758
        %v2202 = vunpack.c.l.b16 %v1759
        %v2203 = vunpack.c.h.b16 %v1759
        %v2204 = vunpack.c.l.b16 %v1760
        %v2205 = vunpack.c.h.b16 %v1760
        %v2206 = vunpack.c.l.b16 %v1761
        %v2207 = vunpack.c.h.b16 %v1761
        %v2208 = vunpack.c.l.b16 %v1762
        %v2209 = vunpack.c.h.b16 %v1762
        %v2210 = vunpack.c.l.b16 %v1763
        %v2211 = vunpack.c.h.b16 %v1763
        %v2212 = vunpack.c.l.b16 %v1764
        %v2213 = vunpack.c.h.b16 %v1764
        %v2214 = vunpack.c.l.b16 %v1765
        %v2215 = vunpack.c.h.b16 %v1765
        %v2216 = vunpack.c.l.b16 %v1766
        %v2217 = vunpack.c.h.b16 %v1766
        %v2218 = vunpack.c.l.b16 %v1767
        %v2219 = vunpack.c.h.b16 %v1767
        %v2220 = vunpack.c.l.b16 %v1768
        %v2221 = vunpack.c.h.b16 %v1768
        %v2222 = vunpack.c.l.b16 %v1769
        %v2223 = vunpack.c.h.b16 %v1769
        %v2224 = vunpack.c.l.b16 %v1770
        %v2225 = vunpack.c.h.b16 %v1770
        %v2226 = vunpack.c.l.b16 %v1771
        %v2227 = vunpack.c.h.b16 %v1771
        %v2228 = vunpack.c.l.b16 %v1772
        %v2229 = vunpack.c.h.b16 %v1772
        %v2230 = vunpack.c.l.b16 %v1773
        %v2231 = vunpack.c.h.b16 %v1773
        %v2232 = vunpack.c.l.b16 %v1774
        %v2233 = vunpack.c.h.b16 %v1774
        %v2234 = vunpack.c.l.b16 %v1775
        %v2235 = vunpack.c.h.b16 %v1775
        %v2236 = vunpack.c.l.b16 %v1776
        %v2237 = vunpack.c.h.b16 %v1776
        %v2238 = vunpack.c.l.b16 %v1777
        %v2239 = vunpack.c.h.b16 %v1777
        %v2240 = vunpack.c.l.b16 %v1778
        %v2241 = vunpack.c.h.b16 %v1778
        %v2242 = vunpack.c.l.b16 %v1779
        %v2243 = vunpack.c.h.b16 %v1779
        %v2244 = vunpack.c.l.b16 %v1780
        %v2245 = vunpack.c.h.b16 %v1780
        %v2246 = vunpack.c.l.b16 %v1781
        %v2247 = vunpack.c.h.b16 %v1781
        %v2248 = vunpack.c.l.b16 %v1782
        %v2249 = vunpack.c.h.b16 %v1782
        %v2250 = vunpack.c.l.b16 %v1783
        %v2251 = vunpack.c.h.b16 %v1783
        %v2252 = vunpack.c.l.b16 %v1784
        %v2253 = vunpack.c.h.b16 %v1784
        %v2254 = vunpack.c.l.b16 %v1785
        %v2255 = vunpack.c.h.b16 %v1785
        %v2256 = vunpack.c.l.b16 %v1786
        %v2257 = vunpack.c.h.b16 %v1786
        %v2258 = vunpack.c.l.b16 %v1787
        %v2259 = vunpack.c.h.b16 %v1787
        %v2260 = vunpack.c.l.b16 %v1788
        %v2261 = vunpack.c.h.b16 %v1788
        %v2262 = vunpack.c.l.b16 %v1789
        %v2263 = vunpack.c.h.b16 %v1789
        %v2264 = vunpack.c.l.b16 %v1790
        %v2265 = vunpack.c.h.b16 %v1790
        %v2266 = vunpack.c.l.b16 %v1791
        %v2267 = vunpack.c.h.b16 %v1791
        %v2268 = vunpack.c.l.b16 %v1792
        %v2269 = vunpack.c.h.b16 %v1792
        %v2270 = vunpack.c.l.b16 %v1793
        %v2271 = vunpack.c.h.b16 %v1793
        %v2272 = vunpack.c.l.b16 %v1794
        %v2273 = vunpack.c.h.b16 %v1794
        %v2274 = vunpack.c.l.b16 %v1795
        %v2275 = vunpack.c.h.b16 %v1795
        %v2276 = vunpack.c.l.b16 %v1796
        %v2277 = vunpack.c.h.b16 %v1796
        %v2278 = vunpack.c.l.b16 %v1797
        %v2279 = vunpack.c.h.b16 %v1797
        %v2280 = vunpack.c.l.b16 %v1798
        %v2281 = vunpack.c.h.b16 %v1798
        %v2282 = vunpack.c.l.b16 %v1799
        %v2283 = vunpack.c.h.b16 %v1799
        %v2284 = vunpack.c.l.b16 %v1800
        %v2285 = vunpack.c.h.b16 %v1800
        %v2286 = vunpack.c.l.b16 %v1801
        %v2287 = vunpack.c.h.b16 %v1801
        %v2288 = vunpack.c.l.b16 %v1802
        %v2289 = vunpack.c.h.b16 %v1802
        %v2290 = vunpack.c.l.b16 %v1803
        %v2291 = vunpack.c.h.b16 %v1803
        %v2292 = vunpack.c.l.b16 %v1804
        %v2293 = vunpack.c.h.b16 %v1804
        %v2294 = vunpack.c.l.b16 %v1805
        %v2295 = vunpack.c.h.b16 %v1805
        %v2296 = vunpack.c.l.b16 %v1806
        %v2297 = vunpack.c.h.b16 %v1806
        %v2298 = vunpack.c.l.b16 %v1807
        %v2299 = vunpack.c.h.b16 %v1807
        %v2300 = vunpack.c.l.b16 %v1808
        %v2301 = vunpack.c.h.b16 %v1808
        %v2302 = vunpack.c.l.b16 %v1809
        %v2303 = vunpack.c.h.b16 %v1809
        %v2304 = vunpack.c.l.b16 %v1810
        %v2305 = vunpack.c.h.b16 %v1810
        %v2306 = vunpack.c.l.b16 %v1811
        %v2307 = vunpack.c.h.b16 %v1811
        %v2308 = vunpack.c.l.b16 %v1812
        %v2309 = vunpack.c.h.b16 %v1812
        %v2310 = vunpack.c.l.b16 %v1813
        %v2311 = vunpack.c.h.b16 %v1813
        %v2312 = vunpack.c.l.b16 %v1814
        %v2313 = vunpack.c.h.b16 %v1814
        %v2314 = vunpack.c.l.b16 %v1815
        %v2315 = vunpack.c.h.b16 %v1815
        %v2316 = vunpack.c.l.b16 %v1816
        %v2317 = vunpack.c.h.b16 %v1816
        %v2318 = vunpack.c.l.b16 %v1817
        %v2319 = vunpack.c.h.b16 %v1817
        %v2320 = vunpack.c.l.b16 %v1818
        %v2321 = vunpack.c.h.b16 %v1818
        %v2322 = vunpack.c.l.b16 %v1819
        %v2323 = vunpack.c.h.b16 %v1819
        %v2324 = vpack.c.b16 %v2072, %v2068
        %v2325 = vpack.c.b16 %v2073, %v2069
        %v2326 = vpack.c.b16 %v2074, %v2070
        %v2327 = vpack.c.b16 %v2075, %v2071
        %v2328 = vpack.c.b16 %v2080, %v2076
        %v2329 = vpack.c.b16 %v2081, %v2077
        %v2330 = vpack.c.b16 %v2082, %v2078
        %v2331 = vpack.c.b16 %v2083, %v2079
        %v2332 = vpack.c.b16 %v2088, %v2084
        %v2333 = vpack.c.b16 %v2089, %v2085
        %v2334 = vpack.c.b16 %v2090, %v2086
        %v2335 = vpack.c.b16 %v2091, %v2087
        %v2336 = vpack.c.b16 %v2096, %v2092
        %v2337 = vpack.c.b16 %v2097, %v2093
        %v2338 = vpack.c.b16 %v2098, %v2094
        %v2339 = vpack.c.b16 %v2099, %v2095
        %v2340 = vpack.c.b16 %v2104, %v2100
        %v2341 = vpack.c.b16 %v2105, %v2101
        %v2342 = vpack.c.b16 %v2106, %v2102
        %v2343 = vpack.c.b16 %v2107, %v2103
        %v2344 = vpack.c.b16 %v2112, %v2108
        %v2345 = vpack.c.b16 %v2113, %v2109
        %v2346 = vpack.c.b16 %v2114, %v2110
        %v2347 = vpack.c.b16 %v2115, %v2111
        %v2348 = vpack.c.b16 %v2120, %v2116
        %v2349 = vpack.c.b16 %v2121, %v2117
        %v2350 = vpack.c.b16 %v2122, %v2118
        %v2351 = vpack.c.b16 %v2123, %v2119
        %v2352 = vpack.c.b16 %v2128, %v2124
        %v2353 = vpack.c.b16 %v2129, %v2125
        %v2354 = vpack.c.b16 %v2130, %v2126
        %v2355 = vpack.c.b16 %v2131, %v2127
        %v2356 = vpack.c.b16 %v2136, %v2132
        %v2357 = vpack.c.b16 %v2137, %v2133
        %v2358 = vpack.c.b16 %v2138, %v2134
        %v2359 = vpack.c.b16 %v2139, %v2135
        %v2360 = vpack.c.b16 %v2144, %v2140
        %v2361 = vpack.c.b16 %v2145, %v2141
        %v2362 = vpack.c.b16 %v2146, %v2142
        %v2363 = vpack.c.b16 %v2147, %v2143
        %v2364 = vpack.c.b16 %v2152, %v2148
        %v2365 = vpack.c.b16 %v2153, %v2149
        %v2366 = vpack.c.b16 %v2154, %v2150
        %v2367 = vpack.c.b16 %v2155, %v2151
        %v2368 = vpack.c.b16 %v2160, %v2156
        %v2369 = vpack.c.b16 %v2161, %v2157
        %v2370 = vpack.c.b16 %v2162, %v2158
        %v2371 = vpack.c.b16 %v2163, %v2159
        %v2372 = vpack.c.b16 %v2168, %v2164
        %v2373 = vpack.c.b16 %v2169, %v2165
        %v2374 = vpack.c.b16 %v2170, %v2166
        %v2375 = vpack.c.b16 %v2171, %v2167
        %v2376 = vpack.c.b16 %v2176, %v2172
        %v2377 = vpack.c.b16 %v2177, %v2173
        %v2378 = vpack.c.b16 %v2178, %v2174
        %v2379 = vpack.c.b16 %v2179, %v2175
        %v2380 = vpack.c.b16 %v2184, %v2180
        %v2381 = vpack.c.b16 %v2185, %v2181
        %v2382 = vpack.c.b16 %v2186, %v2182
        %v2383 = vpack.c.b16 %v2187, %v2183
        %v2384 = vpack.c.b16 %v2192, %v2188
        %v2385 = vpack.c.b16 %v2193, %v2189
        %v2386 = vpack.c.b16 %v2194, %v2190
        %v2387 = vpack.c.b16 %v2195, %v2191
        %v2388 = vpack.c.b16 %v2200, %v2196
        %v2389 = vpack.c.b16 %v2201, %v2197
        %v2390 = vpack.c.b16 %v2202, %v2198
        %v2391 = vpack.c.b16 %v2203, %v2199
        %v2392 = vpack.c.b16 %v2208, %v2204
        %v2393 = vpack.c.b16 %v2209, %v2205
        %v2394 = vpack.c.b16 %v2210, %v2206
        %v2395 = vpack.c.b16 %v2211, %v2207
        %v2396 = vpack.c.b16 %v2216, %v2212
        %v2397 = vpack.c.b16 %v2217, %v2213
        %v2398 = vpack.c.b16 %v2218, %v2214
        %v2399 = vpack.c.b16 %v2219, %v2215
        %v2400 = vpack.c.b16 %v2224, %v2220
        %v2401 = vpack.c.b16 %v2225, %v2221
        %v2402 = vpack.c.b16 %v2226, %v2222
        %v2403 = vpack.c.b16 %v2227, %v2223
        %v2404 = vpack.c.b16 %v2232, %v2228
        %v2405 = vpack.c.b16 %v2233, %v2229
        %v2406 = vpack.c.b16 %v2234, %v2230
        %v2407 = vpack.c.b16 %v2235, %v2231
        %v2408 = vpack.c.b16 %v2240, %v2236
        %v2409 = vpack.c.b16 %v2241, %v2237
        %v2410 = vpack.c.b16 %v2242, %v2238
        %v2411 = vpack.c.b16 %v2243, %v2239
        %v2412 = vpack.c.b16 %v2248, %v2244
        %v2413 = vpack.c.b16 %v2249, %v2245
        %v2414 = vpack.c.b16 %v2250, %v2246
        %v2415 = vpack.c.b16 %v2251, %v2247
        %v2416 = vpack.c.b16 %v2256, %v2252
        %v2417 = vpack.c.b16 %v2257, %v2253
        %v2418 = vpack.c.b16 %v2258, %v2254
        %v2419 = vpack.c.b16 %v2259, %v2255
        %v2420 = vpack.c.b16 %v2264, %v2260
        %v2421 = vpack.c.b16 %v2265, %v2261
        %v2422 = vpack.c.b16 %v2266, %v2262
        %v2423 = vpack.c.b16 %v2267, %v2263
        %v2424 = vpack.c.b16 %v2272, %v2268
        %v2425 = vpack.c.b16 %v2273, %v2269
        %v2426 = vpack.c.b16 %v2274, %v2270
        %v2427 = vpack.c.b16 %v2275, %v2271
        %v2428 = vpack.c.b16 %v2280, %v2276
        %v2429 = vpack.c.b16 %v2281, %v2277
        %v2430 = vpack.c.b16 %v2282, %v2278
        %v2431 = vpack.c.b16 %v2283, %v2279
        %v2432 = vpack.c.b16 %v2288, %v2284
        %v2433 = vpack.c.b16 %v2289, %v2285
        %v2434 = vpack.c.b16 %v2290, %v2286
        %v2435 = vpack.c.b16 %v2291, %v2287
        %v2436 = vpack.c.b16 %v2296, %v2292
        %v2437 = vpack.c.b16 %v2297, %v2293
        %v2438 = vpack.c.b16 %v2298, %v2294
        %v2439 = vpack.c.b16 %v2299, %v2295
        %v2440 = vpack.c.b16 %v2304, %v2300
        %v2441 = vpack.c.b16 %v2305, %v2301
        %v2442 = vpack.c.b16 %v2306, %v2302
        %v2443 = vpack.c.b16 %v2307, %v2303
        %v2444 = vpack.c.b16 %v2312, %v2308
        %v2445 = vpack.c.b16 %v2313, %v2309
        %v2446 = vpack.c.b16 %v2314, %v2310
        %v2447 = vpack.c.b16 %v2315, %v2311
        %v2448 = vpack.c.b16 %v2320, %v2316
        %v2449 = vpack.c.b16 %v2321, %v2317
        %v2450 = vpack.c.b16 %v2322, %v2318
        %v2451 = vpack.c.b16 %v2323, %v2319
        %2580 = vmatprep.subr.bf16.mxu0 %v2353
        %2581 = vmatpush1.bf16.msra.mxu0 %v2352
        %2582 = vmatprep.subr.bf16.mxu0 %v2349
        %2583 = vmatpush1.bf16.msra.mxu0 %v2348
        %2584 = vmatprep.subr.bf16.mxu0 %v2345
        %2585 = vmatpush1.bf16.msra.mxu0 %v2344
        %2586 = vmatprep.subr.bf16.mxu0 %v2341
        %2587 = vmatpush1.bf16.msra.mxu0 %v2340
        %2588 = vmatprep.subr.bf16.mxu0 %v2337
        %2589 = vmatpush1.bf16.msra.mxu0 %v2336
        %2590 = vmatprep.subr.bf16.mxu0 %v2333
        %2591 = vmatpush1.bf16.msra.mxu0 %v2332
        %2592 = vmatprep.subr.bf16.mxu0 %v2329
        %2593 = vmatpush1.bf16.msra.mxu0 %v2328
        %2594 = vmatprep.subr.bf16.mxu0 %v2325
        %2595 = vmatpush1.bf16.msra.mxu0 %v2324
        %2596 = vmatprep.subr.bf16.mxu0 %v2385
        %2597 = vmatpush2.bf16.msra.mxu0 %v2384
        %2598 = vmatprep.subr.bf16.mxu0 %v2381
        %2599 = vmatpush2.bf16.msra.mxu0 %v2380
        %2600 = vmatprep.subr.bf16.mxu0 %v2377
        %2601 = vmatpush2.bf16.msra.mxu0 %v2376
        %2602 = vmatprep.subr.bf16.mxu0 %v2373
        %2603 = vmatpush2.bf16.msra.mxu0 %v2372
        %2604 = vmatprep.subr.bf16.mxu0 %v2369
        %2605 = vmatpush2.bf16.msra.mxu0 %v2368
        %2606 = vmatprep.subr.bf16.mxu0 %v2365
        %2607 = vmatpush2.bf16.msra.mxu0 %v2364
        %2608 = vmatprep.subr.bf16.mxu0 %v2361
        %2609 = vmatpush2.bf16.msra.mxu0 %v2360
        %2610 = vmatprep.subr.bf16.mxu0 %v2357
        %2611 = vmatpush2.bf16.msra.mxu0 %v2356
        %2612 = vmatprep.mubr.bf16.mxu0 %v1893
        %2613 = vmatmul.mubr.bf16.gmra.mxu0 %v1892
        %v2614 = vpop.f32.mrf.mxu0
        %v2615 = vadd.f32 0.0, %v2614
        %v2616 = vpop.f32.mrf.mxu0
        %v2617 = vadd.f32 0.0, %v2616
        %v2618 = vpop.f32.mrf.mxu0
        %v2619 = vadd.f32 0.0, %v2618
        %v2620 = vpop.f32.mrf.mxu0
        %v2621 = vadd.f32 0.0, %v2620
        %2622 = vmatprep.mubr.bf16.mxu0 %v1897
        %2623 = vmatmul.mubr.bf16.gmra.mxu0 %v1896
        %v2624 = vpop.f32.mrf.mxu0
        %v2625 = vadd.f32 0.0, %v2624
        %v2626 = vpop.f32.mrf.mxu0
        %v2627 = vadd.f32 0.0, %v2626
        %v2628 = vpop.f32.mrf.mxu0
        %v2629 = vadd.f32 0.0, %v2628
        %v2630 = vpop.f32.mrf.mxu0
        %v2631 = vadd.f32 0.0, %v2630
        %2632 = vmatprep.mubr.bf16.mxu0 %v1901
        %2633 = vmatmul.mubr.bf16.gmra.mxu0 %v1900
        %v2634 = vpop.f32.mrf.mxu0
        %v2635 = vadd.f32 0.0, %v2634
        %v2636 = vpop.f32.mrf.mxu0
        %v2637 = vadd.f32 0.0, %v2636
        %v2638 = vpop.f32.mrf.mxu0
        %v2639 = vadd.f32 0.0, %v2638
        %v2640 = vpop.f32.mrf.mxu0
        %v2641 = vadd.f32 0.0, %v2640
        %2642 = vmatprep.mubr.bf16.mxu0 %v1905
        %2643 = vmatmul.mubr.bf16.gmra.mxu0 %v1904
        %v2644 = vpop.f32.mrf.mxu0
        %v2645 = vadd.f32 0.0, %v2644
        %v2646 = vpop.f32.mrf.mxu0
        %v2647 = vadd.f32 0.0, %v2646
        %v2648 = vpop.f32.mrf.mxu0
        %v2649 = vadd.f32 0.0, %v2648
        %v2650 = vpop.f32.mrf.mxu0
        %v2651 = vadd.f32 0.0, %v2650
        %2652 = vmatprep.mubr.bf16.mxu0 %v1909
        %2653 = vmatmul.mubr.bf16.gmra.mxu0 %v1908
        %v2654 = vpop.f32.mrf.mxu0
        %v2655 = vadd.f32 0.0, %v2654
        %v2656 = vpop.f32.mrf.mxu0
        %v2657 = vadd.f32 0.0, %v2656
        %v2658 = vpop.f32.mrf.mxu0
        %v2659 = vadd.f32 0.0, %v2658
        %v2660 = vpop.f32.mrf.mxu0
        %v2661 = vadd.f32 0.0, %v2660
        %2662 = vmatprep.mubr.bf16.mxu0 %v1913
        %2663 = vmatmul.mubr.bf16.gmra.mxu0 %v1912
        %v2664 = vpop.f32.mrf.mxu0
        %v2665 = vadd.f32 0.0, %v2664
        %v2666 = vpop.f32.mrf.mxu0
        %v2667 = vadd.f32 0.0, %v2666
        %v2668 = vpop.f32.mrf.mxu0
        %v2669 = vadd.f32 0.0, %v2668
        %v2670 = vpop.f32.mrf.mxu0
        %v2671 = vadd.f32 0.0, %v2670
        %2672 = vdwg.mxu0
        %2673 = vmatprep.subr.bf16.mxu0 %v2417
        %2674 = vmatpush1.bf16.msra.mxu0 %v2416
        %2675 = vmatprep.subr.bf16.mxu0 %v2413
        %2676 = vmatpush1.bf16.msra.mxu0 %v2412
        %2677 = vmatprep.subr.bf16.mxu0 %v2409
        %2678 = vmatpush1.bf16.msra.mxu0 %v2408
        %2679 = vmatprep.subr.bf16.mxu0 %v2405
        %2680 = vmatpush1.bf16.msra.mxu0 %v2404
        %2681 = vmatprep.subr.bf16.mxu0 %v2401
        %2682 = vmatpush1.bf16.msra.mxu0 %v2400
        %2683 = vmatprep.subr.bf16.mxu0 %v2397
        %2684 = vmatpush1.bf16.msra.mxu0 %v2396
        %2685 = vmatprep.subr.bf16.mxu0 %v2393
        %2686 = vmatpush1.bf16.msra.mxu0 %v2392
        %2687 = vmatprep.subr.bf16.mxu0 %v2389
        %2688 = vmatpush1.bf16.msra.mxu0 %v2388
        %2689 = vmatprep.subr.bf16.mxu0 %v2449
        %2690 = vmatpush2.bf16.msra.mxu0 %v2448
        %2691 = vmatprep.subr.bf16.mxu0 %v2445
        %2692 = vmatpush2.bf16.msra.mxu0 %v2444
        %2693 = vmatprep.subr.bf16.mxu0 %v2441
        %2694 = vmatpush2.bf16.msra.mxu0 %v2440
        %2695 = vmatprep.subr.bf16.mxu0 %v2437
        %2696 = vmatpush2.bf16.msra.mxu0 %v2436
        %2697 = vmatprep.subr.bf16.mxu0 %v2433
        %2698 = vmatpush2.bf16.msra.mxu0 %v2432
        %2699 = vmatprep.subr.bf16.mxu0 %v2429
        %2700 = vmatpush2.bf16.msra.mxu0 %v2428
        %2701 = vmatprep.subr.bf16.mxu0 %v2425
        %2702 = vmatpush2.bf16.msra.mxu0 %v2424
        %2703 = vmatprep.subr.bf16.mxu0 %v2421
        %2704 = vmatpush2.bf16.msra.mxu0 %v2420
        %2705 = vmatprep.mubr.bf16.mxu0 %v1895
        %2706 = vmatmul.mubr.bf16.gmra.mxu0 %v1894
        %v2707 = vpop.f32.mrf.mxu0
        %v2708 = vadd.f32 %v2615, %v2707
        %v2709 = vpop.f32.mrf.mxu0
        %v2710 = vadd.f32 %v2617, %v2709
        %v2711 = vpop.f32.mrf.mxu0
        %v2712 = vadd.f32 %v2619, %v2711
        %v2713 = vpop.f32.mrf.mxu0
        %v2714 = vadd.f32 %v2621, %v2713
        %2715 = vmatprep.mubr.bf16.mxu0 %v1899
        %2716 = vmatmul.mubr.bf16.gmra.mxu0 %v1898
        %v2717 = vpop.f32.mrf.mxu0
        %v2718 = vadd.f32 %v2625, %v2717
        %v2719 = vpop.f32.mrf.mxu0
        %v2720 = vadd.f32 %v2627, %v2719
        %v2721 = vpop.f32.mrf.mxu0
        %v2722 = vadd.f32 %v2629, %v2721
        %v2723 = vpop.f32.mrf.mxu0
        %v2724 = vadd.f32 %v2631, %v2723
        %2725 = vmatprep.mubr.bf16.mxu0 %v1903
        %2726 = vmatmul.mubr.bf16.gmra.mxu0 %v1902
        %v2727 = vpop.f32.mrf.mxu0
        %v2728 = vadd.f32 %v2635, %v2727
        %v2729 = vpop.f32.mrf.mxu0
        %v2730 = vadd.f32 %v2637, %v2729
        %v2731 = vpop.f32.mrf.mxu0
        %v2732 = vadd.f32 %v2639, %v2731
        %v2733 = vpop.f32.mrf.mxu0
        %v2734 = vadd.f32 %v2641, %v2733
        %2735 = vmatprep.mubr.bf16.mxu0 %v1907
        %2736 = vmatmul.mubr.bf16.gmra.mxu0 %v1906
        %v2737 = vpop.f32.mrf.mxu0
        %v2738 = vadd.f32 %v2645, %v2737
        %v2739 = vpop.f32.mrf.mxu0
        %v2740 = vadd.f32 %v2647, %v2739
        %v2741 = vpop.f32.mrf.mxu0
        %v2742 = vadd.f32 %v2649, %v2741
        %v2743 = vpop.f32.mrf.mxu0
        %v2744 = vadd.f32 %v2651, %v2743
        %2745 = vmatprep.mubr.bf16.mxu0 %v1911
        %2746 = vmatmul.mubr.bf16.gmra.mxu0 %v1910
        %v2747 = vpop.f32.mrf.mxu0
        %v2748 = vadd.f32 %v2655, %v2747
        %v2749 = vpop.f32.mrf.mxu0
        %v2750 = vadd.f32 %v2657, %v2749
        %v2751 = vpop.f32.mrf.mxu0
        %v2752 = vadd.f32 %v2659, %v2751
        %v2753 = vpop.f32.mrf.mxu0
        %v2754 = vadd.f32 %v2661, %v2753
        %2755 = vmatprep.mubr.bf16.mxu0 %v1915
        %2756 = vmatmul.mubr.bf16.gmra.mxu0 %v1914
        %v2757 = vpop.f32.mrf.mxu0
        %v2758 = vadd.f32 %v2665, %v2757
        %v2759 = vpop.f32.mrf.mxu0
        %v2760 = vadd.f32 %v2667, %v2759
        %v2761 = vpop.f32.mrf.mxu0
        %v2762 = vadd.f32 %v2669, %v2761
        %v2763 = vpop.f32.mrf.mxu0
        %v2764 = vadd.f32 %v2671, %v2763
        %2765 = vdwg.mxu0
        %2766 = vmatprep.subr.bf16.mxu0 %v2355
        %2767 = vmatpush1.bf16.msra.mxu0 %v2354
        %2768 = vmatprep.subr.bf16.mxu0 %v2351
        %2769 = vmatpush1.bf16.msra.mxu0 %v2350
        %2770 = vmatprep.subr.bf16.mxu0 %v2347
        %2771 = vmatpush1.bf16.msra.mxu0 %v2346
        %2772 = vmatprep.subr.bf16.mxu0 %v2343
        %2773 = vmatpush1.bf16.msra.mxu0 %v2342
        %2774 = vmatprep.subr.bf16.mxu0 %v2339
        %2775 = vmatpush1.bf16.msra.mxu0 %v2338
        %2776 = vmatprep.subr.bf16.mxu0 %v2335
        %2777 = vmatpush1.bf16.msra.mxu0 %v2334
        %2778 = vmatprep.subr.bf16.mxu0 %v2331
        %2779 = vmatpush1.bf16.msra.mxu0 %v2330
        %2780 = vmatprep.subr.bf16.mxu0 %v2327
        %2781 = vmatpush1.bf16.msra.mxu0 %v2326
        %2782 = vmatprep.subr.bf16.mxu0 %v2387
        %2783 = vmatpush2.bf16.msra.mxu0 %v2386
        %2784 = vmatprep.subr.bf16.mxu0 %v2383
        %2785 = vmatpush2.bf16.msra.mxu0 %v2382
        %2786 = vmatprep.subr.bf16.mxu0 %v2379
        %2787 = vmatpush2.bf16.msra.mxu0 %v2378
        %2788 = vmatprep.subr.bf16.mxu0 %v2375
        %2789 = vmatpush2.bf16.msra.mxu0 %v2374
        %2790 = vmatprep.subr.bf16.mxu0 %v2371
        %2791 = vmatpush2.bf16.msra.mxu0 %v2370
        %2792 = vmatprep.subr.bf16.mxu0 %v2367
        %2793 = vmatpush2.bf16.msra.mxu0 %v2366
        %2794 = vmatprep.subr.bf16.mxu0 %v2363
        %2795 = vmatpush2.bf16.msra.mxu0 %v2362
        %2796 = vmatprep.subr.bf16.mxu0 %v2359
        %2797 = vmatpush2.bf16.msra.mxu0 %v2358
        %2798 = vmatprep.mubr.bf16.mxu0 %v1893
        %2799 = vmatmul.mubr.bf16.gmra.mxu0 %v1892
        %v2800 = vpop.f32.mrf.mxu0
        %v2801 = vadd.f32 0.0, %v2800
        %v2802 = vpop.f32.mrf.mxu0
        %v2803 = vadd.f32 0.0, %v2802
        %v2804 = vpop.f32.mrf.mxu0
        %v2805 = vadd.f32 0.0, %v2804
        %v2806 = vpop.f32.mrf.mxu0
        %v2807 = vadd.f32 0.0, %v2806
        %2808 = vmatprep.mubr.bf16.mxu0 %v1897
        %2809 = vmatmul.mubr.bf16.gmra.mxu0 %v1896
        %v2810 = vpop.f32.mrf.mxu0
        %v2811 = vadd.f32 0.0, %v2810
        %v2812 = vpop.f32.mrf.mxu0
        %v2813 = vadd.f32 0.0, %v2812
        %v2814 = vpop.f32.mrf.mxu0
        %v2815 = vadd.f32 0.0, %v2814
        %v2816 = vpop.f32.mrf.mxu0
        %v2817 = vadd.f32 0.0, %v2816
        %2818 = vmatprep.mubr.bf16.mxu0 %v1901
        %2819 = vmatmul.mubr.bf16.gmra.mxu0 %v1900
        %v2820 = vpop.f32.mrf.mxu0
        %v2821 = vadd.f32 0.0, %v2820
        %v2822 = vpop.f32.mrf.mxu0
        %v2823 = vadd.f32 0.0, %v2822
        %v2824 = vpop.f32.mrf.mxu0
        %v2825 = vadd.f32 0.0, %v2824
        %v2826 = vpop.f32.mrf.mxu0
        %v2827 = vadd.f32 0.0, %v2826
        %2828 = vmatprep.mubr.bf16.mxu0 %v1905
        %2829 = vmatmul.mubr.bf16.gmra.mxu0 %v1904
        %v2830 = vpop.f32.mrf.mxu0
        %v2831 = vadd.f32 0.0, %v2830
        %v2832 = vpop.f32.mrf.mxu0
        %v2833 = vadd.f32 0.0, %v2832
        %v2834 = vpop.f32.mrf.mxu0
        %v2835 = vadd.f32 0.0, %v2834
        %v2836 = vpop.f32.mrf.mxu0
        %v2837 = vadd.f32 0.0, %v2836
        %2838 = vmatprep.mubr.bf16.mxu0 %v1909
        %2839 = vmatmul.mubr.bf16.gmra.mxu0 %v1908
        %v2840 = vpop.f32.mrf.mxu0
        %v2841 = vadd.f32 0.0, %v2840
        %v2842 = vpop.f32.mrf.mxu0
        %v2843 = vadd.f32 0.0, %v2842
        %v2844 = vpop.f32.mrf.mxu0
        %v2845 = vadd.f32 0.0, %v2844
        %v2846 = vpop.f32.mrf.mxu0
        %v2847 = vadd.f32 0.0, %v2846
        %2848 = vmatprep.mubr.bf16.mxu0 %v1913
        %2849 = vmatmul.mubr.bf16.gmra.mxu0 %v1912
        %v2850 = vpop.f32.mrf.mxu0
        %v2851 = vadd.f32 0.0, %v2850
        %v2852 = vpop.f32.mrf.mxu0
        %v2853 = vadd.f32 0.0, %v2852
        %v2854 = vpop.f32.mrf.mxu0
        %v2855 = vadd.f32 0.0, %v2854
        %v2856 = vpop.f32.mrf.mxu0
        %v2857 = vadd.f32 0.0, %v2856
        %2858 = vdwg.mxu0
        %2859 = vmatprep.subr.bf16.mxu0 %v2419
        %2860 = vmatpush1.bf16.msra.mxu0 %v2418
        %2861 = vmatprep.subr.bf16.mxu0 %v2415
        %2862 = vmatpush1.bf16.msra.mxu0 %v2414
        %2863 = vmatprep.subr.bf16.mxu0 %v2411
        %2864 = vmatpush1.bf16.msra.mxu0 %v2410
        %2865 = vmatprep.subr.bf16.mxu0 %v2407
        %2866 = vmatpush1.bf16.msra.mxu0 %v2406
        %2867 = vmatprep.subr.bf16.mxu0 %v2403
        %2868 = vmatpush1.bf16.msra.mxu0 %v2402
        %2869 = vmatprep.subr.bf16.mxu0 %v2399
        %2870 = vmatpush1.bf16.msra.mxu0 %v2398
        %2871 = vmatprep.subr.bf16.mxu0 %v2395
        %2872 = vmatpush1.bf16.msra.mxu0 %v2394
        %2873 = vmatprep.subr.bf16.mxu0 %v2391
        %2874 = vmatpush1.bf16.msra.mxu0 %v2390
        %2875 = vmatprep.subr.bf16.mxu0 %v2451
        %2876 = vmatpush2.bf16.msra.mxu0 %v2450
        %2877 = vmatprep.subr.bf16.mxu0 %v2447
        %2878 = vmatpush2.bf16.msra.mxu0 %v2446
        %2879 = vmatprep.subr.bf16.mxu0 %v2443
        %2880 = vmatpush2.bf16.msra.mxu0 %v2442
        %2881 = vmatprep.subr.bf16.mxu0 %v2439
        %2882 = vmatpush2.bf16.msra.mxu0 %v2438
        %2883 = vmatprep.subr.bf16.mxu0 %v2435
        %2884 = vmatpush2.bf16.msra.mxu0 %v2434
        %2885 = vmatprep.subr.bf16.mxu0 %v2431
        %2886 = vmatpush2.bf16.msra.mxu0 %v2430
        %2887 = vmatprep.subr.bf16.mxu0 %v2427
        %2888 = vmatpush2.bf16.msra.mxu0 %v2426
        %2889 = vmatprep.subr.bf16.mxu0 %v2423
        %2890 = vmatpush2.bf16.msra.mxu0 %v2422
        %2891 = vmatprep.mubr.bf16.mxu0 %v1895
        %2892 = vmatmul.mubr.bf16.gmra.mxu0 %v1894
        %v2893 = vpop.f32.mrf.mxu0
        %v2894 = vadd.f32 %v2801, %v2893
        %v2895 = vpop.f32.mrf.mxu0
        %v2896 = vadd.f32 %v2803, %v2895
        %v2897 = vpop.f32.mrf.mxu0
        %v2898 = vadd.f32 %v2805, %v2897
        %v2899 = vpop.f32.mrf.mxu0
        %v2900 = vadd.f32 %v2807, %v2899
        %2901 = vmatprep.mubr.bf16.mxu0 %v1899
        %2902 = vmatmul.mubr.bf16.gmra.mxu0 %v1898
        %v2903 = vpop.f32.mrf.mxu0
        %v2904 = vadd.f32 %v2811, %v2903
        %v2905 = vpop.f32.mrf.mxu0
        %v2906 = vadd.f32 %v2813, %v2905
        %v2907 = vpop.f32.mrf.mxu0
        %v2908 = vadd.f32 %v2815, %v2907
        %v2909 = vpop.f32.mrf.mxu0
        %v2910 = vadd.f32 %v2817, %v2909
        %2911 = vmatprep.mubr.bf16.mxu0 %v1903
        %2912 = vmatmul.mubr.bf16.gmra.mxu0 %v1902
        %v2913 = vpop.f32.mrf.mxu0
        %v2914 = vadd.f32 %v2821, %v2913
        %v2915 = vpop.f32.mrf.mxu0
        %v2916 = vadd.f32 %v2823, %v2915
        %v2917 = vpop.f32.mrf.mxu0
        %v2918 = vadd.f32 %v2825, %v2917
        %v2919 = vpop.f32.mrf.mxu0
        %v2920 = vadd.f32 %v2827, %v2919
        %2921 = vmatprep.mubr.bf16.mxu0 %v1907
        %2922 = vmatmul.mubr.bf16.gmra.mxu0 %v1906
        %v2923 = vpop.f32.mrf.mxu0
        %v2924 = vadd.f32 %v2831, %v2923
        %v2925 = vpop.f32.mrf.mxu0
        %v2926 = vadd.f32 %v2833, %v2925
        %v2927 = vpop.f32.mrf.mxu0
        %v2928 = vadd.f32 %v2835, %v2927
        %v2929 = vpop.f32.mrf.mxu0
        %v2930 = vadd.f32 %v2837, %v2929
        %2931 = vmatprep.mubr.bf16.mxu0 %v1911
        %2932 = vmatmul.mubr.bf16.gmra.mxu0 %v1910
        %v2933 = vpop.f32.mrf.mxu0
        %v2934 = vadd.f32 %v2841, %v2933
        %v2935 = vpop.f32.mrf.mxu0
        %v2936 = vadd.f32 %v2843, %v2935
        %v2937 = vpop.f32.mrf.mxu0
        %v2938 = vadd.f32 %v2845, %v2937
        %v2939 = vpop.f32.mrf.mxu0
        %v2940 = vadd.f32 %v2847, %v2939
        %2941 = vmatprep.mubr.bf16.mxu0 %v1915
        %2942 = vmatmul.mubr.bf16.gmra.mxu0 %v1914
        %v2943 = vpop.f32.mrf.mxu0
        %v2944 = vadd.f32 %v2851, %v2943
        %v2945 = vpop.f32.mrf.mxu0
        %v2946 = vadd.f32 %v2853, %v2945
        %v2947 = vpop.f32.mrf.mxu0
        %v2948 = vadd.f32 %v2855, %v2947
        %v2949 = vpop.f32.mrf.mxu0
        %v2950 = vadd.f32 %v2857, %v2949
        %2951 = vdwg.mxu0
        %v2952 = vadd.f32 %v1620, %v2708
        %v2953 = vadd.f32 %v1621, %v2710
        %v2954 = vadd.f32 %v1622, %v2894
        %v2955 = vadd.f32 %v1623, %v2896
        %v2956 = vadd.f32 %v1624, %v2712
        %v2957 = vadd.f32 %v1625, %v2714
        %v2958 = vadd.f32 %v1626, %v2898
        %v2959 = vadd.f32 %v1627, %v2900
        %v2960 = vadd.f32 %v1628, %v2718
        %v2961 = vadd.f32 %v1629, %v2720
        %v2962 = vadd.f32 %v1630, %v2904
        %v2963 = vadd.f32 %v1631, %v2906
        %v2964 = vadd.f32 %v1632, %v2722
        %v2965 = vadd.f32 %v1633, %v2724
        %v2966 = vadd.f32 %v1634, %v2908
        %v2967 = vadd.f32 %v1635, %v2910
        %v2968 = vadd.f32 %v1636, %v2728
        %v2969 = vadd.f32 %v1637, %v2730
        %v2970 = vadd.f32 %v1638, %v2914
        %v2971 = vadd.f32 %v1639, %v2916
        %v2972 = vadd.f32 %v1640, %v2732
        %v2973 = vadd.f32 %v1641, %v2734
        %v2974 = vadd.f32 %v1642, %v2918
        %v2975 = vadd.f32 %v1643, %v2920
        %v2976 = vadd.f32 %v1644, %v2738
        %v2977 = vadd.f32 %v1645, %v2740
        %v2978 = vadd.f32 %v1646, %v2924
        %v2979 = vadd.f32 %v1647, %v2926
        %v2980 = vadd.f32 %v1648, %v2742
        %v2981 = vadd.f32 %v1649, %v2744
        %v2982 = vadd.f32 %v1650, %v2928
        %v2983 = vadd.f32 %v1651, %v2930
        %v2984 = vadd.f32 %v1652, %v2748
        %v2985 = vadd.f32 %v1653, %v2750
        %v2986 = vadd.f32 %v1654, %v2934
        %v2987 = vadd.f32 %v1655, %v2936
        %v2988 = vadd.f32 %v1656, %v2752
        %v2989 = vadd.f32 %v1657, %v2754
        %v2990 = vadd.f32 %v1658, %v2938
        %v2991 = vadd.f32 %v1659, %v2940
        %v2992 = vadd.f32 %v1660, %v2758
        %v2993 = vadd.f32 %v1661, %v2760
        %v2994 = vadd.f32 %v1662, %v2944
        %v2995 = vadd.f32 %v1663, %v2946
        %v2996 = vadd.f32 %v1664, %v2762
        %v2997 = vadd.f32 %v1665, %v2764
        %v2998 = vadd.f32 %v1666, %v2948
        %v2999 = vadd.f32 %v1667, %v2950
        %3000 = vst [vmem:[#allocation2 + $0x40] sm:$0xff] %v2952
        %3001 = vst [vmem:[#allocation2 + $0x48] sm:$0xff] %v2953
        %3002 = vst [vmem:[#allocation2 + $0x50] sm:$0xff] %v2954
        %3003 = vst [vmem:[#allocation2 + $0x58] sm:$0xff] %v2955
        %3004 = vst [vmem:[#allocation2 + $0x60] sm:$0xff] %v2956
        %3005 = vst [vmem:[#allocation2 + $0x68] sm:$0xff] %v2957
        %3006 = vst [vmem:[#allocation2 + $0x70] sm:$0xff] %v2958
        %3007 = vst [vmem:[#allocation2 + $0x78] sm:$0xff] %v2959
        %3008 = vst [vmem:[#allocation2 + $0x80] sm:$0xff] %v2960
        %3009 = vst [vmem:[#allocation2 + $0x88] sm:$0xff] %v2961
        %3010 = vst [vmem:[#allocation2 + $0x90] sm:$0xff] %v2962
        %3011 = vst [vmem:[#allocation2 + $0x98] sm:$0xff] %v2963
        %3012 = vst [vmem:[#allocation2 + $0xa0] sm:$0xff] %v2964
        %3013 = vst [vmem:[#allocation2 + $0xa8] sm:$0xff] %v2965
        %3014 = vst [vmem:[#allocation2 + $0xb0] sm:$0xff] %v2966
        %3015 = vst [vmem:[#allocation2 + $0xb8] sm:$0xff] %v2967
        %3016 = vst [vmem:[#allocation2 + $0xc0] sm:$0xff] %v2968
        %3017 = vst [vmem:[#allocation2 + $0xc8] sm:$0xff] %v2969
        %3018 = vst [vmem:[#allocation2 + $0xd0] sm:$0xff] %v2970
        %3019 = vst [vmem:[#allocation2 + $0xd8] sm:$0xff] %v2971
        %3020 = vst [vmem:[#allocation2 + $0xe0] sm:$0xff] %v2972
        %3021 = vst [vmem:[#allocation2 + $0xe8] sm:$0xff] %v2973
        %3022 = vst [vmem:[#allocation2 + $0xf0] sm:$0xff] %v2974
        %3023 = vst [vmem:[#allocation2 + $0xf8] sm:$0xff] %v2975
        %3024 = vst [vmem:[#allocation2 + $0x100] sm:$0xff] %v2976
        %3025 = vst [vmem:[#allocation2 + $0x108] sm:$0xff] %v2977
        %3026 = vst [vmem:[#allocation2 + $0x110] sm:$0xff] %v2978
        %3027 = vst [vmem:[#allocation2 + $0x118] sm:$0xff] %v2979
        %3028 = vst [vmem:[#allocation2 + $0x120] sm:$0xff] %v2980
        %3029 = vst [vmem:[#allocation2 + $0x128] sm:$0xff] %v2981
        %3030 = vst [vmem:[#allocation2 + $0x130] sm:$0xff] %v2982
        %3031 = vst [vmem:[#allocation2 + $0x138] sm:$0xff] %v2983
        %3032 = vst [vmem:[#allocation2 + $0x140] sm:$0xff] %v2984
        %3033 = vst [vmem:[#allocation2 + $0x148] sm:$0xff] %v2985
        %3034 = vst [vmem:[#allocation2 + $0x150] sm:$0xff] %v2986
        %3035 = vst [vmem:[#allocation2 + $0x158] sm:$0xff] %v2987
        %3036 = vst [vmem:[#allocation2 + $0x160] sm:$0xff] %v2988
        %3037 = vst [vmem:[#allocation2 + $0x168] sm:$0xff] %v2989
        %3038 = vst [vmem:[#allocation2 + $0x170] sm:$0xff] %v2990
        %3039 = vst [vmem:[#allocation2 + $0x178] sm:$0xff] %v2991
        %3040 = vst [vmem:[#allocation2 + $0x180] sm:$0xff] %v2992
        %3041 = vst [vmem:[#allocation2 + $0x188] sm:$0xff] %v2993
        %3042 = vst [vmem:[#allocation2 + $0x190] sm:$0xff] %v2994
        %3043 = vst [vmem:[#allocation2 + $0x198] sm:$0xff] %v2995
        %3044 = vst [vmem:[#allocation2 + $0x1a0] sm:$0xff] %v2996
        %3045 = vst [vmem:[#allocation2 + $0x1a8] sm:$0xff] %v2997
        %3046 = vst [vmem:[#allocation2 + $0x1b0] sm:$0xff] %v2998
        %3047 = vst [vmem:[#allocation2 + $0x1b8] sm:$0xff] %v2999
        %v3048 = vld [vmem:[#allocation2] sm:$0xff]
        %v3049 = vld [vmem:[#allocation2 + $0x8] sm:$0xff]
        %v3050 = vld [vmem:[#allocation2 + $0x10] sm:$0xff]
        %v3051 = vld [vmem:[#allocation2 + $0x18] sm:$0xff]
        %v3052 = vld [vmem:[#allocation2 + $0x20] sm:$0xff]
        %v3053 = vld [vmem:[#allocation2 + $0x28] sm:$0xff]
        %v3054 = vld [vmem:[#allocation2 + $0x30] sm:$0xff]
        %v3055 = vld [vmem:[#allocation2 + $0x38] sm:$0xff]
        %v3056 = vld [vmem:[#allocation2 + $0x40] sm:$0xff]
        %v3057 = vld [vmem:[#allocation2 + $0x48] sm:$0xff]
        %v3058 = vld [vmem:[#allocation2 + $0x50] sm:$0xff]
        %v3059 = vld [vmem:[#allocation2 + $0x58] sm:$0xff]
        %v3060 = vld [vmem:[#allocation2 + $0x60] sm:$0xff]
        %v3061 = vld [vmem:[#allocation2 + $0x68] sm:$0xff]
        %v3062 = vld [vmem:[#allocation2 + $0x70] sm:$0xff]
        %v3063 = vld [vmem:[#allocation2 + $0x78] sm:$0xff]
        %v3064 = vld [vmem:[#allocation2 + $0x80] sm:$0xff]
        %v3065 = vld [vmem:[#allocation2 + $0x88] sm:$0xff]
        %v3066 = vld [vmem:[#allocation2 + $0x90] sm:$0xff]
        %v3067 = vld [vmem:[#allocation2 + $0x98] sm:$0xff]
        %v3068 = vld [vmem:[#allocation2 + $0xa0] sm:$0xff]
        %v3069 = vld [vmem:[#allocation2 + $0xa8] sm:$0xff]
        %v3070 = vld [vmem:[#allocation2 + $0xb0] sm:$0xff]
        %v3071 = vld [vmem:[#allocation2 + $0xb8] sm:$0xff]
        %v3072 = vld [vmem:[#allocation2 + $0xc0] sm:$0xff]
        %v3073 = vld [vmem:[#allocation2 + $0xc8] sm:$0xff]
        %v3074 = vld [vmem:[#allocation2 + $0xd0] sm:$0xff]
        %v3075 = vld [vmem:[#allocation2 + $0xd8] sm:$0xff]
        %v3076 = vld [vmem:[#allocation2 + $0xe0] sm:$0xff]
        %v3077 = vld [vmem:[#allocation2 + $0xe8] sm:$0xff]
        %v3078 = vld [vmem:[#allocation2 + $0xf0] sm:$0xff]
        %v3079 = vld [vmem:[#allocation2 + $0xf8] sm:$0xff]
        %v3080 = vld [vmem:[#allocation2 + $0x100] sm:$0xff]
        %v3081 = vld [vmem:[#allocation2 + $0x108] sm:$0xff]
        %v3082 = vld [vmem:[#allocation2 + $0x110] sm:$0xff]
        %v3083 = vld [vmem:[#allocation2 + $0x118] sm:$0xff]
        %v3084 = vld [vmem:[#allocation2 + $0x120] sm:$0xff]
        %v3085 = vld [vmem:[#allocation2 + $0x128] sm:$0xff]
        %v3086 = vld [vmem:[#allocation2 + $0x130] sm:$0xff]
        %v3087 = vld [vmem:[#allocation2 + $0x138] sm:$0xff]
        %v3088 = vld [vmem:[#allocation2 + $0x140] sm:$0xff]
        %v3089 = vld [vmem:[#allocation2 + $0x148] sm:$0xff]
        %v3090 = vld [vmem:[#allocation2 + $0x150] sm:$0xff]
        %v3091 = vld [vmem:[#allocation2 + $0x158] sm:$0xff]
        %v3092 = vld [vmem:[#allocation2 + $0x160] sm:$0xff]
        %v3093 = vld [vmem:[#allocation2 + $0x168] sm:$0xff]
        %v3094 = vld [vmem:[#allocation2 + $0x170] sm:$0xff]
        %v3095 = vld [vmem:[#allocation2 + $0x178] sm:$0xff]
        %s3096 = scalar_lea.vmem %s195, 32 [#allocation3]
        %v3097 = vld [vmem:[%s3096] sm:$0xff]
        %v3098 = vld [vmem:[%s3096 + $0x8] sm:$0xff]
        %v3099 = vld [vmem:[%s3096 + $0x10] sm:$0xff]
        %v3100 = vld [vmem:[%s3096 + $0x18] sm:$0xff]
        %v3101 = vld [vmem:[%s3096 + $0x20] sm:$0xff]
        %v3102 = vld [vmem:[%s3096 + $0x28] sm:$0xff]
        %v3103 = vld [vmem:[%s3096 + $0x30] sm:$0xff]
        %v3104 = vld [vmem:[%s3096 + $0x38] sm:$0xff]
        %v3105 = vld [vmem:[%s3096 + $0x40] sm:$0xff]
        %v3106 = vld [vmem:[%s3096 + $0x48] sm:$0xff]
        %v3107 = vld [vmem:[%s3096 + $0x50] sm:$0xff]
        %v3108 = vld [vmem:[%s3096 + $0x58] sm:$0xff]
        %v3109 = vld [vmem:[%s3096 + $0x60] sm:$0xff]
        %v3110 = vld [vmem:[%s3096 + $0x68] sm:$0xff]
        %v3111 = vld [vmem:[%s3096 + $0x70] sm:$0xff]
        %v3112 = vld [vmem:[%s3096 + $0x78] sm:$0xff]
        %v3113 = vld [vmem:[%s3096 + $0x80] sm:$0xff]
        %v3114 = vld [vmem:[%s3096 + $0x88] sm:$0xff]
        %v3115 = vld [vmem:[%s3096 + $0x90] sm:$0xff]
        %v3116 = vld [vmem:[%s3096 + $0x98] sm:$0xff]
        %v3117 = vld [vmem:[%s3096 + $0xa0] sm:$0xff]
        %v3118 = vld [vmem:[%s3096 + $0xa8] sm:$0xff]
        %v3119 = vld [vmem:[%s3096 + $0xb0] sm:$0xff]
        %v3120 = vld [vmem:[%s3096 + $0xb8] sm:$0xff]
        %s3121 = scalar_lea.vmem %s1, 2048
        %v3122 = vld [vmem:[%s3121] sm:$0xff]
        %v3123 = vld [vmem:[%s3121 + $0x8] sm:$0xff]
        %v3124 = vld [vmem:[%s3121 + $0x10] sm:$0xff]
        %v3125 = vld [vmem:[%s3121 + $0x18] sm:$0xff]
        %v3126 = vld [vmem:[%s3121 + $0x20] sm:$0xff]
        %v3127 = vld [vmem:[%s3121 + $0x28] sm:$0xff]
        %v3128 = vld [vmem:[%s3121 + $0x30] sm:$0xff]
        %v3129 = vld [vmem:[%s3121 + $0x38] sm:$0xff]
        %v3130 = vld [vmem:[%s3121 + $0x40] sm:$0xff]
        %v3131 = vld [vmem:[%s3121 + $0x48] sm:$0xff]
        %v3132 = vld [vmem:[%s3121 + $0x50] sm:$0xff]
        %v3133 = vld [vmem:[%s3121 + $0x58] sm:$0xff]
        %v3134 = vld [vmem:[%s3121 + $0x60] sm:$0xff]
        %v3135 = vld [vmem:[%s3121 + $0x68] sm:$0xff]
        %v3136 = vld [vmem:[%s3121 + $0x70] sm:$0xff]
        %v3137 = vld [vmem:[%s3121 + $0x78] sm:$0xff]
        %v3138 = vld [vmem:[%s3121 + $0x80] sm:$0xff]
        %v3139 = vld [vmem:[%s3121 + $0x88] sm:$0xff]
        %v3140 = vld [vmem:[%s3121 + $0x90] sm:$0xff]
        %v3141 = vld [vmem:[%s3121 + $0x98] sm:$0xff]
        %v3142 = vld [vmem:[%s3121 + $0xa0] sm:$0xff]
        %v3143 = vld [vmem:[%s3121 + $0xa8] sm:$0xff]
        %v3144 = vld [vmem:[%s3121 + $0xb0] sm:$0xff]
        %v3145 = vld [vmem:[%s3121 + $0xb8] sm:$0xff]
        %v3146 = vld [vmem:[%s3121 + $0xc0] sm:$0xff]
        %v3147 = vld [vmem:[%s3121 + $0xc8] sm:$0xff]
        %v3148 = vld [vmem:[%s3121 + $0xd0] sm:$0xff]
        %v3149 = vld [vmem:[%s3121 + $0xd8] sm:$0xff]
        %v3150 = vld [vmem:[%s3121 + $0xe0] sm:$0xff]
        %v3151 = vld [vmem:[%s3121 + $0xe8] sm:$0xff]
        %v3152 = vld [vmem:[%s3121 + $0xf0] sm:$0xff]
        %v3153 = vld [vmem:[%s3121 + $0xf8] sm:$0xff]
        %v3154 = vld [vmem:[%s3121 + $0x100] sm:$0xff]
        %v3155 = vld [vmem:[%s3121 + $0x108] sm:$0xff]
        %v3156 = vld [vmem:[%s3121 + $0x110] sm:$0xff]
        %v3157 = vld [vmem:[%s3121 + $0x118] sm:$0xff]
        %v3158 = vld [vmem:[%s3121 + $0x120] sm:$0xff]
        %v3159 = vld [vmem:[%s3121 + $0x128] sm:$0xff]
        %v3160 = vld [vmem:[%s3121 + $0x130] sm:$0xff]
        %v3161 = vld [vmem:[%s3121 + $0x138] sm:$0xff]
        %v3162 = vld [vmem:[%s3121 + $0x140] sm:$0xff]
        %v3163 = vld [vmem:[%s3121 + $0x148] sm:$0xff]
        %v3164 = vld [vmem:[%s3121 + $0x150] sm:$0xff]
        %v3165 = vld [vmem:[%s3121 + $0x158] sm:$0xff]
        %v3166 = vld [vmem:[%s3121 + $0x160] sm:$0xff]
        %v3167 = vld [vmem:[%s3121 + $0x168] sm:$0xff]
        %v3168 = vld [vmem:[%s3121 + $0x170] sm:$0xff]
        %v3169 = vld [vmem:[%s3121 + $0x178] sm:$0xff]
        %v3170 = vld [vmem:[%s3121 + $0x180] sm:$0xff]
        %v3171 = vld [vmem:[%s3121 + $0x188] sm:$0xff]
        %v3172 = vld [vmem:[%s3121 + $0x190] sm:$0xff]
        %v3173 = vld [vmem:[%s3121 + $0x198] sm:$0xff]
        %v3174 = vld [vmem:[%s3121 + $0x1a0] sm:$0xff]
        %v3175 = vld [vmem:[%s3121 + $0x1a8] sm:$0xff]
        %v3176 = vld [vmem:[%s3121 + $0x1b0] sm:$0xff]
        %v3177 = vld [vmem:[%s3121 + $0x1b8] sm:$0xff]
        %v3178 = vld [vmem:[%s3121 + $0x1c0] sm:$0xff]
        %v3179 = vld [vmem:[%s3121 + $0x1c8] sm:$0xff]
        %v3180 = vld [vmem:[%s3121 + $0x1d0] sm:$0xff]
        %v3181 = vld [vmem:[%s3121 + $0x1d8] sm:$0xff]
        %v3182 = vld [vmem:[%s3121 + $0x1e0] sm:$0xff]
        %v3183 = vld [vmem:[%s3121 + $0x1e8] sm:$0xff]
        %v3184 = vld [vmem:[%s3121 + $0x1f0] sm:$0xff]
        %v3185 = vld [vmem:[%s3121 + $0x1f8] sm:$0xff]
        %v3186 = vld [vmem:[%s3121 + $0x200] sm:$0xff]
        %v3187 = vld [vmem:[%s3121 + $0x208] sm:$0xff]
        %v3188 = vld [vmem:[%s3121 + $0x210] sm:$0xff]
        %v3189 = vld [vmem:[%s3121 + $0x218] sm:$0xff]
        %v3190 = vld [vmem:[%s3121 + $0x220] sm:$0xff]
        %v3191 = vld [vmem:[%s3121 + $0x228] sm:$0xff]
        %v3192 = vld [vmem:[%s3121 + $0x230] sm:$0xff]
        %v3193 = vld [vmem:[%s3121 + $0x238] sm:$0xff]
        %v3194 = vld [vmem:[%s3121 + $0x240] sm:$0xff]
        %v3195 = vld [vmem:[%s3121 + $0x248] sm:$0xff]
        %v3196 = vld [vmem:[%s3121 + $0x250] sm:$0xff]
        %v3197 = vld [vmem:[%s3121 + $0x258] sm:$0xff]
        %v3198 = vld [vmem:[%s3121 + $0x260] sm:$0xff]
        %v3199 = vld [vmem:[%s3121 + $0x268] sm:$0xff]
        %v3200 = vld [vmem:[%s3121 + $0x270] sm:$0xff]
        %v3201 = vld [vmem:[%s3121 + $0x278] sm:$0xff]
        %v3202 = vld [vmem:[%s3121 + $0x280] sm:$0xff]
        %v3203 = vld [vmem:[%s3121 + $0x288] sm:$0xff]
        %v3204 = vld [vmem:[%s3121 + $0x290] sm:$0xff]
        %v3205 = vld [vmem:[%s3121 + $0x298] sm:$0xff]
        %v3206 = vld [vmem:[%s3121 + $0x2a0] sm:$0xff]
        %v3207 = vld [vmem:[%s3121 + $0x2a8] sm:$0xff]
        %v3208 = vld [vmem:[%s3121 + $0x2b0] sm:$0xff]
        %v3209 = vld [vmem:[%s3121 + $0x2b8] sm:$0xff]
        %v3210 = vld [vmem:[%s3121 + $0x2c0] sm:$0xff]
        %v3211 = vld [vmem:[%s3121 + $0x2c8] sm:$0xff]
        %v3212 = vld [vmem:[%s3121 + $0x2d0] sm:$0xff]
        %v3213 = vld [vmem:[%s3121 + $0x2d8] sm:$0xff]
        %v3214 = vld [vmem:[%s3121 + $0x2e0] sm:$0xff]
        %v3215 = vld [vmem:[%s3121 + $0x2e8] sm:$0xff]
        %v3216 = vld [vmem:[%s3121 + $0x2f0] sm:$0xff]
        %v3217 = vld [vmem:[%s3121 + $0x2f8] sm:$0xff]
        %v3218 = vld [vmem:[%s3121 + $0x300] sm:$0xff]
        %v3219 = vld [vmem:[%s3121 + $0x308] sm:$0xff]
        %v3220 = vld [vmem:[%s3121 + $0x310] sm:$0xff]
        %v3221 = vld [vmem:[%s3121 + $0x318] sm:$0xff]
        %v3222 = vld [vmem:[%s3121 + $0x320] sm:$0xff]
        %v3223 = vld [vmem:[%s3121 + $0x328] sm:$0xff]
        %v3224 = vld [vmem:[%s3121 + $0x330] sm:$0xff]
        %v3225 = vld [vmem:[%s3121 + $0x338] sm:$0xff]
        %v3226 = vld [vmem:[%s3121 + $0x340] sm:$0xff]
        %v3227 = vld [vmem:[%s3121 + $0x348] sm:$0xff]
        %v3228 = vld [vmem:[%s3121 + $0x350] sm:$0xff]
        %v3229 = vld [vmem:[%s3121 + $0x358] sm:$0xff]
        %v3230 = vld [vmem:[%s3121 + $0x360] sm:$0xff]
        %v3231 = vld [vmem:[%s3121 + $0x368] sm:$0xff]
        %v3232 = vld [vmem:[%s3121 + $0x370] sm:$0xff]
        %v3233 = vld [vmem:[%s3121 + $0x378] sm:$0xff]
        %v3234 = vld [vmem:[%s3121 + $0x380] sm:$0xff]
        %v3235 = vld [vmem:[%s3121 + $0x388] sm:$0xff]
        %v3236 = vld [vmem:[%s3121 + $0x390] sm:$0xff]
        %v3237 = vld [vmem:[%s3121 + $0x398] sm:$0xff]
        %v3238 = vld [vmem:[%s3121 + $0x3a0] sm:$0xff]
        %v3239 = vld [vmem:[%s3121 + $0x3a8] sm:$0xff]
        %v3240 = vld [vmem:[%s3121 + $0x3b0] sm:$0xff]
        %v3241 = vld [vmem:[%s3121 + $0x3b8] sm:$0xff]
        %v3242 = vld [vmem:[%s3121 + $0x3c0] sm:$0xff]
        %v3243 = vld [vmem:[%s3121 + $0x3c8] sm:$0xff]
        %v3244 = vld [vmem:[%s3121 + $0x3d0] sm:$0xff]
        %v3245 = vld [vmem:[%s3121 + $0x3d8] sm:$0xff]
        %v3246 = vld [vmem:[%s3121 + $0x3e0] sm:$0xff]
        %v3247 = vld [vmem:[%s3121 + $0x3e8] sm:$0xff]
        %v3248 = vld [vmem:[%s3121 + $0x3f0] sm:$0xff]
        %v3249 = vld [vmem:[%s3121 + $0x3f8] sm:$0xff]
        %v3274 = vunpack.c.l.b16 %v3097
        %v3275 = vunpack.c.h.b16 %v3097
        %v3276 = vunpack.c.l.b16 %v3098
        %v3277 = vunpack.c.h.b16 %v3098
        %v3278 = vunpack.c.l.b16 %v3099
        %v3279 = vunpack.c.h.b16 %v3099
        %v3280 = vunpack.c.l.b16 %v3100
        %v3281 = vunpack.c.h.b16 %v3100
        %v3282 = vunpack.c.l.b16 %v3101
        %v3283 = vunpack.c.h.b16 %v3101
        %v3284 = vunpack.c.l.b16 %v3102
        %v3285 = vunpack.c.h.b16 %v3102
        %v3286 = vunpack.c.l.b16 %v3103
        %v3287 = vunpack.c.h.b16 %v3103
        %v3288 = vunpack.c.l.b16 %v3104
        %v3289 = vunpack.c.h.b16 %v3104
        %v3290 = vunpack.c.l.b16 %v3105
        %v3291 = vunpack.c.h.b16 %v3105
        %v3292 = vunpack.c.l.b16 %v3106
        %v3293 = vunpack.c.h.b16 %v3106
        %v3294 = vunpack.c.l.b16 %v3107
        %v3295 = vunpack.c.h.b16 %v3107
        %v3296 = vunpack.c.l.b16 %v3108
        %v3297 = vunpack.c.h.b16 %v3108
        %v3298 = vunpack.c.l.b16 %v3109
        %v3299 = vunpack.c.h.b16 %v3109
        %v3300 = vunpack.c.l.b16 %v3110
        %v3301 = vunpack.c.h.b16 %v3110
        %v3302 = vunpack.c.l.b16 %v3111
        %v3303 = vunpack.c.h.b16 %v3111
        %v3304 = vunpack.c.l.b16 %v3112
        %v3305 = vunpack.c.h.b16 %v3112
        %v3306 = vunpack.c.l.b16 %v3113
        %v3307 = vunpack.c.h.b16 %v3113
        %v3308 = vunpack.c.l.b16 %v3114
        %v3309 = vunpack.c.h.b16 %v3114
        %v3310 = vunpack.c.l.b16 %v3115
        %v3311 = vunpack.c.h.b16 %v3115
        %v3312 = vunpack.c.l.b16 %v3116
        %v3313 = vunpack.c.h.b16 %v3116
        %v3314 = vunpack.c.l.b16 %v3117
        %v3315 = vunpack.c.h.b16 %v3117
        %v3316 = vunpack.c.l.b16 %v3118
        %v3317 = vunpack.c.h.b16 %v3118
        %v3318 = vunpack.c.l.b16 %v3119
        %v3319 = vunpack.c.h.b16 %v3119
        %v3320 = vunpack.c.l.b16 %v3120
        %v3321 = vunpack.c.h.b16 %v3120
        %v3322 = vpack.c.b16 %v3278, %v3274
        %v3323 = vpack.c.b16 %v3279, %v3275
        %v3324 = vpack.c.b16 %v3280, %v3276
        %v3325 = vpack.c.b16 %v3281, %v3277
        %v3326 = vpack.c.b16 %v3286, %v3282
        %v3327 = vpack.c.b16 %v3287, %v3283
        %v3328 = vpack.c.b16 %v3288, %v3284
        %v3329 = vpack.c.b16 %v3289, %v3285
        %v3330 = vpack.c.b16 %v3294, %v3290
        %v3331 = vpack.c.b16 %v3295, %v3291
        %v3332 = vpack.c.b16 %v3296, %v3292
        %v3333 = vpack.c.b16 %v3297, %v3293
        %v3334 = vpack.c.b16 %v3302, %v3298
        %v3335 = vpack.c.b16 %v3303, %v3299
        %v3336 = vpack.c.b16 %v3304, %v3300
        %v3337 = vpack.c.b16 %v3305, %v3301
        %v3338 = vpack.c.b16 %v3310, %v3306
        %v3339 = vpack.c.b16 %v3311, %v3307
        %v3340 = vpack.c.b16 %v3312, %v3308
        %v3341 = vpack.c.b16 %v3313, %v3309
        %v3342 = vpack.c.b16 %v3318, %v3314
        %v3343 = vpack.c.b16 %v3319, %v3315
        %v3344 = vpack.c.b16 %v3320, %v3316
        %v3345 = vpack.c.b16 %v3321, %v3317
        %v3498 = vunpack.c.l.b16 %v3122
        %v3499 = vunpack.c.h.b16 %v3122
        %v3500 = vunpack.c.l.b16 %v3123
        %v3501 = vunpack.c.h.b16 %v3123
        %v3502 = vunpack.c.l.b16 %v3124
        %v3503 = vunpack.c.h.b16 %v3124
        %v3504 = vunpack.c.l.b16 %v3125
        %v3505 = vunpack.c.h.b16 %v3125
        %v3506 = vunpack.c.l.b16 %v3126
        %v3507 = vunpack.c.h.b16 %v3126
        %v3508 = vunpack.c.l.b16 %v3127
        %v3509 = vunpack.c.h.b16 %v3127
        %v3510 = vunpack.c.l.b16 %v3128
        %v3511 = vunpack.c.h.b16 %v3128
        %v3512 = vunpack.c.l.b16 %v3129
        %v3513 = vunpack.c.h.b16 %v3129
        %v3514 = vunpack.c.l.b16 %v3130
        %v3515 = vunpack.c.h.b16 %v3130
        %v3516 = vunpack.c.l.b16 %v3131
        %v3517 = vunpack.c.h.b16 %v3131
        %v3518 = vunpack.c.l.b16 %v3132
        %v3519 = vunpack.c.h.b16 %v3132
        %v3520 = vunpack.c.l.b16 %v3133
        %v3521 = vunpack.c.h.b16 %v3133
        %v3522 = vunpack.c.l.b16 %v3134
        %v3523 = vunpack.c.h.b16 %v3134
        %v3524 = vunpack.c.l.b16 %v3135
        %v3525 = vunpack.c.h.b16 %v3135
        %v3526 = vunpack.c.l.b16 %v3136
        %v3527 = vunpack.c.h.b16 %v3136
        %v3528 = vunpack.c.l.b16 %v3137
        %v3529 = vunpack.c.h.b16 %v3137
        %v3530 = vunpack.c.l.b16 %v3138
        %v3531 = vunpack.c.h.b16 %v3138
        %v3532 = vunpack.c.l.b16 %v3139
        %v3533 = vunpack.c.h.b16 %v3139
        %v3534 = vunpack.c.l.b16 %v3140
        %v3535 = vunpack.c.h.b16 %v3140
        %v3536 = vunpack.c.l.b16 %v3141
        %v3537 = vunpack.c.h.b16 %v3141
        %v3538 = vunpack.c.l.b16 %v3142
        %v3539 = vunpack.c.h.b16 %v3142
        %v3540 = vunpack.c.l.b16 %v3143
        %v3541 = vunpack.c.h.b16 %v3143
        %v3542 = vunpack.c.l.b16 %v3144
        %v3543 = vunpack.c.h.b16 %v3144
        %v3544 = vunpack.c.l.b16 %v3145
        %v3545 = vunpack.c.h.b16 %v3145
        %v3546 = vunpack.c.l.b16 %v3146
        %v3547 = vunpack.c.h.b16 %v3146
        %v3548 = vunpack.c.l.b16 %v3147
        %v3549 = vunpack.c.h.b16 %v3147
        %v3550 = vunpack.c.l.b16 %v3148
        %v3551 = vunpack.c.h.b16 %v3148
        %v3552 = vunpack.c.l.b16 %v3149
        %v3553 = vunpack.c.h.b16 %v3149
        %v3554 = vunpack.c.l.b16 %v3150
        %v3555 = vunpack.c.h.b16 %v3150
        %v3556 = vunpack.c.l.b16 %v3151
        %v3557 = vunpack.c.h.b16 %v3151
        %v3558 = vunpack.c.l.b16 %v3152
        %v3559 = vunpack.c.h.b16 %v3152
        %v3560 = vunpack.c.l.b16 %v3153
        %v3561 = vunpack.c.h.b16 %v3153
        %v3562 = vunpack.c.l.b16 %v3154
        %v3563 = vunpack.c.h.b16 %v3154
        %v3564 = vunpack.c.l.b16 %v3155
        %v3565 = vunpack.c.h.b16 %v3155
        %v3566 = vunpack.c.l.b16 %v3156
        %v3567 = vunpack.c.h.b16 %v3156
        %v3568 = vunpack.c.l.b16 %v3157
        %v3569 = vunpack.c.h.b16 %v3157
        %v3570 = vunpack.c.l.b16 %v3158
        %v3571 = vunpack.c.h.b16 %v3158
        %v3572 = vunpack.c.l.b16 %v3159
        %v3573 = vunpack.c.h.b16 %v3159
        %v3574 = vunpack.c.l.b16 %v3160
        %v3575 = vunpack.c.h.b16 %v3160
        %v3576 = vunpack.c.l.b16 %v3161
        %v3577 = vunpack.c.h.b16 %v3161
        %v3578 = vunpack.c.l.b16 %v3162
        %v3579 = vunpack.c.h.b16 %v3162
        %v3580 = vunpack.c.l.b16 %v3163
        %v3581 = vunpack.c.h.b16 %v3163
        %v3582 = vunpack.c.l.b16 %v3164
        %v3583 = vunpack.c.h.b16 %v3164
        %v3584 = vunpack.c.l.b16 %v3165
        %v3585 = vunpack.c.h.b16 %v3165
        %v3586 = vunpack.c.l.b16 %v3166
        %v3587 = vunpack.c.h.b16 %v3166
        %v3588 = vunpack.c.l.b16 %v3167
        %v3589 = vunpack.c.h.b16 %v3167
        %v3590 = vunpack.c.l.b16 %v3168
        %v3591 = vunpack.c.h.b16 %v3168
        %v3592 = vunpack.c.l.b16 %v3169
        %v3593 = vunpack.c.h.b16 %v3169
        %v3594 = vunpack.c.l.b16 %v3170
        %v3595 = vunpack.c.h.b16 %v3170
        %v3596 = vunpack.c.l.b16 %v3171
        %v3597 = vunpack.c.h.b16 %v3171
        %v3598 = vunpack.c.l.b16 %v3172
        %v3599 = vunpack.c.h.b16 %v3172
        %v3600 = vunpack.c.l.b16 %v3173
        %v3601 = vunpack.c.h.b16 %v3173
        %v3602 = vunpack.c.l.b16 %v3174
        %v3603 = vunpack.c.h.b16 %v3174
        %v3604 = vunpack.c.l.b16 %v3175
        %v3605 = vunpack.c.h.b16 %v3175
        %v3606 = vunpack.c.l.b16 %v3176
        %v3607 = vunpack.c.h.b16 %v3176
        %v3608 = vunpack.c.l.b16 %v3177
        %v3609 = vunpack.c.h.b16 %v3177
        %v3610 = vunpack.c.l.b16 %v3178
        %v3611 = vunpack.c.h.b16 %v3178
        %v3612 = vunpack.c.l.b16 %v3179
        %v3613 = vunpack.c.h.b16 %v3179
        %v3614 = vunpack.c.l.b16 %v3180
        %v3615 = vunpack.c.h.b16 %v3180
        %v3616 = vunpack.c.l.b16 %v3181
        %v3617 = vunpack.c.h.b16 %v3181
        %v3618 = vunpack.c.l.b16 %v3182
        %v3619 = vunpack.c.h.b16 %v3182
        %v3620 = vunpack.c.l.b16 %v3183
        %v3621 = vunpack.c.h.b16 %v3183
        %v3622 = vunpack.c.l.b16 %v3184
        %v3623 = vunpack.c.h.b16 %v3184
        %v3624 = vunpack.c.l.b16 %v3185
        %v3625 = vunpack.c.h.b16 %v3185
        %v3626 = vunpack.c.l.b16 %v3186
        %v3627 = vunpack.c.h.b16 %v3186
        %v3628 = vunpack.c.l.b16 %v3187
        %v3629 = vunpack.c.h.b16 %v3187
        %v3630 = vunpack.c.l.b16 %v3188
        %v3631 = vunpack.c.h.b16 %v3188
        %v3632 = vunpack.c.l.b16 %v3189
        %v3633 = vunpack.c.h.b16 %v3189
        %v3634 = vunpack.c.l.b16 %v3190
        %v3635 = vunpack.c.h.b16 %v3190
        %v3636 = vunpack.c.l.b16 %v3191
        %v3637 = vunpack.c.h.b16 %v3191
        %v3638 = vunpack.c.l.b16 %v3192
        %v3639 = vunpack.c.h.b16 %v3192
        %v3640 = vunpack.c.l.b16 %v3193
        %v3641 = vunpack.c.h.b16 %v3193
        %v3642 = vunpack.c.l.b16 %v3194
        %v3643 = vunpack.c.h.b16 %v3194
        %v3644 = vunpack.c.l.b16 %v3195
        %v3645 = vunpack.c.h.b16 %v3195
        %v3646 = vunpack.c.l.b16 %v3196
        %v3647 = vunpack.c.h.b16 %v3196
        %v3648 = vunpack.c.l.b16 %v3197
        %v3649 = vunpack.c.h.b16 %v3197
        %v3650 = vunpack.c.l.b16 %v3198
        %v3651 = vunpack.c.h.b16 %v3198
        %v3652 = vunpack.c.l.b16 %v3199
        %v3653 = vunpack.c.h.b16 %v3199
        %v3654 = vunpack.c.l.b16 %v3200
        %v3655 = vunpack.c.h.b16 %v3200
        %v3656 = vunpack.c.l.b16 %v3201
        %v3657 = vunpack.c.h.b16 %v3201
        %v3658 = vunpack.c.l.b16 %v3202
        %v3659 = vunpack.c.h.b16 %v3202
        %v3660 = vunpack.c.l.b16 %v3203
        %v3661 = vunpack.c.h.b16 %v3203
        %v3662 = vunpack.c.l.b16 %v3204
        %v3663 = vunpack.c.h.b16 %v3204
        %v3664 = vunpack.c.l.b16 %v3205
        %v3665 = vunpack.c.h.b16 %v3205
        %v3666 = vunpack.c.l.b16 %v3206
        %v3667 = vunpack.c.h.b16 %v3206
        %v3668 = vunpack.c.l.b16 %v3207
        %v3669 = vunpack.c.h.b16 %v3207
        %v3670 = vunpack.c.l.b16 %v3208
        %v3671 = vunpack.c.h.b16 %v3208
        %v3672 = vunpack.c.l.b16 %v3209
        %v3673 = vunpack.c.h.b16 %v3209
        %v3674 = vunpack.c.l.b16 %v3210
        %v3675 = vunpack.c.h.b16 %v3210
        %v3676 = vunpack.c.l.b16 %v3211
        %v3677 = vunpack.c.h.b16 %v3211
        %v3678 = vunpack.c.l.b16 %v3212
        %v3679 = vunpack.c.h.b16 %v3212
        %v3680 = vunpack.c.l.b16 %v3213
        %v3681 = vunpack.c.h.b16 %v3213
        %v3682 = vunpack.c.l.b16 %v3214
        %v3683 = vunpack.c.h.b16 %v3214
        %v3684 = vunpack.c.l.b16 %v3215
        %v3685 = vunpack.c.h.b16 %v3215
        %v3686 = vunpack.c.l.b16 %v3216
        %v3687 = vunpack.c.h.b16 %v3216
        %v3688 = vunpack.c.l.b16 %v3217
        %v3689 = vunpack.c.h.b16 %v3217
        %v3690 = vunpack.c.l.b16 %v3218
        %v3691 = vunpack.c.h.b16 %v3218
        %v3692 = vunpack.c.l.b16 %v3219
        %v3693 = vunpack.c.h.b16 %v3219
        %v3694 = vunpack.c.l.b16 %v3220
        %v3695 = vunpack.c.h.b16 %v3220
        %v3696 = vunpack.c.l.b16 %v3221
        %v3697 = vunpack.c.h.b16 %v3221
        %v3698 = vunpack.c.l.b16 %v3222
        %v3699 = vunpack.c.h.b16 %v3222
        %v3700 = vunpack.c.l.b16 %v3223
        %v3701 = vunpack.c.h.b16 %v3223
        %v3702 = vunpack.c.l.b16 %v3224
        %v3703 = vunpack.c.h.b16 %v3224
        %v3704 = vunpack.c.l.b16 %v3225
        %v3705 = vunpack.c.h.b16 %v3225
        %v3706 = vunpack.c.l.b16 %v3226
        %v3707 = vunpack.c.h.b16 %v3226
        %v3708 = vunpack.c.l.b16 %v3227
        %v3709 = vunpack.c.h.b16 %v3227
        %v3710 = vunpack.c.l.b16 %v3228
        %v3711 = vunpack.c.h.b16 %v3228
        %v3712 = vunpack.c.l.b16 %v3229
        %v3713 = vunpack.c.h.b16 %v3229
        %v3714 = vunpack.c.l.b16 %v3230
        %v3715 = vunpack.c.h.b16 %v3230
        %v3716 = vunpack.c.l.b16 %v3231
        %v3717 = vunpack.c.h.b16 %v3231
        %v3718 = vunpack.c.l.b16 %v3232
        %v3719 = vunpack.c.h.b16 %v3232
        %v3720 = vunpack.c.l.b16 %v3233
        %v3721 = vunpack.c.h.b16 %v3233
        %v3722 = vunpack.c.l.b16 %v3234
        %v3723 = vunpack.c.h.b16 %v3234
        %v3724 = vunpack.c.l.b16 %v3235
        %v3725 = vunpack.c.h.b16 %v3235
        %v3726 = vunpack.c.l.b16 %v3236
        %v3727 = vunpack.c.h.b16 %v3236
        %v3728 = vunpack.c.l.b16 %v3237
        %v3729 = vunpack.c.h.b16 %v3237
        %v3730 = vunpack.c.l.b16 %v3238
        %v3731 = vunpack.c.h.b16 %v3238
        %v3732 = vunpack.c.l.b16 %v3239
        %v3733 = vunpack.c.h.b16 %v3239
        %v3734 = vunpack.c.l.b16 %v3240
        %v3735 = vunpack.c.h.b16 %v3240
        %v3736 = vunpack.c.l.b16 %v3241
        %v3737 = vunpack.c.h.b16 %v3241
        %v3738 = vunpack.c.l.b16 %v3242
        %v3739 = vunpack.c.h.b16 %v3242
        %v3740 = vunpack.c.l.b16 %v3243
        %v3741 = vunpack.c.h.b16 %v3243
        %v3742 = vunpack.c.l.b16 %v3244
        %v3743 = vunpack.c.h.b16 %v3244
        %v3744 = vunpack.c.l.b16 %v3245
        %v3745 = vunpack.c.h.b16 %v3245
        %v3746 = vunpack.c.l.b16 %v3246
        %v3747 = vunpack.c.h.b16 %v3246
        %v3748 = vunpack.c.l.b16 %v3247
        %v3749 = vunpack.c.h.b16 %v3247
        %v3750 = vunpack.c.l.b16 %v3248
        %v3751 = vunpack.c.h.b16 %v3248
        %v3752 = vunpack.c.l.b16 %v3249
        %v3753 = vunpack.c.h.b16 %v3249
        %v3754 = vpack.c.b16 %v3502, %v3498
        %v3755 = vpack.c.b16 %v3503, %v3499
        %v3756 = vpack.c.b16 %v3504, %v3500
        %v3757 = vpack.c.b16 %v3505, %v3501
        %v3758 = vpack.c.b16 %v3510, %v3506
        %v3759 = vpack.c.b16 %v3511, %v3507
        %v3760 = vpack.c.b16 %v3512, %v3508
        %v3761 = vpack.c.b16 %v3513, %v3509
        %v3762 = vpack.c.b16 %v3518, %v3514
        %v3763 = vpack.c.b16 %v3519, %v3515
        %v3764 = vpack.c.b16 %v3520, %v3516
        %v3765 = vpack.c.b16 %v3521, %v3517
        %v3766 = vpack.c.b16 %v3526, %v3522
        %v3767 = vpack.c.b16 %v3527, %v3523
        %v3768 = vpack.c.b16 %v3528, %v3524
        %v3769 = vpack.c.b16 %v3529, %v3525
        %v3770 = vpack.c.b16 %v3534, %v3530
        %v3771 = vpack.c.b16 %v3535, %v3531
        %v3772 = vpack.c.b16 %v3536, %v3532
        %v3773 = vpack.c.b16 %v3537, %v3533
        %v3774 = vpack.c.b16 %v3542, %v3538
        %v3775 = vpack.c.b16 %v3543, %v3539
        %v3776 = vpack.c.b16 %v3544, %v3540
        %v3777 = vpack.c.b16 %v3545, %v3541
        %v3778 = vpack.c.b16 %v3550, %v3546
        %v3779 = vpack.c.b16 %v3551, %v3547
        %v3780 = vpack.c.b16 %v3552, %v3548
        %v3781 = vpack.c.b16 %v3553, %v3549
        %v3782 = vpack.c.b16 %v3558, %v3554
        %v3783 = vpack.c.b16 %v3559, %v3555
        %v3784 = vpack.c.b16 %v3560, %v3556
        %v3785 = vpack.c.b16 %v3561, %v3557
        %v3786 = vpack.c.b16 %v3566, %v3562
        %v3787 = vpack.c.b16 %v3567, %v3563
        %v3788 = vpack.c.b16 %v3568, %v3564
        %v3789 = vpack.c.b16 %v3569, %v3565
        %v3790 = vpack.c.b16 %v3574, %v3570
        %v3791 = vpack.c.b16 %v3575, %v3571
        %v3792 = vpack.c.b16 %v3576, %v3572
        %v3793 = vpack.c.b16 %v3577, %v3573
        %v3794 = vpack.c.b16 %v3582, %v3578
        %v3795 = vpack.c.b16 %v3583, %v3579
        %v3796 = vpack.c.b16 %v3584, %v3580
        %v3797 = vpack.c.b16 %v3585, %v3581
        %v3798 = vpack.c.b16 %v3590, %v3586
        %v3799 = vpack.c.b16 %v3591, %v3587
        %v3800 = vpack.c.b16 %v3592, %v3588
        %v3801 = vpack.c.b16 %v3593, %v3589
        %v3802 = vpack.c.b16 %v3598, %v3594
        %v3803 = vpack.c.b16 %v3599, %v3595
        %v3804 = vpack.c.b16 %v3600, %v3596
        %v3805 = vpack.c.b16 %v3601, %v3597
        %v3806 = vpack.c.b16 %v3606, %v3602
        %v3807 = vpack.c.b16 %v3607, %v3603
        %v3808 = vpack.c.b16 %v3608, %v3604
        %v3809 = vpack.c.b16 %v3609, %v3605
        %v3810 = vpack.c.b16 %v3614, %v3610
        %v3811 = vpack.c.b16 %v3615, %v3611
        %v3812 = vpack.c.b16 %v3616, %v3612
        %v3813 = vpack.c.b16 %v3617, %v3613
        %v3814 = vpack.c.b16 %v3622, %v3618
        %v3815 = vpack.c.b16 %v3623, %v3619
        %v3816 = vpack.c.b16 %v3624, %v3620
        %v3817 = vpack.c.b16 %v3625, %v3621
        %v3818 = vpack.c.b16 %v3630, %v3626
        %v3819 = vpack.c.b16 %v3631, %v3627
        %v3820 = vpack.c.b16 %v3632, %v3628
        %v3821 = vpack.c.b16 %v3633, %v3629
        %v3822 = vpack.c.b16 %v3638, %v3634
        %v3823 = vpack.c.b16 %v3639, %v3635
        %v3824 = vpack.c.b16 %v3640, %v3636
        %v3825 = vpack.c.b16 %v3641, %v3637
        %v3826 = vpack.c.b16 %v3646, %v3642
        %v3827 = vpack.c.b16 %v3647, %v3643
        %v3828 = vpack.c.b16 %v3648, %v3644
        %v3829 = vpack.c.b16 %v3649, %v3645
        %v3830 = vpack.c.b16 %v3654, %v3650
        %v3831 = vpack.c.b16 %v3655, %v3651
        %v3832 = vpack.c.b16 %v3656, %v3652
        %v3833 = vpack.c.b16 %v3657, %v3653
        %v3834 = vpack.c.b16 %v3662, %v3658
        %v3835 = vpack.c.b16 %v3663, %v3659
        %v3836 = vpack.c.b16 %v3664, %v3660
        %v3837 = vpack.c.b16 %v3665, %v3661
        %v3838 = vpack.c.b16 %v3670, %v3666
        %v3839 = vpack.c.b16 %v3671, %v3667
        %v3840 = vpack.c.b16 %v3672, %v3668
        %v3841 = vpack.c.b16 %v3673, %v3669
        %v3842 = vpack.c.b16 %v3678, %v3674
        %v3843 = vpack.c.b16 %v3679, %v3675
        %v3844 = vpack.c.b16 %v3680, %v3676
        %v3845 = vpack.c.b16 %v3681, %v3677
        %v3846 = vpack.c.b16 %v3686, %v3682
        %v3847 = vpack.c.b16 %v3687, %v3683
        %v3848 = vpack.c.b16 %v3688, %v3684
        %v3849 = vpack.c.b16 %v3689, %v3685
        %v3850 = vpack.c.b16 %v3694, %v3690
        %v3851 = vpack.c.b16 %v3695, %v3691
        %v3852 = vpack.c.b16 %v3696, %v3692
        %v3853 = vpack.c.b16 %v3697, %v3693
        %v3854 = vpack.c.b16 %v3702, %v3698
        %v3855 = vpack.c.b16 %v3703, %v3699
        %v3856 = vpack.c.b16 %v3704, %v3700
        %v3857 = vpack.c.b16 %v3705, %v3701
        %v3858 = vpack.c.b16 %v3710, %v3706
        %v3859 = vpack.c.b16 %v3711, %v3707
        %v3860 = vpack.c.b16 %v3712, %v3708
        %v3861 = vpack.c.b16 %v3713, %v3709
        %v3862 = vpack.c.b16 %v3718, %v3714
        %v3863 = vpack.c.b16 %v3719, %v3715
        %v3864 = vpack.c.b16 %v3720, %v3716
        %v3865 = vpack.c.b16 %v3721, %v3717
        %v3866 = vpack.c.b16 %v3726, %v3722
        %v3867 = vpack.c.b16 %v3727, %v3723
        %v3868 = vpack.c.b16 %v3728, %v3724
        %v3869 = vpack.c.b16 %v3729, %v3725
        %v3870 = vpack.c.b16 %v3734, %v3730
        %v3871 = vpack.c.b16 %v3735, %v3731
        %v3872 = vpack.c.b16 %v3736, %v3732
        %v3873 = vpack.c.b16 %v3737, %v3733
        %v3874 = vpack.c.b16 %v3742, %v3738
        %v3875 = vpack.c.b16 %v3743, %v3739
        %v3876 = vpack.c.b16 %v3744, %v3740
        %v3877 = vpack.c.b16 %v3745, %v3741
        %v3878 = vpack.c.b16 %v3750, %v3746
        %v3879 = vpack.c.b16 %v3751, %v3747
        %v3880 = vpack.c.b16 %v3752, %v3748
        %v3881 = vpack.c.b16 %v3753, %v3749
        %4010 = vmatprep.subr.bf16.mxu0 %v3783
        %4011 = vmatpush1.bf16.msra.mxu0 %v3782
        %4012 = vmatprep.subr.bf16.mxu0 %v3779
        %4013 = vmatpush1.bf16.msra.mxu0 %v3778
        %4014 = vmatprep.subr.bf16.mxu0 %v3775
        %4015 = vmatpush1.bf16.msra.mxu0 %v3774
        %4016 = vmatprep.subr.bf16.mxu0 %v3771
        %4017 = vmatpush1.bf16.msra.mxu0 %v3770
        %4018 = vmatprep.subr.bf16.mxu0 %v3767
        %4019 = vmatpush1.bf16.msra.mxu0 %v3766
        %4020 = vmatprep.subr.bf16.mxu0 %v3763
        %4021 = vmatpush1.bf16.msra.mxu0 %v3762
        %4022 = vmatprep.subr.bf16.mxu0 %v3759
        %4023 = vmatpush1.bf16.msra.mxu0 %v3758
        %4024 = vmatprep.subr.bf16.mxu0 %v3755
        %4025 = vmatpush1.bf16.msra.mxu0 %v3754
        %4026 = vmatprep.subr.bf16.mxu0 %v3815
        %4027 = vmatpush2.bf16.msra.mxu0 %v3814
        %4028 = vmatprep.subr.bf16.mxu0 %v3811
        %4029 = vmatpush2.bf16.msra.mxu0 %v3810
        %4030 = vmatprep.subr.bf16.mxu0 %v3807
        %4031 = vmatpush2.bf16.msra.mxu0 %v3806
        %4032 = vmatprep.subr.bf16.mxu0 %v3803
        %4033 = vmatpush2.bf16.msra.mxu0 %v3802
        %4034 = vmatprep.subr.bf16.mxu0 %v3799
        %4035 = vmatpush2.bf16.msra.mxu0 %v3798
        %4036 = vmatprep.subr.bf16.mxu0 %v3795
        %4037 = vmatpush2.bf16.msra.mxu0 %v3794
        %4038 = vmatprep.subr.bf16.mxu0 %v3791
        %4039 = vmatpush2.bf16.msra.mxu0 %v3790
        %4040 = vmatprep.subr.bf16.mxu0 %v3787
        %4041 = vmatpush2.bf16.msra.mxu0 %v3786
        %4042 = vmatprep.mubr.bf16.mxu0 %v3323
        %4043 = vmatmul.mubr.bf16.gmra.mxu0 %v3322
        %v4044 = vpop.f32.mrf.mxu0
        %v4045 = vadd.f32 0.0, %v4044
        %v4046 = vpop.f32.mrf.mxu0
        %v4047 = vadd.f32 0.0, %v4046
        %v4048 = vpop.f32.mrf.mxu0
        %v4049 = vadd.f32 0.0, %v4048
        %v4050 = vpop.f32.mrf.mxu0
        %v4051 = vadd.f32 0.0, %v4050
        %4052 = vmatprep.mubr.bf16.mxu0 %v3327
        %4053 = vmatmul.mubr.bf16.gmra.mxu0 %v3326
        %v4054 = vpop.f32.mrf.mxu0
        %v4055 = vadd.f32 0.0, %v4054
        %v4056 = vpop.f32.mrf.mxu0
        %v4057 = vadd.f32 0.0, %v4056
        %v4058 = vpop.f32.mrf.mxu0
        %v4059 = vadd.f32 0.0, %v4058
        %v4060 = vpop.f32.mrf.mxu0
        %v4061 = vadd.f32 0.0, %v4060
        %4062 = vmatprep.mubr.bf16.mxu0 %v3331
        %4063 = vmatmul.mubr.bf16.gmra.mxu0 %v3330
        %v4064 = vpop.f32.mrf.mxu0
        %v4065 = vadd.f32 0.0, %v4064
        %v4066 = vpop.f32.mrf.mxu0
        %v4067 = vadd.f32 0.0, %v4066
        %v4068 = vpop.f32.mrf.mxu0
        %v4069 = vadd.f32 0.0, %v4068
        %v4070 = vpop.f32.mrf.mxu0
        %v4071 = vadd.f32 0.0, %v4070
        %4072 = vmatprep.mubr.bf16.mxu0 %v3335
        %4073 = vmatmul.mubr.bf16.gmra.mxu0 %v3334
        %v4074 = vpop.f32.mrf.mxu0
        %v4075 = vadd.f32 0.0, %v4074
        %v4076 = vpop.f32.mrf.mxu0
        %v4077 = vadd.f32 0.0, %v4076
        %v4078 = vpop.f32.mrf.mxu0
        %v4079 = vadd.f32 0.0, %v4078
        %v4080 = vpop.f32.mrf.mxu0
        %v4081 = vadd.f32 0.0, %v4080
        %4082 = vmatprep.mubr.bf16.mxu0 %v3339
        %4083 = vmatmul.mubr.bf16.gmra.mxu0 %v3338
        %v4084 = vpop.f32.mrf.mxu0
        %v4085 = vadd.f32 0.0, %v4084
        %v4086 = vpop.f32.mrf.mxu0
        %v4087 = vadd.f32 0.0, %v4086
        %v4088 = vpop.f32.mrf.mxu0
        %v4089 = vadd.f32 0.0, %v4088
        %v4090 = vpop.f32.mrf.mxu0
        %v4091 = vadd.f32 0.0, %v4090
        %4092 = vmatprep.mubr.bf16.mxu0 %v3343
        %4093 = vmatmul.mubr.bf16.gmra.mxu0 %v3342
        %v4094 = vpop.f32.mrf.mxu0
        %v4095 = vadd.f32 0.0, %v4094
        %v4096 = vpop.f32.mrf.mxu0
        %v4097 = vadd.f32 0.0, %v4096
        %v4098 = vpop.f32.mrf.mxu0
        %v4099 = vadd.f32 0.0, %v4098
        %v4100 = vpop.f32.mrf.mxu0
        %v4101 = vadd.f32 0.0, %v4100
        %4102 = vdwg.mxu0
        %4103 = vmatprep.subr.bf16.mxu0 %v3847
        %4104 = vmatpush1.bf16.msra.mxu0 %v3846
        %4105 = vmatprep.subr.bf16.mxu0 %v3843
        %4106 = vmatpush1.bf16.msra.mxu0 %v3842
        %4107 = vmatprep.subr.bf16.mxu0 %v3839
        %4108 = vmatpush1.bf16.msra.mxu0 %v3838
        %4109 = vmatprep.subr.bf16.mxu0 %v3835
        %4110 = vmatpush1.bf16.msra.mxu0 %v3834
        %4111 = vmatprep.subr.bf16.mxu0 %v3831
        %4112 = vmatpush1.bf16.msra.mxu0 %v3830
        %4113 = vmatprep.subr.bf16.mxu0 %v3827
        %4114 = vmatpush1.bf16.msra.mxu0 %v3826
        %4115 = vmatprep.subr.bf16.mxu0 %v3823
        %4116 = vmatpush1.bf16.msra.mxu0 %v3822
        %4117 = vmatprep.subr.bf16.mxu0 %v3819
        %4118 = vmatpush1.bf16.msra.mxu0 %v3818
        %4119 = vmatprep.subr.bf16.mxu0 %v3879
        %4120 = vmatpush2.bf16.msra.mxu0 %v3878
        %4121 = vmatprep.subr.bf16.mxu0 %v3875
        %4122 = vmatpush2.bf16.msra.mxu0 %v3874
        %4123 = vmatprep.subr.bf16.mxu0 %v3871
        %4124 = vmatpush2.bf16.msra.mxu0 %v3870
        %4125 = vmatprep.subr.bf16.mxu0 %v3867
        %4126 = vmatpush2.bf16.msra.mxu0 %v3866
        %4127 = vmatprep.subr.bf16.mxu0 %v3863
        %4128 = vmatpush2.bf16.msra.mxu0 %v3862
        %4129 = vmatprep.subr.bf16.mxu0 %v3859
        %4130 = vmatpush2.bf16.msra.mxu0 %v3858
        %4131 = vmatprep.subr.bf16.mxu0 %v3855
        %4132 = vmatpush2.bf16.msra.mxu0 %v3854
        %4133 = vmatprep.subr.bf16.mxu0 %v3851
        %4134 = vmatpush2.bf16.msra.mxu0 %v3850
        %4135 = vmatprep.mubr.bf16.mxu0 %v3325
        %4136 = vmatmul.mubr.bf16.gmra.mxu0 %v3324
        %v4137 = vpop.f32.mrf.mxu0
        %v4138 = vadd.f32 %v4045, %v4137
        %v4139 = vpop.f32.mrf.mxu0
        %v4140 = vadd.f32 %v4047, %v4139
        %v4141 = vpop.f32.mrf.mxu0
        %v4142 = vadd.f32 %v4049, %v4141
        %v4143 = vpop.f32.mrf.mxu0
        %v4144 = vadd.f32 %v4051, %v4143
        %4145 = vmatprep.mubr.bf16.mxu0 %v3329
        %4146 = vmatmul.mubr.bf16.gmra.mxu0 %v3328
        %v4147 = vpop.f32.mrf.mxu0
        %v4148 = vadd.f32 %v4055, %v4147
        %v4149 = vpop.f32.mrf.mxu0
        %v4150 = vadd.f32 %v4057, %v4149
        %v4151 = vpop.f32.mrf.mxu0
        %v4152 = vadd.f32 %v4059, %v4151
        %v4153 = vpop.f32.mrf.mxu0
        %v4154 = vadd.f32 %v4061, %v4153
        %4155 = vmatprep.mubr.bf16.mxu0 %v3333
        %4156 = vmatmul.mubr.bf16.gmra.mxu0 %v3332
        %v4157 = vpop.f32.mrf.mxu0
        %v4158 = vadd.f32 %v4065, %v4157
        %v4159 = vpop.f32.mrf.mxu0
        %v4160 = vadd.f32 %v4067, %v4159
        %v4161 = vpop.f32.mrf.mxu0
        %v4162 = vadd.f32 %v4069, %v4161
        %v4163 = vpop.f32.mrf.mxu0
        %v4164 = vadd.f32 %v4071, %v4163
        %4165 = vmatprep.mubr.bf16.mxu0 %v3337
        %4166 = vmatmul.mubr.bf16.gmra.mxu0 %v3336
        %v4167 = vpop.f32.mrf.mxu0
        %v4168 = vadd.f32 %v4075, %v4167
        %v4169 = vpop.f32.mrf.mxu0
        %v4170 = vadd.f32 %v4077, %v4169
        %v4171 = vpop.f32.mrf.mxu0
        %v4172 = vadd.f32 %v4079, %v4171
        %v4173 = vpop.f32.mrf.mxu0
        %v4174 = vadd.f32 %v4081, %v4173
        %4175 = vmatprep.mubr.bf16.mxu0 %v3341
        %4176 = vmatmul.mubr.bf16.gmra.mxu0 %v3340
        %v4177 = vpop.f32.mrf.mxu0
        %v4178 = vadd.f32 %v4085, %v4177
        %v4179 = vpop.f32.mrf.mxu0
        %v4180 = vadd.f32 %v4087, %v4179
        %v4181 = vpop.f32.mrf.mxu0
        %v4182 = vadd.f32 %v4089, %v4181
        %v4183 = vpop.f32.mrf.mxu0
        %v4184 = vadd.f32 %v4091, %v4183
        %4185 = vmatprep.mubr.bf16.mxu0 %v3345
        %4186 = vmatmul.mubr.bf16.gmra.mxu0 %v3344
        %v4187 = vpop.f32.mrf.mxu0
        %v4188 = vadd.f32 %v4095, %v4187
        %v4189 = vpop.f32.mrf.mxu0
        %v4190 = vadd.f32 %v4097, %v4189
        %v4191 = vpop.f32.mrf.mxu0
        %v4192 = vadd.f32 %v4099, %v4191
        %v4193 = vpop.f32.mrf.mxu0
        %v4194 = vadd.f32 %v4101, %v4193
        %4195 = vdwg.mxu0
        %4196 = vmatprep.subr.bf16.mxu0 %v3785
        %4197 = vmatpush1.bf16.msra.mxu0 %v3784
        %4198 = vmatprep.subr.bf16.mxu0 %v3781
        %4199 = vmatpush1.bf16.msra.mxu0 %v3780
        %4200 = vmatprep.subr.bf16.mxu0 %v3777
        %4201 = vmatpush1.bf16.msra.mxu0 %v3776
        %4202 = vmatprep.subr.bf16.mxu0 %v3773
        %4203 = vmatpush1.bf16.msra.mxu0 %v3772
        %4204 = vmatprep.subr.bf16.mxu0 %v3769
        %4205 = vmatpush1.bf16.msra.mxu0 %v3768
        %4206 = vmatprep.subr.bf16.mxu0 %v3765
        %4207 = vmatpush1.bf16.msra.mxu0 %v3764
        %4208 = vmatprep.subr.bf16.mxu0 %v3761
        %4209 = vmatpush1.bf16.msra.mxu0 %v3760
        %4210 = vmatprep.subr.bf16.mxu0 %v3757
        %4211 = vmatpush1.bf16.msra.mxu0 %v3756
        %4212 = vmatprep.subr.bf16.mxu0 %v3817
        %4213 = vmatpush2.bf16.msra.mxu0 %v3816
        %4214 = vmatprep.subr.bf16.mxu0 %v3813
        %4215 = vmatpush2.bf16.msra.mxu0 %v3812
        %4216 = vmatprep.subr.bf16.mxu0 %v3809
        %4217 = vmatpush2.bf16.msra.mxu0 %v3808
        %4218 = vmatprep.subr.bf16.mxu0 %v3805
        %4219 = vmatpush2.bf16.msra.mxu0 %v3804
        %4220 = vmatprep.subr.bf16.mxu0 %v3801
        %4221 = vmatpush2.bf16.msra.mxu0 %v3800
        %4222 = vmatprep.subr.bf16.mxu0 %v3797
        %4223 = vmatpush2.bf16.msra.mxu0 %v3796
        %4224 = vmatprep.subr.bf16.mxu0 %v3793
        %4225 = vmatpush2.bf16.msra.mxu0 %v3792
        %4226 = vmatprep.subr.bf16.mxu0 %v3789
        %4227 = vmatpush2.bf16.msra.mxu0 %v3788
        %4228 = vmatprep.mubr.bf16.mxu0 %v3323
        %4229 = vmatmul.mubr.bf16.gmra.mxu0 %v3322
        %v4230 = vpop.f32.mrf.mxu0
        %v4231 = vadd.f32 0.0, %v4230
        %v4232 = vpop.f32.mrf.mxu0
        %v4233 = vadd.f32 0.0, %v4232
        %v4234 = vpop.f32.mrf.mxu0
        %v4235 = vadd.f32 0.0, %v4234
        %v4236 = vpop.f32.mrf.mxu0
        %v4237 = vadd.f32 0.0, %v4236
        %4238 = vmatprep.mubr.bf16.mxu0 %v3327
        %4239 = vmatmul.mubr.bf16.gmra.mxu0 %v3326
        %v4240 = vpop.f32.mrf.mxu0
        %v4241 = vadd.f32 0.0, %v4240
        %v4242 = vpop.f32.mrf.mxu0
        %v4243 = vadd.f32 0.0, %v4242
        %v4244 = vpop.f32.mrf.mxu0
        %v4245 = vadd.f32 0.0, %v4244
        %v4246 = vpop.f32.mrf.mxu0
        %v4247 = vadd.f32 0.0, %v4246
        %4248 = vmatprep.mubr.bf16.mxu0 %v3331
        %4249 = vmatmul.mubr.bf16.gmra.mxu0 %v3330
        %v4250 = vpop.f32.mrf.mxu0
        %v4251 = vadd.f32 0.0, %v4250
        %v4252 = vpop.f32.mrf.mxu0
        %v4253 = vadd.f32 0.0, %v4252
        %v4254 = vpop.f32.mrf.mxu0
        %v4255 = vadd.f32 0.0, %v4254
        %v4256 = vpop.f32.mrf.mxu0
        %v4257 = vadd.f32 0.0, %v4256
        %4258 = vmatprep.mubr.bf16.mxu0 %v3335
        %4259 = vmatmul.mubr.bf16.gmra.mxu0 %v3334
        %v4260 = vpop.f32.mrf.mxu0
        %v4261 = vadd.f32 0.0, %v4260
        %v4262 = vpop.f32.mrf.mxu0
        %v4263 = vadd.f32 0.0, %v4262
        %v4264 = vpop.f32.mrf.mxu0
        %v4265 = vadd.f32 0.0, %v4264
        %v4266 = vpop.f32.mrf.mxu0
        %v4267 = vadd.f32 0.0, %v4266
        %4268 = vmatprep.mubr.bf16.mxu0 %v3339
        %4269 = vmatmul.mubr.bf16.gmra.mxu0 %v3338
        %v4270 = vpop.f32.mrf.mxu0
        %v4271 = vadd.f32 0.0, %v4270
        %v4272 = vpop.f32.mrf.mxu0
        %v4273 = vadd.f32 0.0, %v4272
        %v4274 = vpop.f32.mrf.mxu0
        %v4275 = vadd.f32 0.0, %v4274
        %v4276 = vpop.f32.mrf.mxu0
        %v4277 = vadd.f32 0.0, %v4276
        %4278 = vmatprep.mubr.bf16.mxu0 %v3343
        %4279 = vmatmul.mubr.bf16.gmra.mxu0 %v3342
        %v4280 = vpop.f32.mrf.mxu0
        %v4281 = vadd.f32 0.0, %v4280
        %v4282 = vpop.f32.mrf.mxu0
        %v4283 = vadd.f32 0.0, %v4282
        %v4284 = vpop.f32.mrf.mxu0
        %v4285 = vadd.f32 0.0, %v4284
        %v4286 = vpop.f32.mrf.mxu0
        %v4287 = vadd.f32 0.0, %v4286
        %4288 = vdwg.mxu0
        %4289 = vmatprep.subr.bf16.mxu0 %v3849
        %4290 = vmatpush1.bf16.msra.mxu0 %v3848
        %4291 = vmatprep.subr.bf16.mxu0 %v3845
        %4292 = vmatpush1.bf16.msra.mxu0 %v3844
        %4293 = vmatprep.subr.bf16.mxu0 %v3841
        %4294 = vmatpush1.bf16.msra.mxu0 %v3840
        %4295 = vmatprep.subr.bf16.mxu0 %v3837
        %4296 = vmatpush1.bf16.msra.mxu0 %v3836
        %4297 = vmatprep.subr.bf16.mxu0 %v3833
        %4298 = vmatpush1.bf16.msra.mxu0 %v3832
        %4299 = vmatprep.subr.bf16.mxu0 %v3829
        %4300 = vmatpush1.bf16.msra.mxu0 %v3828
        %4301 = vmatprep.subr.bf16.mxu0 %v3825
        %4302 = vmatpush1.bf16.msra.mxu0 %v3824
        %4303 = vmatprep.subr.bf16.mxu0 %v3821
        %4304 = vmatpush1.bf16.msra.mxu0 %v3820
        %4305 = vmatprep.subr.bf16.mxu0 %v3881
        %4306 = vmatpush2.bf16.msra.mxu0 %v3880
        %4307 = vmatprep.subr.bf16.mxu0 %v3877
        %4308 = vmatpush2.bf16.msra.mxu0 %v3876
        %4309 = vmatprep.subr.bf16.mxu0 %v3873
        %4310 = vmatpush2.bf16.msra.mxu0 %v3872
        %4311 = vmatprep.subr.bf16.mxu0 %v3869
        %4312 = vmatpush2.bf16.msra.mxu0 %v3868
        %4313 = vmatprep.subr.bf16.mxu0 %v3865
        %4314 = vmatpush2.bf16.msra.mxu0 %v3864
        %4315 = vmatprep.subr.bf16.mxu0 %v3861
        %4316 = vmatpush2.bf16.msra.mxu0 %v3860
        %4317 = vmatprep.subr.bf16.mxu0 %v3857
        %4318 = vmatpush2.bf16.msra.mxu0 %v3856
        %4319 = vmatprep.subr.bf16.mxu0 %v3853
        %4320 = vmatpush2.bf16.msra.mxu0 %v3852
        %4321 = vmatprep.mubr.bf16.mxu0 %v3325
        %4322 = vmatmul.mubr.bf16.gmra.mxu0 %v3324
        %v4323 = vpop.f32.mrf.mxu0
        %v4324 = vadd.f32 %v4231, %v4323
        %v4325 = vpop.f32.mrf.mxu0
        %v4326 = vadd.f32 %v4233, %v4325
        %v4327 = vpop.f32.mrf.mxu0
        %v4328 = vadd.f32 %v4235, %v4327
        %v4329 = vpop.f32.mrf.mxu0
        %v4330 = vadd.f32 %v4237, %v4329
        %4331 = vmatprep.mubr.bf16.mxu0 %v3329
        %4332 = vmatmul.mubr.bf16.gmra.mxu0 %v3328
        %v4333 = vpop.f32.mrf.mxu0
        %v4334 = vadd.f32 %v4241, %v4333
        %v4335 = vpop.f32.mrf.mxu0
        %v4336 = vadd.f32 %v4243, %v4335
        %v4337 = vpop.f32.mrf.mxu0
        %v4338 = vadd.f32 %v4245, %v4337
        %v4339 = vpop.f32.mrf.mxu0
        %v4340 = vadd.f32 %v4247, %v4339
        %4341 = vmatprep.mubr.bf16.mxu0 %v3333
        %4342 = vmatmul.mubr.bf16.gmra.mxu0 %v3332
        %v4343 = vpop.f32.mrf.mxu0
        %v4344 = vadd.f32 %v4251, %v4343
        %v4345 = vpop.f32.mrf.mxu0
        %v4346 = vadd.f32 %v4253, %v4345
        %v4347 = vpop.f32.mrf.mxu0
        %v4348 = vadd.f32 %v4255, %v4347
        %v4349 = vpop.f32.mrf.mxu0
        %v4350 = vadd.f32 %v4257, %v4349
        %4351 = vmatprep.mubr.bf16.mxu0 %v3337
        %4352 = vmatmul.mubr.bf16.gmra.mxu0 %v3336
        %v4353 = vpop.f32.mrf.mxu0
        %v4354 = vadd.f32 %v4261, %v4353
        %v4355 = vpop.f32.mrf.mxu0
        %v4356 = vadd.f32 %v4263, %v4355
        %v4357 = vpop.f32.mrf.mxu0
        %v4358 = vadd.f32 %v4265, %v4357
        %v4359 = vpop.f32.mrf.mxu0
        %v4360 = vadd.f32 %v4267, %v4359
        %4361 = vmatprep.mubr.bf16.mxu0 %v3341
        %4362 = vmatmul.mubr.bf16.gmra.mxu0 %v3340
        %v4363 = vpop.f32.mrf.mxu0
        %v4364 = vadd.f32 %v4271, %v4363
        %v4365 = vpop.f32.mrf.mxu0
        %v4366 = vadd.f32 %v4273, %v4365
        %v4367 = vpop.f32.mrf.mxu0
        %v4368 = vadd.f32 %v4275, %v4367
        %v4369 = vpop.f32.mrf.mxu0
        %v4370 = vadd.f32 %v4277, %v4369
        %4371 = vmatprep.mubr.bf16.mxu0 %v3345
        %4372 = vmatmul.mubr.bf16.gmra.mxu0 %v3344
        %v4373 = vpop.f32.mrf.mxu0
        %v4374 = vadd.f32 %v4281, %v4373
        %v4375 = vpop.f32.mrf.mxu0
        %v4376 = vadd.f32 %v4283, %v4375
        %v4377 = vpop.f32.mrf.mxu0
        %v4378 = vadd.f32 %v4285, %v4377
        %v4379 = vpop.f32.mrf.mxu0
        %v4380 = vadd.f32 %v4287, %v4379
        %4381 = vdwg.mxu0
        %v4382 = vadd.f32 %v3048, %v4138
        %v4383 = vadd.f32 %v3049, %v4140
        %v4384 = vadd.f32 %v3050, %v4324
        %v4385 = vadd.f32 %v3051, %v4326
        %v4386 = vadd.f32 %v3052, %v4142
        %v4387 = vadd.f32 %v3053, %v4144
        %v4388 = vadd.f32 %v3054, %v4328
        %v4389 = vadd.f32 %v3055, %v4330
        %v4390 = vadd.f32 %v3056, %v4148
        %v4391 = vadd.f32 %v3057, %v4150
        %v4392 = vadd.f32 %v3058, %v4334
        %v4393 = vadd.f32 %v3059, %v4336
        %v4394 = vadd.f32 %v3060, %v4152
        %v4395 = vadd.f32 %v3061, %v4154
        %v4396 = vadd.f32 %v3062, %v4338
        %v4397 = vadd.f32 %v3063, %v4340
        %v4398 = vadd.f32 %v3064, %v4158
        %v4399 = vadd.f32 %v3065, %v4160
        %v4400 = vadd.f32 %v3066, %v4344
        %v4401 = vadd.f32 %v3067, %v4346
        %v4402 = vadd.f32 %v3068, %v4162
        %v4403 = vadd.f32 %v3069, %v4164
        %v4404 = vadd.f32 %v3070, %v4348
        %v4405 = vadd.f32 %v3071, %v4350
        %v4406 = vadd.f32 %v3072, %v4168
        %v4407 = vadd.f32 %v3073, %v4170
        %v4408 = vadd.f32 %v3074, %v4354
        %v4409 = vadd.f32 %v3075, %v4356
        %v4410 = vadd.f32 %v3076, %v4172
        %v4411 = vadd.f32 %v3077, %v4174
        %v4412 = vadd.f32 %v3078, %v4358
        %v4413 = vadd.f32 %v3079, %v4360
        %v4414 = vadd.f32 %v3080, %v4178
        %v4415 = vadd.f32 %v3081, %v4180
        %v4416 = vadd.f32 %v3082, %v4364
        %v4417 = vadd.f32 %v3083, %v4366
        %v4418 = vadd.f32 %v3084, %v4182
        %v4419 = vadd.f32 %v3085, %v4184
        %v4420 = vadd.f32 %v3086, %v4368
        %v4421 = vadd.f32 %v3087, %v4370
        %v4422 = vadd.f32 %v3088, %v4188
        %v4423 = vadd.f32 %v3089, %v4190
        %v4424 = vadd.f32 %v3090, %v4374
        %v4425 = vadd.f32 %v3091, %v4376
        %v4426 = vadd.f32 %v3092, %v4192
        %v4427 = vadd.f32 %v3093, %v4194
        %v4428 = vadd.f32 %v3094, %v4378
        %v4429 = vadd.f32 %v3095, %v4380
        %4430 = vst [vmem:[#allocation2] sm:$0xff] %v4382
        %4431 = vst [vmem:[#allocation2 + $0x8] sm:$0xff] %v4383
        %4432 = vst [vmem:[#allocation2 + $0x10] sm:$0xff] %v4384
        %4433 = vst [vmem:[#allocation2 + $0x18] sm:$0xff] %v4385
        %4434 = vst [vmem:[#allocation2 + $0x20] sm:$0xff] %v4386
        %4435 = vst [vmem:[#allocation2 + $0x28] sm:$0xff] %v4387
        %4436 = vst [vmem:[#allocation2 + $0x30] sm:$0xff] %v4388
        %4437 = vst [vmem:[#allocation2 + $0x38] sm:$0xff] %v4389
        %4438 = vst [vmem:[#allocation2 + $0x40] sm:$0xff] %v4390
        %4439 = vst [vmem:[#allocation2 + $0x48] sm:$0xff] %v4391
        %4440 = vst [vmem:[#allocation2 + $0x50] sm:$0xff] %v4392
        %4441 = vst [vmem:[#allocation2 + $0x58] sm:$0xff] %v4393
        %4442 = vst [vmem:[#allocation2 + $0x60] sm:$0xff] %v4394
        %4443 = vst [vmem:[#allocation2 + $0x68] sm:$0xff] %v4395
        %4444 = vst [vmem:[#allocation2 + $0x70] sm:$0xff] %v4396
        %4445 = vst [vmem:[#allocation2 + $0x78] sm:$0xff] %v4397
        %4446 = vst [vmem:[#allocation2 + $0x80] sm:$0xff] %v4398
        %4447 = vst [vmem:[#allocation2 + $0x88] sm:$0xff] %v4399
        %4448 = vst [vmem:[#allocation2 + $0x90] sm:$0xff] %v4400
        %4449 = vst [vmem:[#allocation2 + $0x98] sm:$0xff] %v4401
        %4450 = vst [vmem:[#allocation2 + $0xa0] sm:$0xff] %v4402
        %4451 = vst [vmem:[#allocation2 + $0xa8] sm:$0xff] %v4403
        %4452 = vst [vmem:[#allocation2 + $0xb0] sm:$0xff] %v4404
        %4453 = vst [vmem:[#allocation2 + $0xb8] sm:$0xff] %v4405
        %4454 = vst [vmem:[#allocation2 + $0xc0] sm:$0xff] %v4406
        %4455 = vst [vmem:[#allocation2 + $0xc8] sm:$0xff] %v4407
        %4456 = vst [vmem:[#allocation2 + $0xd0] sm:$0xff] %v4408
        %4457 = vst [vmem:[#allocation2 + $0xd8] sm:$0xff] %v4409
        %4458 = vst [vmem:[#allocation2 + $0xe0] sm:$0xff] %v4410
        %4459 = vst [vmem:[#allocation2 + $0xe8] sm:$0xff] %v4411
        %4460 = vst [vmem:[#allocation2 + $0xf0] sm:$0xff] %v4412
        %4461 = vst [vmem:[#allocation2 + $0xf8] sm:$0xff] %v4413
        %4462 = vst [vmem:[#allocation2 + $0x100] sm:$0xff] %v4414
        %4463 = vst [vmem:[#allocation2 + $0x108] sm:$0xff] %v4415
        %4464 = vst [vmem:[#allocation2 + $0x110] sm:$0xff] %v4416
        %4465 = vst [vmem:[#allocation2 + $0x118] sm:$0xff] %v4417
        %4466 = vst [vmem:[#allocation2 + $0x120] sm:$0xff] %v4418
        %4467 = vst [vmem:[#allocation2 + $0x128] sm:$0xff] %v4419
        %4468 = vst [vmem:[#allocation2 + $0x130] sm:$0xff] %v4420
        %4469 = vst [vmem:[#allocation2 + $0x138] sm:$0xff] %v4421
        %4470 = vst [vmem:[#allocation2 + $0x140] sm:$0xff] %v4422
        %4471 = vst [vmem:[#allocation2 + $0x148] sm:$0xff] %v4423
        %4472 = vst [vmem:[#allocation2 + $0x150] sm:$0xff] %v4424
        %4473 = vst [vmem:[#allocation2 + $0x158] sm:$0xff] %v4425
        %4474 = vst [vmem:[#allocation2 + $0x160] sm:$0xff] %v4426
        %4475 = vst [vmem:[#allocation2 + $0x168] sm:$0xff] %v4427
        %4476 = vst [vmem:[#allocation2 + $0x170] sm:$0xff] %v4428
        %4477 = vst [vmem:[#allocation2 + $0x178] sm:$0xff] %v4429
        %v4478 = vld [vmem:[#allocation2] sm:$0xff]
        %v4479 = vld [vmem:[#allocation2 + $0x8] sm:$0xff]
        %v4480 = vld [vmem:[#allocation2 + $0x10] sm:$0xff]
        %v4481 = vld [vmem:[#allocation2 + $0x18] sm:$0xff]
        %v4482 = vld [vmem:[#allocation2 + $0x20] sm:$0xff]
        %v4483 = vld [vmem:[#allocation2 + $0x28] sm:$0xff]
        %v4484 = vld [vmem:[#allocation2 + $0x30] sm:$0xff]
        %v4485 = vld [vmem:[#allocation2 + $0x38] sm:$0xff]
        %v4486 = vld [vmem:[#allocation2 + $0x40] sm:$0xff]
        %v4487 = vld [vmem:[#allocation2 + $0x48] sm:$0xff]
        %v4488 = vld [vmem:[#allocation2 + $0x50] sm:$0xff]
        %v4489 = vld [vmem:[#allocation2 + $0x58] sm:$0xff]
        %v4490 = vld [vmem:[#allocation2 + $0x60] sm:$0xff]
        %v4491 = vld [vmem:[#allocation2 + $0x68] sm:$0xff]
        %v4492 = vld [vmem:[#allocation2 + $0x70] sm:$0xff]
        %v4493 = vld [vmem:[#allocation2 + $0x78] sm:$0xff]
        %v4494 = vld [vmem:[#allocation2 + $0x80] sm:$0xff]
        %v4495 = vld [vmem:[#allocation2 + $0x88] sm:$0xff]
        %v4496 = vld [vmem:[#allocation2 + $0x90] sm:$0xff]
        %v4497 = vld [vmem:[#allocation2 + $0x98] sm:$0xff]
        %v4498 = vld [vmem:[#allocation2 + $0xa0] sm:$0xff]
        %v4499 = vld [vmem:[#allocation2 + $0xa8] sm:$0xff]
        %v4500 = vld [vmem:[#allocation2 + $0xb0] sm:$0xff]
        %v4501 = vld [vmem:[#allocation2 + $0xb8] sm:$0xff]
        %v4502 = vld [vmem:[#allocation2 + $0xc0] sm:$0xff]
        %v4503 = vld [vmem:[#allocation2 + $0xc8] sm:$0xff]
        %v4504 = vld [vmem:[#allocation2 + $0xd0] sm:$0xff]
        %v4505 = vld [vmem:[#allocation2 + $0xd8] sm:$0xff]
        %v4506 = vld [vmem:[#allocation2 + $0xe0] sm:$0xff]
        %v4507 = vld [vmem:[#allocation2 + $0xe8] sm:$0xff]
        %v4508 = vld [vmem:[#allocation2 + $0xf0] sm:$0xff]
        %v4509 = vld [vmem:[#allocation2 + $0xf8] sm:$0xff]
        %v4510 = vld [vmem:[#allocation2 + $0x100] sm:$0xff]
        %v4511 = vld [vmem:[#allocation2 + $0x108] sm:$0xff]
        %v4512 = vld [vmem:[#allocation2 + $0x110] sm:$0xff]
        %v4513 = vld [vmem:[#allocation2 + $0x118] sm:$0xff]
        %v4514 = vld [vmem:[#allocation2 + $0x120] sm:$0xff]
        %v4515 = vld [vmem:[#allocation2 + $0x128] sm:$0xff]
        %v4516 = vld [vmem:[#allocation2 + $0x130] sm:$0xff]
        %v4517 = vld [vmem:[#allocation2 + $0x138] sm:$0xff]
        %v4518 = vld [vmem:[#allocation2 + $0x140] sm:$0xff]
        %v4519 = vld [vmem:[#allocation2 + $0x148] sm:$0xff]
        %v4520 = vld [vmem:[#allocation2 + $0x150] sm:$0xff]
        %v4521 = vld [vmem:[#allocation2 + $0x158] sm:$0xff]
        %v4522 = vld [vmem:[#allocation2 + $0x160] sm:$0xff]
        %v4523 = vld [vmem:[#allocation2 + $0x168] sm:$0xff]
        %v4524 = vld [vmem:[#allocation2 + $0x170] sm:$0xff]
        %v4525 = vld [vmem:[#allocation2 + $0x178] sm:$0xff]
        %v4526 = vld [vmem:[#allocation2 + $0x180] sm:$0xff]
        %v4527 = vld [vmem:[#allocation2 + $0x188] sm:$0xff]
        %v4528 = vld [vmem:[#allocation2 + $0x190] sm:$0xff]
        %v4529 = vld [vmem:[#allocation2 + $0x198] sm:$0xff]
        %v4530 = vld [vmem:[#allocation2 + $0x1a0] sm:$0xff]
        %v4531 = vld [vmem:[#allocation2 + $0x1a8] sm:$0xff]
        %v4532 = vld [vmem:[#allocation2 + $0x1b0] sm:$0xff]
        %v4533 = vld [vmem:[#allocation2 + $0x1b8] sm:$0xff]
        %v4534 = vpack.c.bf16 %v4482, %v4478
        %v4535 = vpack.c.bf16 %v4483, %v4479
        %v4536 = vpack.c.bf16 %v4484, %v4480
        %v4537 = vpack.c.bf16 %v4485, %v4481
        %v4538 = vpack.c.bf16 %v4490, %v4486
        %v4539 = vpack.c.bf16 %v4491, %v4487
        %v4540 = vpack.c.bf16 %v4492, %v4488
        %v4541 = vpack.c.bf16 %v4493, %v4489
        %v4542 = vpack.c.bf16 %v4498, %v4494
        %v4543 = vpack.c.bf16 %v4499, %v4495
        %v4544 = vpack.c.bf16 %v4500, %v4496
        %v4545 = vpack.c.bf16 %v4501, %v4497
        %v4546 = vpack.c.bf16 %v4506, %v4502
        %v4547 = vpack.c.bf16 %v4507, %v4503
        %v4548 = vpack.c.bf16 %v4508, %v4504
        %v4549 = vpack.c.bf16 %v4509, %v4505
        %v4550 = vpack.c.bf16 %v4514, %v4510
        %v4551 = vpack.c.bf16 %v4515, %v4511
        %v4552 = vpack.c.bf16 %v4516, %v4512
        %v4553 = vpack.c.bf16 %v4517, %v4513
        %v4554 = vpack.c.bf16 %v4522, %v4518
        %v4555 = vpack.c.bf16 %v4523, %v4519
        %v4556 = vpack.c.bf16 %v4524, %v4520
        %v4557 = vpack.c.bf16 %v4525, %v4521
        %v4558 = vpack.c.bf16 %v4530, %v4526
        %v4559 = vpack.c.bf16 %v4531, %v4527
        %v4560 = vpack.c.bf16 %v4532, %v4528
        %v4561 = vpack.c.bf16 %v4533, %v4529
        %v4590 = vunpack.c.l.b16 %v4534
        %v4591 = vunpack.c.l.b16 %v4535
        %v4592 = vunpack.c.l.b16 %v4536
        %v4593 = vunpack.c.l.b16 %v4537
        %v4594 = vunpack.c.h.b16 %v4534
        %v4595 = vunpack.c.h.b16 %v4535
        %v4596 = vunpack.c.h.b16 %v4536
        %v4597 = vunpack.c.h.b16 %v4537
        %v4598 = vunpack.c.l.b16 %v4538
        %v4599 = vunpack.c.l.b16 %v4539
        %v4600 = vunpack.c.l.b16 %v4540
        %v4601 = vunpack.c.l.b16 %v4541
        %v4602 = vunpack.c.h.b16 %v4538
        %v4603 = vunpack.c.h.b16 %v4539
        %v4604 = vunpack.c.h.b16 %v4540
        %v4605 = vunpack.c.h.b16 %v4541
        %v4606 = vunpack.c.l.b16 %v4542
        %v4607 = vunpack.c.l.b16 %v4543
        %v4608 = vunpack.c.l.b16 %v4544
        %v4609 = vunpack.c.l.b16 %v4545
        %v4610 = vunpack.c.h.b16 %v4542
        %v4611 = vunpack.c.h.b16 %v4543
        %v4612 = vunpack.c.h.b16 %v4544
        %v4613 = vunpack.c.h.b16 %v4545
        %v4614 = vunpack.c.l.b16 %v4546
        %v4615 = vunpack.c.l.b16 %v4547
        %v4616 = vunpack.c.l.b16 %v4548
        %v4617 = vunpack.c.l.b16 %v4549
        %v4618 = vunpack.c.h.b16 %v4546
        %v4619 = vunpack.c.h.b16 %v4547
        %v4620 = vunpack.c.h.b16 %v4548
        %v4621 = vunpack.c.h.b16 %v4549
        %v4622 = vunpack.c.l.b16 %v4550
        %v4623 = vunpack.c.l.b16 %v4551
        %v4624 = vunpack.c.l.b16 %v4552
        %v4625 = vunpack.c.l.b16 %v4553
        %v4626 = vunpack.c.h.b16 %v4550
        %v4627 = vunpack.c.h.b16 %v4551
        %v4628 = vunpack.c.h.b16 %v4552
        %v4629 = vunpack.c.h.b16 %v4553
        %v4630 = vunpack.c.l.b16 %v4554
        %v4631 = vunpack.c.l.b16 %v4555
        %v4632 = vunpack.c.l.b16 %v4556
        %v4633 = vunpack.c.l.b16 %v4557
        %v4634 = vunpack.c.h.b16 %v4554
        %v4635 = vunpack.c.h.b16 %v4555
        %v4636 = vunpack.c.h.b16 %v4556
        %v4637 = vunpack.c.h.b16 %v4557
        %v4638 = vunpack.c.l.b16 %v4558
        %v4639 = vunpack.c.l.b16 %v4559
        %v4640 = vunpack.c.l.b16 %v4560
        %v4641 = vunpack.c.l.b16 %v4561
        %v4642 = vunpack.c.h.b16 %v4558
        %v4643 = vunpack.c.h.b16 %v4559
        %v4644 = vunpack.c.h.b16 %v4560
        %v4645 = vunpack.c.h.b16 %v4561
        %v4646 = vpack.c.b16 %v4591, %v4590
        %v4647 = vpack.c.b16 %v4593, %v4592
        %v4648 = vpack.c.b16 %v4595, %v4594
        %v4649 = vpack.c.b16 %v4597, %v4596
        %v4650 = vpack.c.b16 %v4599, %v4598
        %v4651 = vpack.c.b16 %v4601, %v4600
        %v4652 = vpack.c.b16 %v4603, %v4602
        %v4653 = vpack.c.b16 %v4605, %v4604
        %v4654 = vpack.c.b16 %v4607, %v4606
        %v4655 = vpack.c.b16 %v4609, %v4608
        %v4656 = vpack.c.b16 %v4611, %v4610
        %v4657 = vpack.c.b16 %v4613, %v4612
        %v4658 = vpack.c.b16 %v4615, %v4614
        %v4659 = vpack.c.b16 %v4617, %v4616
        %v4660 = vpack.c.b16 %v4619, %v4618
        %v4661 = vpack.c.b16 %v4621, %v4620
        %v4662 = vpack.c.b16 %v4623, %v4622
        %v4663 = vpack.c.b16 %v4625, %v4624
        %v4664 = vpack.c.b16 %v4627, %v4626
        %v4665 = vpack.c.b16 %v4629, %v4628
        %v4666 = vpack.c.b16 %v4631, %v4630
        %v4667 = vpack.c.b16 %v4633, %v4632
        %v4668 = vpack.c.b16 %v4635, %v4634
        %v4669 = vpack.c.b16 %v4637, %v4636
        %v4670 = vpack.c.b16 %v4639, %v4638
        %v4671 = vpack.c.b16 %v4641, %v4640
        %v4672 = vpack.c.b16 %v4643, %v4642
        %v4673 = vpack.c.b16 %v4645, %v4644
        %4702 = vst [vmem:[%s212] sm:$0xff] %v4646
        %4703 = vst [vmem:[%s212 + $0x8] sm:$0xff] %v4647
        %4704 = vst [vmem:[%s212 + $0x10] sm:$0xff] %v4648
        %4705 = vst [vmem:[%s212 + $0x18] sm:$0xff] %v4649
        %4706 = vst [vmem:[%s212 + $0x20] sm:$0xff] %v4650
        %4707 = vst [vmem:[%s212 + $0x28] sm:$0xff] %v4651
        %4708 = vst [vmem:[%s212 + $0x30] sm:$0xff] %v4652
        %4709 = vst [vmem:[%s212 + $0x38] sm:$0xff] %v4653
        %4710 = vst [vmem:[%s212 + $0x40] sm:$0xff] %v4654
        %4711 = vst [vmem:[%s212 + $0x48] sm:$0xff] %v4655
        %4712 = vst [vmem:[%s212 + $0x50] sm:$0xff] %v4656
        %4713 = vst [vmem:[%s212 + $0x58] sm:$0xff] %v4657
        %4714 = vst [vmem:[%s212 + $0x60] sm:$0xff] %v4658
        %4715 = vst [vmem:[%s212 + $0x68] sm:$0xff] %v4659
        %4716 = vst [vmem:[%s212 + $0x70] sm:$0xff] %v4660
        %4717 = vst [vmem:[%s212 + $0x78] sm:$0xff] %v4661
        %4718 = vst [vmem:[%s212 + $0x80] sm:$0xff] %v4662
        %4719 = vst [vmem:[%s212 + $0x88] sm:$0xff] %v4663
        %4720 = vst [vmem:[%s212 + $0x90] sm:$0xff] %v4664
        %4721 = vst [vmem:[%s212 + $0x98] sm:$0xff] %v4665
        %4722 = vst [vmem:[%s212 + $0xa0] sm:$0xff] %v4666
        %4723 = vst [vmem:[%s212 + $0xa8] sm:$0xff] %v4667
        %4724 = vst [vmem:[%s212 + $0xb0] sm:$0xff] %v4668
        %4725 = vst [vmem:[%s212 + $0xb8] sm:$0xff] %v4669
        %4726 = vst [vmem:[%s212 + $0xc0] sm:$0xff] %v4670
        %4727 = vst [vmem:[%s212 + $0xc8] sm:$0xff] %v4671
        %4728 = vst [vmem:[%s212 + $0xd0] sm:$0xff] %v4672
        %4729 = vst [vmem:[%s212 + $0xd8] sm:$0xff] %v4673
        %s4730 = sand.u32 %s68, 1
        %s4731 = sand.u32 %s68, 1
        %s4732 = smul.addr %s4731, 224
        %s4733 = scalar_lea.vmem [#allocation4], %s4732
        // Predicated region
        $region52: #{kernel_generated_3_forward.1} parent=46 // pred_check
          %p4734 = pneg %p78
        $region53: #{kernel_generated_3_forward.1} parent=46 // pred_check_branch
          %4736 = sbr.rel (%p4734) target = $region55
        $region54: #{kernel_generated_3_forward.1} parent=46 // pred_region
          %s4737 = smul.u32 2, %s13
          %s4738 = smul.addr %s4737, 4
          %s4739 = smul.addr %s4738, 4
          %s4740 = scalar_lea.vmem %s2, %s4739
          // Predicated region
          $region56: #{kernel_generated_3_forward.1} parent=54 // pred_check
            _
          $region57: #{kernel_generated_3_forward.1} parent=54 // pred_check_branch
            %4742 = sbr.rel (0) target = $region59
          $region58: #{kernel_generated_3_forward.1} parent=54 // pred_region
            // Predicated region
            $region60: #{kernel_generated_3_forward.1} parent=58 // pred_check
              _
            $region61: #{kernel_generated_3_forward.1} parent=58 // pred_check_branch
              %4744 = sbr.rel (0) target = $region63
            $region62: #{kernel_generated_3_forward.1} parent=58 // pred_region
              loop: start=0, step=1, limit=1
              $region64: #{kernel_generated_3_forward.1} parent=62 // loop_pre_header
                _
              $region65: #{kernel_generated_3_forward.1} parent=62 // loop_header
                %s4746 = sphi 0, %s4750
                %p4747 = scmp.ge.s32.totalorder %s4746, 1
                %s4751 = sphi %s4733, %s4733
                %s4752 = sphi %s4740, %s4740
              $region66: #{kernel_generated_3_forward.1} parent=62 // loop_header_branch
                %4749 = sbr.rel (%p4747) target = $region70
              $region67: #{kernel_generated_3_forward.1} parent=62 // loop_body
                %v4753 = vld [vmem:[%s4751] sm:$0xff]
                %4754 = vst [vmem:[%s4752] sm:$0xff] %v4753
                %v4755 = vld [vmem:[%s4751 + $0x8] sm:$0xff]
                %4756 = vst [vmem:[%s4752 + $0x8] sm:$0xff] %v4755
                %v4757 = vld [vmem:[%s4751 + $0x10] sm:$0xff]
                %4758 = vst [vmem:[%s4752 + $0x10] sm:$0xff] %v4757
                %v4759 = vld [vmem:[%s4751 + $0x18] sm:$0xff]
                %4760 = vst [vmem:[%s4752 + $0x18] sm:$0xff] %v4759
                %v4761 = vld [vmem:[%s4751 + $0x20] sm:$0xff]
                %4762 = vst [vmem:[%s4752 + $0xe0] sm:$0xff] %v4761
                %v4763 = vld [vmem:[%s4751 + $0x28] sm:$0xff]
                %4764 = vst [vmem:[%s4752 + $0xe8] sm:$0xff] %v4763
                %v4765 = vld [vmem:[%s4751 + $0x30] sm:$0xff]
                %4766 = vst [vmem:[%s4752 + $0xf0] sm:$0xff] %v4765
                %v4767 = vld [vmem:[%s4751 + $0x38] sm:$0xff]
                %4768 = vst [vmem:[%s4752 + $0xf8] sm:$0xff] %v4767
                %v4769 = vld [vmem:[%s4751 + $0x40] sm:$0xff]
                %4770 = vst [vmem:[%s4752 + $0x1c0] sm:$0xff] %v4769
                %v4771 = vld [vmem:[%s4751 + $0x48] sm:$0xff]
                %4772 = vst [vmem:[%s4752 + $0x1c8] sm:$0xff] %v4771
                %v4773 = vld [vmem:[%s4751 + $0x50] sm:$0xff]
                %4774 = vst [vmem:[%s4752 + $0x1d0] sm:$0xff] %v4773
                %v4775 = vld [vmem:[%s4751 + $0x58] sm:$0xff]
                %4776 = vst [vmem:[%s4752 + $0x1d8] sm:$0xff] %v4775
                %v4777 = vld [vmem:[%s4751 + $0x60] sm:$0xff]
                %4778 = vst [vmem:[%s4752 + $0x2a0] sm:$0xff] %v4777
                %v4779 = vld [vmem:[%s4751 + $0x68] sm:$0xff]
                %4780 = vst [vmem:[%s4752 + $0x2a8] sm:$0xff] %v4779
                %v4781 = vld [vmem:[%s4751 + $0x70] sm:$0xff]
                %4782 = vst [vmem:[%s4752 + $0x2b0] sm:$0xff] %v4781
                %v4783 = vld [vmem:[%s4751 + $0x78] sm:$0xff]
                %4784 = vst [vmem:[%s4752 + $0x2b8] sm:$0xff] %v4783
                %v4785 = vld [vmem:[%s4751 + $0x80] sm:$0xff]
                %4786 = vst [vmem:[%s4752 + $0x380] sm:$0xff] %v4785
                %v4787 = vld [vmem:[%s4751 + $0x88] sm:$0xff]
                %4788 = vst [vmem:[%s4752 + $0x388] sm:$0xff] %v4787
                %v4789 = vld [vmem:[%s4751 + $0x90] sm:$0xff]
                %4790 = vst [vmem:[%s4752 + $0x390] sm:$0xff] %v4789
                %v4791 = vld [vmem:[%s4751 + $0x98] sm:$0xff]
                %4792 = vst [vmem:[%s4752 + $0x398] sm:$0xff] %v4791
                %v4793 = vld [vmem:[%s4751 + $0xa0] sm:$0xff]
                %4794 = vst [vmem:[%s4752 + $0x460] sm:$0xff] %v4793
                %v4795 = vld [vmem:[%s4751 + $0xa8] sm:$0xff]
                %4796 = vst [vmem:[%s4752 + $0x468] sm:$0xff] %v4795
                %v4797 = vld [vmem:[%s4751 + $0xb0] sm:$0xff]
                %4798 = vst [vmem:[%s4752 + $0x470] sm:$0xff] %v4797
                %v4799 = vld [vmem:[%s4751 + $0xb8] sm:$0xff]
                %4800 = vst [vmem:[%s4752 + $0x478] sm:$0xff] %v4799
                %v4801 = vld [vmem:[%s4751 + $0xc0] sm:$0xff]
                %4802 = vst [vmem:[%s4752 + $0x540] sm:$0xff] %v4801
                %v4803 = vld [vmem:[%s4751 + $0xc8] sm:$0xff]
                %4804 = vst [vmem:[%s4752 + $0x548] sm:$0xff] %v4803
                %v4805 = vld [vmem:[%s4751 + $0xd0] sm:$0xff]
                %4806 = vst [vmem:[%s4752 + $0x550] sm:$0xff] %v4805
                %v4807 = vld [vmem:[%s4751 + $0xd8] sm:$0xff]
                %4808 = vst [vmem:[%s4752 + $0x558] sm:$0xff] %v4807
              $region68: #{kernel_generated_3_forward.1} parent=62 // loop_footer
                %s4750 = sadd.s32 1, %s4746
              $region69: #{kernel_generated_3_forward.1} parent=62 // loop_footer_branch
                %4745 = sbr.rel target = $region65
              $region70: #{kernel_generated_3_forward.1} parent=62 // loop_exit
                _
            $region63: #{kernel_generated_3_forward.1} parent=58 // pred_fallthru
              _
            // Predicated region
            $region71: #{kernel_generated_3_forward.1} parent=58 // pred_check
              _
            $region72: #{kernel_generated_3_forward.1} parent=58 // pred_check_branch
              %4810 = sbr.rel target = $region74
            $region73: #{kernel_generated_3_forward.1} parent=58 // pred_region
              _
            $region74: #{kernel_generated_3_forward.1} parent=58 // pred_fallthru
              _
          $region59: #{kernel_generated_3_forward.1} parent=54 // pred_fallthru
            _
          %4811 = vnop
        $region55: #{kernel_generated_3_forward.1} parent=46 // pred_fallthru
          _
      $region47: #{kernel_generated_3_forward.1} parent=5 // pred_fallthru
        _
      %p4812 = scmp.le.s32.totalorder 2, %s8
      // Predicated region
      $region75: #{kernel_generated_3_forward.1} parent=5 // pred_check
        %p4813 = pneg %p4812
      $region76: #{kernel_generated_3_forward.1} parent=5 // pred_check_branch
        %4815 = sbr.rel (%p4813) target = $region78
      $region77: #{kernel_generated_3_forward.1} parent=5 // pred_region
        %s4816 = ssub.s32 %s8, 2
        // Predicated region
        $region79: #{kernel_generated_3_forward.1} parent=77 // pred_check
          %p4817 = pneg %p84
        $region80: #{kernel_generated_3_forward.1} parent=77 // pred_check_branch
          %4819 = sbr.rel (%p4817) target = $region82
        $region81: #{kernel_generated_3_forward.1} parent=77 // pred_region
          %s4820 = sand.u32 %s69, 1
          %s4821 = sand.u32 %s69, 1
          %s4822 = smul.addr %s4821, 224
          %s4823 = scalar_lea.vmem [#allocation4], %s4822
        $region82: #{kernel_generated_3_forward.1} parent=77 // pred_fallthru
          _
      $region78: #{kernel_generated_3_forward.1} parent=5 // pred_fallthru
        _
    $region6: #{kernel_generated_3_forward.1} parent=1 // loop_footer
      %s12 = sadd.s32 1, %s8
    $region7: #{kernel_generated_3_forward.1} parent=1 // loop_footer_branch
      %7 = sbr.rel target = $region3
    $region8: #{kernel_generated_3_forward.1} parent=1 // loop_exit
      _

</llo_original>
